<compile_context>
chip_gen: v7x
topology: tpu7x:2x2x1
jax: 0.10.0
libtpu: 0.0.40
codegen_flags: <defaults>
</compile_context>

<pallas_src>
import jax
import jax.numpy as jnp
from jax.experimental import pallas as pl
from jax.experimental.pallas import tpu as pltpu

KSIZE = 7   # spatial-attention conv kernel size
PAD = 3     # conv padding


# ----------------------------- kernel helpers --------------------------------
def _if_fire(v_ref, inp):
    """spikingjelly IFNode step: charge, fire at v >= 1.0, hard reset to 0."""
    v = v_ref[...] + inp
    spike = (v >= 1.0).astype(jnp.float32)
    v_ref[...] = v * (1.0 - spike)
    return spike


def _tiny_linear(inp, w, b):
    """inp [2, 1, K] @ w [2, K, M] + b [2, 1, M] as K broadcast-MACs on the VPU.
    K, M are tiny (<= 8) so the MXU would be wasted; the explicit k-ordered
    accumulation keeps results bit-comparable to the pure-JAX reference."""
    out = jnp.zeros(inp.shape[:-1] + (w.shape[-1],), jnp.float32) + b
    for k in range(w.shape[-2]):
        out = out + inp[:, :, k:k + 1] * w[:, k:k + 1, :]
    return out


# ----------------------------- Pallas kernel ---------------------------------
def cbam_kernel(x_ref, w1_ref, b1_ref, w2_ref, b2_ref, cw_ref, cb_ref,
                out_ref, v1, v2, vsc, vss, pad_ref):
    C, H, W = x_ref.shape[2], x_ref.shape[3], x_ref.shape[4]
    t = pl.program_id(1)

    # functional.reset_net(): every IF membrane starts at 0 for each batch
    # element.  Scratch persists across grid steps, so reset at t == 0 only.
    # The pad buffer borders provide the conv zero padding and stay zero.
    @pl.when(t == 0)
    def _():
        v1[...] = jnp.zeros_like(v1)
        v2[...] = jnp.zeros_like(v2)
        vsc[...] = jnp.zeros_like(vsc)
        vss[...] = jnp.zeros_like(vss)
        pad_ref[...] = jnp.zeros_like(pad_ref)

    xt = x_ref[0]                                            # [1, C, H, W]

    # --------------------------- channel attention ---------------------------
    mx = jnp.max(jnp.max(xt, axis=-1), axis=-1)              # [1, C]
    av = jnp.sum(jnp.sum(xt, axis=-1), axis=-1) * (1.0 / (H * W))
    pooled = jnp.stack([mx, av], axis=0)                     # [2, 1, C]  (0=max, 1=avg)

    s1 = _if_fire(v1, _tiny_linear(pooled, w1_ref[...], b1_ref[...]))  # [2, 1, C*r]
    s2 = _if_fire(v2, _tiny_linear(s1, w2_ref[...], b2_ref[...]))      # [2, 1, C]
    mc = _if_fire(vsc, s2[0] + s2[1])                        # [1, C]  in {0, 1}

    # Mc * x: per-channel scalar gate; C stays on the major axis so only lane
    # broadcasts of a single-lane slice are needed (no C->sublane relayout).
    xc = jnp.concatenate(
        [mc[:, c:c + 1, None, None] * xt[:, c:c + 1] for c in range(C)],
        axis=1)                                              # [1, C, H, W]

    # --------------------------- spatial attention ---------------------------
    # channel-wise max / mean (C-sequential to bit-match the reference order)
    ch_max = xc[:, 0]
    ch_sum = xc[:, 0]
    for c in range(1, C):
        ch_max = jnp.maximum(ch_max, xc[:, c])
        ch_sum = ch_sum + xc[:, c]
    pad_ref[0, :, PAD:PAD + H, PAD:PAD + W] = ch_max
    pad_ref[1, :, PAD:PAD + H, PAD:PAD + W] = ch_sum * (1.0 / C)

    # 7x7 conv (2 -> 1 channels, padding 3, stride 1) as 98 shifted MACs.
    # Window columns dx .. dx+W-1 <= W+2*PAD-1 < 128, so every slice stays
    # inside the first lane tile (only cheap sublane/lane shifts).
    acc = jnp.zeros((1, H, W), jnp.float32) + cb_ref[0]
    for c in range(2):
        for dy in range(KSIZE):
            for dx in range(KSIZE):
                wgt = cw_ref[c * KSIZE * KSIZE + dy * KSIZE + dx]
                acc = acc + wgt * pad_ref[c, :, dy:dy + H, dx:dx + W]

    ms = _if_fire(vss, acc)                                  # [1, H, W] in {0, 1}

    # out = Ms * (Mc * x): one block-wide store per time step.
    out_ref[0] = ms[:, None] * xc                            # [1, C, H, W]


# ------------------------------ wrapper ---------------------------------------
def cbam_pallas(x, params):
    T, N, C, H, W = x.shape
    CR = params["w1m"].shape[1]
    HP, WP = H + 2 * PAD, W + 2 * PAD

    # Stack the MaxPool / AvgPool MLP branches: index 0 = max, 1 = avg.
    w1 = jnp.stack([params["w1m"], params["w1a"]])   # [2, C, CR]
    b1 = jnp.stack([params["b1m"], params["b1a"]])   # [2, 1, CR]
    w2 = jnp.stack([params["w2m"], params["w2a"]])   # [2, CR, C]
    b2 = jnp.stack([params["b2m"], params["b2a"]])   # [2, 1, C]

    def rep_spec(shape):
        return pl.BlockSpec(shape, lambda n, t, _r=len(shape): (0,) * _r)

    sspec = pl.BlockSpec(memory_space=pltpu.MemorySpace.SMEM)

    grid_spec = pltpu.PrefetchScalarGridSpec(
        num_scalar_prefetch=0,
        grid=(N, T),                      # N parallel (megacore), T sequential
        in_specs=[
            pl.BlockSpec((1, 1, C, H, W), lambda n, t: (t, n, 0, 0, 0)),
            rep_spec((2, C, CR)), rep_spec((2, 1, CR)),
            rep_spec((2, CR, C)), rep_spec((2, 1, C)),
            sspec, sspec,
        ],
        out_specs=pl.BlockSpec((1, 1, C, H, W), lambda n, t: (t, n, 0, 0, 0)),
        scratch_shapes=[
            pltpu.VMEM((2, 1, CR), jnp.float32),      # v: fc_{Max,Avg}Pool IF1
            pltpu.VMEM((2, 1, C), jnp.float32),       # v: fc_{Max,Avg}Pool IF2
            pltpu.VMEM((1, C), jnp.float32),          # v: channel "sigmoid" IF
            pltpu.VMEM((1, H, W), jnp.float32),       # v: spatial "sigmoid" IF
            pltpu.VMEM((2, 1, HP, WP), jnp.float32),  # zero-padded conv input
        ],
    )
    return pl.pallas_call(
        cbam_kernel,
        out_shape=jax.ShapeDtypeStruct((T, N, C, H, W), x.dtype),
        grid_spec=grid_spec,
        compiler_params=pltpu.CompilerParams(
            dimension_semantics=("parallel", "arbitrary")),
    )(x, w1, b1, w2, b2, params["cw"], params["cb"])


# --------------------------- pure-JAX reference -------------------------------
def _if_seq(seq):
    def step(v, s_in):
        v = v + s_in
        spike = (v >= 1.0).astype(seq.dtype)
        return v * (1.0 - spike), spike
    _, out = jax.lax.scan(step, jnp.zeros_like(seq[0]), seq)
    return out


def _tiny_linear_host(inp, w, b):
    out = jnp.zeros(inp.shape[:-1] + (w.shape[1],), inp.dtype) + b
    for k in range(w.shape[0]):
        out = out + inp[..., k:k + 1] * w[k:k + 1, :]
    return out


def cbam_reference(x, p):
    T, N, C, H, W = x.shape
    mx = jnp.max(jnp.max(x, axis=-1), axis=-1)                    # [T, N, C]
    av = jnp.sum(jnp.sum(x, axis=-1), axis=-1) * (1.0 / (H * W))

    s1 = _if_seq(_tiny_linear_host(mx, p["w1m"], p["b1m"]))
    mw = _if_seq(_tiny_linear_host(s1, p["w2m"], p["b2m"]))
    s2 = _if_seq(_tiny_linear_host(av, p["w1a"], p["b1a"]))
    aw = _if_seq(_tiny_linear_host(s2, p["w2a"], p["b2a"]))
    mc = _if_seq(mw + aw)                                          # [T, N, C]

    xc = mc[..., None, None] * x                                   # [T, N, C, H, W]

    max_c = xc[:, :, 0]
    sum_c = xc[:, :, 0]
    for c in range(1, C):
        max_c = jnp.maximum(max_c, xc[:, :, c])
        sum_c = sum_c + xc[:, :, c]
    avg_c = sum_c * (1.0 / C)

    pm = jnp.pad(max_c, ((0, 0), (0, 0), (PAD, PAD), (PAD, PAD)))
    pa = jnp.pad(avg_c, ((0, 0), (0, 0), (PAD, PAD), (PAD, PAD)))
    pads = (pm, pa)
    cw = p["cw"].reshape(2, KSIZE, KSIZE)
    acc = jnp.zeros((T, N, H, W), x.dtype) + p["cb"][0]
    for c in range(2):
        for dy in range(KSIZE):
            for dx in range(KSIZE):
                acc = acc + cw[c, dy, dx] * pads[c][:, :, dy:dy + H, dx:dx + W]

    ms = _if_seq(acc)                                              # [T, N, H, W]
    return ms[:, :, None] * xc


# --------------------------------- main ---------------------------------------
if __name__ == "__main__":
    T, N, C, H, W = 4, 2, 8, 16, 16
    CR = int(C * 0.5)

    key = jax.random.PRNGKey(0)
    ks = jax.random.split(key, 10)
    x = jax.random.normal(ks[0], (T, N, C, H, W), jnp.float32)

    # deterministic synthetic parameters (torch Linear weights are stored
    # transposed here, i.e. shape [in, out], so the kernel computes y = x@w + b)
    params = {
        "w1m": 0.30 * jax.random.normal(ks[1], (C, CR), jnp.float32),
        "b1m": 0.10 * jax.random.normal(ks[2], (1, CR), jnp.float32),
        "w2m": 0.50 * jax.random.normal(ks[3], (CR, C), jnp.float32),
        "b2m": 0.10 * jax.random.normal(ks[4], (1, C), jnp.float32),
        "w1a": 0.30 * jax.random.normal(ks[5], (C, CR), jnp.float32),
        "b1a": 0.10 * jax.random.normal(ks[6], (1, CR), jnp.float32),
        "w2a": 0.50 * jax.random.normal(ks[7], (CR, C), jnp.float32),
        "b2a": 0.10 * jax.random.normal(ks[8], (1, C), jnp.float32),
        "cw": 0.12 * jax.random.normal(ks[9], (2 * KSIZE * KSIZE,), jnp.float32),
        "cb": 0.10 * jnp.ones((1,), jnp.float32),
    }

    out = jax.block_until_ready(cbam_pallas(x, params))
    ref = jax.block_until_ready(cbam_reference(x, params))

    assert out.shape == (T, N, C, H, W)
    assert bool(jnp.allclose(out, ref, atol=1e-5, rtol=1e-5)), (
        "mismatch, max |diff| = " + str(float(jnp.max(jnp.abs(out - ref)))))
    print("KERNEL_OK")
</pallas_src>

<mosaic_0001>
module attributes {stable_mosaic.version = 11 : i64} {
  func.func @cbam_kernel(%arg0: i32, %arg1: i32, %arg2: memref<1x1x8x16x16xf32, #tpu.memory_space<vmem>>, %arg3: memref<2x8x4xf32, #tpu.memory_space<vmem>>, %arg4: memref<2x1x4xf32, #tpu.memory_space<vmem>>, %arg5: memref<2x4x8xf32, #tpu.memory_space<vmem>>, %arg6: memref<2x1x8xf32, #tpu.memory_space<vmem>>, %arg7: memref<98xf32, #tpu.memory_space<smem>>, %arg8: memref<1xf32, #tpu.memory_space<smem>>, %arg9: memref<1x1x8x16x16xf32, #tpu.memory_space<vmem>>, %arg10: memref<2x1x4xf32, #tpu.memory_space<vmem>>, %arg11: memref<2x1x8xf32, #tpu.memory_space<vmem>>, %arg12: memref<1x8xf32, #tpu.memory_space<vmem>>, %arg13: memref<1x16x16xf32, #tpu.memory_space<vmem>>, %arg14: memref<2x1x22x22xf32, #tpu.memory_space<vmem>>) attributes {dimension_semantics = [#tpu.dimension_semantics<parallel>, #tpu.dimension_semantics<arbitrary>], iteration_bounds = array<i64: 2, 4>, scalar_prefetch = 0 : i64, scratch_operands = 5 : i64, tpu.core_type = #tpu.core_type<tc>, window_params = [{transform_indices = @transform_0, window_bounds = array<i64: 1, 1, 8, 16, 16>}, {pipeline_mode = #tpu.pipeline_mode<synchronous>, transform_indices = @transform_1, window_bounds = array<i64: 2, 8, 4>}, {pipeline_mode = #tpu.pipeline_mode<synchronous>, transform_indices = @transform_2, window_bounds = array<i64: 2, 1, 4>}, {pipeline_mode = #tpu.pipeline_mode<synchronous>, transform_indices = @transform_3, window_bounds = array<i64: 2, 4, 8>}, {pipeline_mode = #tpu.pipeline_mode<synchronous>, transform_indices = @transform_4, window_bounds = array<i64: 2, 1, 8>}, {transform_indices = @transform_5, window_bounds = array<i64: 98>}, {transform_indices = @transform_6, window_bounds = array<i64: 1>}, {transform_indices = @transform_7, window_bounds = array<i64: 1, 1, 8, 16, 16>}]} {
    %c0_i32 = arith.constant 0 : i32
    %0 = arith.cmpi eq, %arg1, %c0_i32 : i32
    %1 = arith.extui %0 : i1 to i32
    %c0_i32_0 = arith.constant 0 : i32
    %2 = arith.cmpi ne, %1, %c0_i32_0 : i32
    scf.if %2 {
      %cst_462 = arith.constant 0.000000e+00 : f32
      %820 = vector.broadcast %cst_462 : f32 to vector<2x1x4xf32>
      %c0_463 = arith.constant 0 : index
      %c0_464 = arith.constant 0 : index
      %c0_465 = arith.constant 0 : index
      %821 = vector.load %arg10[%c0_463, %c0_464, %c0_465] : memref<2x1x4xf32, #tpu.memory_space<vmem>>, vector<2x1x4xf32>
      tpu.vector_store %arg10[%c0_463, %c0_464, %c0_465], %820 {strides = array<i32>} : memref<2x1x4xf32, #tpu.memory_space<vmem>>, vector<2x1x4xf32>,
      %cst_466 = arith.constant 0.000000e+00 : f32
      %822 = vector.broadcast %cst_466 : f32 to vector<2x1x8xf32>
      %c0_467 = arith.constant 0 : index
      %c0_468 = arith.constant 0 : index
      %c0_469 = arith.constant 0 : index
      %823 = vector.load %arg11[%c0_467, %c0_468, %c0_469] : memref<2x1x8xf32, #tpu.memory_space<vmem>>, vector<2x1x8xf32>
      tpu.vector_store %arg11[%c0_467, %c0_468, %c0_469], %822 {strides = array<i32>} : memref<2x1x8xf32, #tpu.memory_space<vmem>>, vector<2x1x8xf32>,
      %cst_470 = arith.constant 0.000000e+00 : f32
      %824 = vector.broadcast %cst_470 : f32 to vector<1x8xf32>
      %c0_471 = arith.constant 0 : index
      %c0_472 = arith.constant 0 : index
      %825 = vector.load %arg12[%c0_471, %c0_472] : memref<1x8xf32, #tpu.memory_space<vmem>>, vector<1x8xf32>
      tpu.vector_store %arg12[%c0_471, %c0_472], %824 {strides = array<i32>} : memref<1x8xf32, #tpu.memory_space<vmem>>, vector<1x8xf32>,
      %cst_473 = arith.constant 0.000000e+00 : f32
      %826 = vector.broadcast %cst_473 : f32 to vector<1x16x16xf32>
      %c0_474 = arith.constant 0 : index
      %c0_475 = arith.constant 0 : index
      %c0_476 = arith.constant 0 : index
      %827 = vector.load %arg13[%c0_474, %c0_475, %c0_476] : memref<1x16x16xf32, #tpu.memory_space<vmem>>, vector<1x16x16xf32>
      tpu.vector_store %arg13[%c0_474, %c0_475, %c0_476], %826 {strides = array<i32>} : memref<1x16x16xf32, #tpu.memory_space<vmem>>, vector<1x16x16xf32>,
      %cst_477 = arith.constant 0.000000e+00 : f32
      %828 = vector.broadcast %cst_477 : f32 to vector<2x1x22x22xf32>
      %c0_478 = arith.constant 0 : index
      %c0_479 = arith.constant 0 : index
      %c0_480 = arith.constant 0 : index
      %c0_481 = arith.constant 0 : index
      %829 = vector.load %arg14[%c0_478, %c0_479, %c0_480, %c0_481] : memref<2x1x22x22xf32, #tpu.memory_space<vmem>>, vector<2x1x22x22xf32>
      tpu.vector_store %arg14[%c0_478, %c0_479, %c0_480, %c0_481], %828 {strides = array<i32>} : memref<2x1x22x22xf32, #tpu.memory_space<vmem>>, vector<2x1x22x22xf32>,
    } else {
    }
    %c0 = arith.constant 0 : index
    %c0_1 = arith.constant 0 : index
    %c0_2 = arith.constant 0 : index
    %c0_3 = arith.constant 0 : index
    %c0_4 = arith.constant 0 : index
    %3 = vector.load %arg2[%c0, %c0_1, %c0_2, %c0_3, %c0_4] : memref<1x1x8x16x16xf32, #tpu.memory_space<vmem>>, vector<1x1x8x16x16xf32>
    %4 = vector.shape_cast %3 : vector<1x1x8x16x16xf32> to vector<1x8x16x16xf32>
    %cst = arith.constant dense<0xFF800000> : vector<1x8x16xf32>
    %5 = vector.multi_reduction <maximumf>, %4, %cst [3] : vector<1x8x16x16xf32> to vector<1x8x16xf32>
    %cst_5 = arith.constant dense<0xFF800000> : vector<1x8xf32>
    %6 = vector.multi_reduction <maximumf>, %5, %cst_5 [2] : vector<1x8x16xf32> to vector<1x8xf32>
    %cst_6 = arith.constant dense<0.000000e+00> : vector<1x8x16xf32>
    %7 = vector.multi_reduction <add>, %4, %cst_6 [3] : vector<1x8x16x16xf32> to vector<1x8x16xf32>
    %cst_7 = arith.constant dense<0.000000e+00> : vector<1x8xf32>
    %8 = vector.multi_reduction <add>, %7, %cst_7 [2] : vector<1x8x16xf32> to vector<1x8xf32>
    %cst_8 = arith.constant 3.906250e-03 : f32
    %9 = vector.broadcast %cst_8 : f32 to vector<1x8xf32>
    %10 = arith.mulf %8, %9 : vector<1x8xf32>
    %11 = vector.shape_cast %6 : vector<1x8xf32> to vector<1x1x8xf32>
    %12 = vector.shape_cast %10 : vector<1x8xf32> to vector<1x1x8xf32>
    %13 = tpu.concatenate %11, %12 in 0 : vector<1x1x8xf32>, vector<1x1x8xf32> -> vector<2x1x8xf32>
    %c0_9 = arith.constant 0 : index
    %c0_10 = arith.constant 0 : index
    %c0_11 = arith.constant 0 : index
    %14 = vector.load %arg3[%c0_9, %c0_10, %c0_11] : memref<2x8x4xf32, #tpu.memory_space<vmem>>, vector<2x8x4xf32>
    %c0_12 = arith.constant 0 : index
    %c0_13 = arith.constant 0 : index
    %c0_14 = arith.constant 0 : index
    %15 = vector.load %arg4[%c0_12, %c0_13, %c0_14] : memref<2x1x4xf32, #tpu.memory_space<vmem>>, vector<2x1x4xf32>
    %cst_15 = arith.constant 0.000000e+00 : f32
    %16 = vector.broadcast %cst_15 : f32 to vector<2x1x4xf32>
    %17 = arith.addf %16, %15 : vector<2x1x4xf32>
    %18 = vector.extract_strided_slice %13 {offsets = [0, 0, 0], sizes = [2, 1, 1], strides = [1, 1, 1]} : vector<2x1x8xf32> to vector<2x1x1xf32>
    %19 = vector.extract_strided_slice %14 {offsets = [0, 0, 0], sizes = [2, 1, 4], strides = [1, 1, 1]} : vector<2x8x4xf32> to vector<2x1x4xf32>
    %20 = vector.broadcast %18 : vector<2x1x1xf32> to vector<2x1x4xf32>
    %21 = arith.mulf %20, %19 : vector<2x1x4xf32>
    %22 = arith.addf %17, %21 : vector<2x1x4xf32>
    %23 = vector.extract_strided_slice %13 {offsets = [0, 0, 1], sizes = [2, 1, 1], strides = [1, 1, 1]} : vector<2x1x8xf32> to vector<2x1x1xf32>
    %24 = vector.extract_strided_slice %14 {offsets = [0, 1, 0], sizes = [2, 1, 4], strides = [1, 1, 1]} : vector<2x8x4xf32> to vector<2x1x4xf32>
    %25 = vector.broadcast %23 : vector<2x1x1xf32> to vector<2x1x4xf32>
    %26 = arith.mulf %25, %24 : vector<2x1x4xf32>
    %27 = arith.addf %22, %26 : vector<2x1x4xf32>
    %28 = vector.extract_strided_slice %13 {offsets = [0, 0, 2], sizes = [2, 1, 1], strides = [1, 1, 1]} : vector<2x1x8xf32> to vector<2x1x1xf32>
    %29 = vector.extract_strided_slice %14 {offsets = [0, 2, 0], sizes = [2, 1, 4], strides = [1, 1, 1]} : vector<2x8x4xf32> to vector<2x1x4xf32>
    %30 = vector.broadcast %28 : vector<2x1x1xf32> to vector<2x1x4xf32>
    %31 = arith.mulf %30, %29 : vector<2x1x4xf32>
    %32 = arith.addf %27, %31 : vector<2x1x4xf32>
    %33 = vector.extract_strided_slice %13 {offsets = [0, 0, 3], sizes = [2, 1, 1], strides = [1, 1, 1]} : vector<2x1x8xf32> to vector<2x1x1xf32>
    %34 = vector.extract_strided_slice %14 {offsets = [0, 3, 0], sizes = [2, 1, 4], strides = [1, 1, 1]} : vector<2x8x4xf32> to vector<2x1x4xf32>
    %35 = vector.broadcast %33 : vector<2x1x1xf32> to vector<2x1x4xf32>
    %36 = arith.mulf %35, %34 : vector<2x1x4xf32>
    %37 = arith.addf %32, %36 : vector<2x1x4xf32>
    %38 = vector.extract_strided_slice %13 {offsets = [0, 0, 4], sizes = [2, 1, 1], strides = [1, 1, 1]} : vector<2x1x8xf32> to vector<2x1x1xf32>
    %39 = vector.extract_strided_slice %14 {offsets = [0, 4, 0], sizes = [2, 1, 4], strides = [1, 1, 1]} : vector<2x8x4xf32> to vector<2x1x4xf32>
    %40 = vector.broadcast %38 : vector<2x1x1xf32> to vector<2x1x4xf32>
    %41 = arith.mulf %40, %39 : vector<2x1x4xf32>
    %42 = arith.addf %37, %41 : vector<2x1x4xf32>
    %43 = vector.extract_strided_slice %13 {offsets = [0, 0, 5], sizes = [2, 1, 1], strides = [1, 1, 1]} : vector<2x1x8xf32> to vector<2x1x1xf32>
    %44 = vector.extract_strided_slice %14 {offsets = [0, 5, 0], sizes = [2, 1, 4], strides = [1, 1, 1]} : vector<2x8x4xf32> to vector<2x1x4xf32>
    %45 = vector.broadcast %43 : vector<2x1x1xf32> to vector<2x1x4xf32>
    %46 = arith.mulf %45, %44 : vector<2x1x4xf32>
    %47 = arith.addf %42, %46 : vector<2x1x4xf32>
    %48 = vector.extract_strided_slice %13 {offsets = [0, 0, 6], sizes = [2, 1, 1], strides = [1, 1, 1]} : vector<2x1x8xf32> to vector<2x1x1xf32>
    %49 = vector.extract_strided_slice %14 {offsets = [0, 6, 0], sizes = [2, 1, 4], strides = [1, 1, 1]} : vector<2x8x4xf32> to vector<2x1x4xf32>
    %50 = vector.broadcast %48 : vector<2x1x1xf32> to vector<2x1x4xf32>
    %51 = arith.mulf %50, %49 : vector<2x1x4xf32>
    %52 = arith.addf %47, %51 : vector<2x1x4xf32>
    %53 = vector.extract_strided_slice %13 {offsets = [0, 0, 7], sizes = [2, 1, 1], strides = [1, 1, 1]} : vector<2x1x8xf32> to vector<2x1x1xf32>
    %54 = vector.extract_strided_slice %14 {offsets = [0, 7, 0], sizes = [2, 1, 4], strides = [1, 1, 1]} : vector<2x8x4xf32> to vector<2x1x4xf32>
    %55 = vector.broadcast %53 : vector<2x1x1xf32> to vector<2x1x4xf32>
    %56 = arith.mulf %55, %54 : vector<2x1x4xf32>
    %57 = arith.addf %52, %56 : vector<2x1x4xf32>
    %c0_16 = arith.constant 0 : index
    %c0_17 = arith.constant 0 : index
    %c0_18 = arith.constant 0 : index
    %58 = vector.load %arg10[%c0_16, %c0_17, %c0_18] : memref<2x1x4xf32, #tpu.memory_space<vmem>>, vector<2x1x4xf32>
    %59 = arith.addf %58, %57 : vector<2x1x4xf32>
    %cst_19 = arith.constant 1.000000e+00 : f32
    %60 = vector.broadcast %cst_19 : f32 to vector<2x1x4xf32>
    %61 = arith.cmpf oge, %59, %60 : vector<2x1x4xf32>
    %62 = arith.extui %61 : vector<2x1x4xi1> to vector<2x1x4xi32>
    %63 = arith.sitofp %62 : vector<2x1x4xi32> to vector<2x1x4xf32>
    %cst_20 = arith.constant 1.000000e+00 : f32
    %64 = vector.broadcast %cst_20 : f32 to vector<2x1x4xf32>
    %65 = arith.subf %64, %63 : vector<2x1x4xf32>
    %66 = arith.mulf %59, %65 : vector<2x1x4xf32>
    %c0_21 = arith.constant 0 : index
    %c0_22 = arith.constant 0 : index
    %c0_23 = arith.constant 0 : index
    %67 = vector.load %arg10[%c0_21, %c0_22, %c0_23] : memref<2x1x4xf32, #tpu.memory_space<vmem>>, vector<2x1x4xf32>
    tpu.vector_store %arg10[%c0_21, %c0_22, %c0_23], %66 {strides = array<i32>} : memref<2x1x4xf32, #tpu.memory_space<vmem>>, vector<2x1x4xf32>,
    %c0_24 = arith.constant 0 : index
    %c0_25 = arith.constant 0 : index
    %c0_26 = arith.constant 0 : index
    %68 = vector.load %arg5[%c0_24, %c0_25, %c0_26] : memref<2x4x8xf32, #tpu.memory_space<vmem>>, vector<2x4x8xf32>
    %c0_27 = arith.constant 0 : index
    %c0_28 = arith.constant 0 : index
    %c0_29 = arith.constant 0 : index
    %69 = vector.load %arg6[%c0_27, %c0_28, %c0_29] : memref<2x1x8xf32, #tpu.memory_space<vmem>>, vector<2x1x8xf32>
    %cst_30 = arith.constant 0.000000e+00 : f32
    %70 = vector.broadcast %cst_30 : f32 to vector<2x1x8xf32>
    %71 = arith.addf %70, %69 : vector<2x1x8xf32>
    %72 = vector.extract_strided_slice %63 {offsets = [0, 0, 0], sizes = [2, 1, 1], strides = [1, 1, 1]} : vector<2x1x4xf32> to vector<2x1x1xf32>
    %73 = vector.extract_strided_slice %68 {offsets = [0, 0, 0], sizes = [2, 1, 8], strides = [1, 1, 1]} : vector<2x4x8xf32> to vector<2x1x8xf32>
    %74 = vector.broadcast %72 : vector<2x1x1xf32> to vector<2x1x8xf32>
    %75 = arith.mulf %74, %73 : vector<2x1x8xf32>
    %76 = arith.addf %71, %75 : vector<2x1x8xf32>
    %77 = vector.extract_strided_slice %63 {offsets = [0, 0, 1], sizes = [2, 1, 1], strides = [1, 1, 1]} : vector<2x1x4xf32> to vector<2x1x1xf32>
    %78 = vector.extract_strided_slice %68 {offsets = [0, 1, 0], sizes = [2, 1, 8], strides = [1, 1, 1]} : vector<2x4x8xf32> to vector<2x1x8xf32>
    %79 = vector.broadcast %77 : vector<2x1x1xf32> to vector<2x1x8xf32>
    %80 = arith.mulf %79, %78 : vector<2x1x8xf32>
    %81 = arith.addf %76, %80 : vector<2x1x8xf32>
    %82 = vector.extract_strided_slice %63 {offsets = [0, 0, 2], sizes = [2, 1, 1], strides = [1, 1, 1]} : vector<2x1x4xf32> to vector<2x1x1xf32>
    %83 = vector.extract_strided_slice %68 {offsets = [0, 2, 0], sizes = [2, 1, 8], strides = [1, 1, 1]} : vector<2x4x8xf32> to vector<2x1x8xf32>
    %84 = vector.broadcast %82 : vector<2x1x1xf32> to vector<2x1x8xf32>
    %85 = arith.mulf %84, %83 : vector<2x1x8xf32>
    %86 = arith.addf %81, %85 : vector<2x1x8xf32>
    %87 = vector.extract_strided_slice %63 {offsets = [0, 0, 3], sizes = [2, 1, 1], strides = [1, 1, 1]} : vector<2x1x4xf32> to vector<2x1x1xf32>
    %88 = vector.extract_strided_slice %68 {offsets = [0, 3, 0], sizes = [2, 1, 8], strides = [1, 1, 1]} : vector<2x4x8xf32> to vector<2x1x8xf32>
    %89 = vector.broadcast %87 : vector<2x1x1xf32> to vector<2x1x8xf32>
    %90 = arith.mulf %89, %88 : vector<2x1x8xf32>
    %91 = arith.addf %86, %90 : vector<2x1x8xf32>
    %c0_31 = arith.constant 0 : index
    %c0_32 = arith.constant 0 : index
    %c0_33 = arith.constant 0 : index
    %92 = vector.load %arg11[%c0_31, %c0_32, %c0_33] : memref<2x1x8xf32, #tpu.memory_space<vmem>>, vector<2x1x8xf32>
    %93 = arith.addf %92, %91 : vector<2x1x8xf32>
    %cst_34 = arith.constant 1.000000e+00 : f32
    %94 = vector.broadcast %cst_34 : f32 to vector<2x1x8xf32>
    %95 = arith.cmpf oge, %93, %94 : vector<2x1x8xf32>
    %96 = arith.extui %95 : vector<2x1x8xi1> to vector<2x1x8xi32>
    %97 = arith.sitofp %96 : vector<2x1x8xi32> to vector<2x1x8xf32>
    %cst_35 = arith.constant 1.000000e+00 : f32
    %98 = vector.broadcast %cst_35 : f32 to vector<2x1x8xf32>
    %99 = arith.subf %98, %97 : vector<2x1x8xf32>
    %100 = arith.mulf %93, %99 : vector<2x1x8xf32>
    %c0_36 = arith.constant 0 : index
    %c0_37 = arith.constant 0 : index
    %c0_38 = arith.constant 0 : index
    %101 = vector.load %arg11[%c0_36, %c0_37, %c0_38] : memref<2x1x8xf32, #tpu.memory_space<vmem>>, vector<2x1x8xf32>
    tpu.vector_store %arg11[%c0_36, %c0_37, %c0_38], %100 {strides = array<i32>} : memref<2x1x8xf32, #tpu.memory_space<vmem>>, vector<2x1x8xf32>,
    %102 = vector.extract_strided_slice %97 {offsets = [0, 0, 0], sizes = [1, 1, 8], strides = [1, 1, 1]} : vector<2x1x8xf32> to vector<1x1x8xf32>
    %103 = vector.shape_cast %102 : vector<1x1x8xf32> to vector<1x8xf32>
    %104 = vector.extract_strided_slice %97 {offsets = [1, 0, 0], sizes = [1, 1, 8], strides = [1, 1, 1]} : vector<2x1x8xf32> to vector<1x1x8xf32>
    %105 = vector.shape_cast %104 : vector<1x1x8xf32> to vector<1x8xf32>
    %106 = arith.addf %103, %105 : vector<1x8xf32>
    %c0_39 = arith.constant 0 : index
    %c0_40 = arith.constant 0 : index
    %107 = vector.load %arg12[%c0_39, %c0_40] : memref<1x8xf32, #tpu.memory_space<vmem>>, vector<1x8xf32>
    %108 = arith.addf %107, %106 : vector<1x8xf32>
    %cst_41 = arith.constant 1.000000e+00 : f32
    %109 = vector.broadcast %cst_41 : f32 to vector<1x8xf32>
    %110 = arith.cmpf oge, %108, %109 : vector<1x8xf32>
    %111 = arith.extui %110 : vector<1x8xi1> to vector<1x8xi32>
    %112 = arith.sitofp %111 : vector<1x8xi32> to vector<1x8xf32>
    %cst_42 = arith.constant 1.000000e+00 : f32
    %113 = vector.broadcast %cst_42 : f32 to vector<1x8xf32>
    %114 = arith.subf %113, %112 : vector<1x8xf32>
    %115 = arith.mulf %108, %114 : vector<1x8xf32>
    %c0_43 = arith.constant 0 : index
    %c0_44 = arith.constant 0 : index
    %116 = vector.load %arg12[%c0_43, %c0_44] : memref<1x8xf32, #tpu.memory_space<vmem>>, vector<1x8xf32>
    tpu.vector_store %arg12[%c0_43, %c0_44], %115 {strides = array<i32>} : memref<1x8xf32, #tpu.memory_space<vmem>>, vector<1x8xf32>,
    %117 = vector.extract_strided_slice %112 {offsets = [0, 0], sizes = [1, 1], strides = [1, 1]} : vector<1x8xf32> to vector<1x1xf32>
    %118 = vector.shape_cast %117 : vector<1x1xf32> to vector<1x1x1x1xf32>
    %119 = vector.extract_strided_slice %4 {offsets = [0, 0, 0, 0], sizes = [1, 1, 16, 16], strides = [1, 1, 1, 1]} : vector<1x8x16x16xf32> to vector<1x1x16x16xf32>
    %120 = vector.broadcast %118 : vector<1x1x1x1xf32> to vector<1x1x16x16xf32>
    %121 = arith.mulf %120, %119 : vector<1x1x16x16xf32>
    %122 = vector.extract_strided_slice %112 {offsets = [0, 1], sizes = [1, 1], strides = [1, 1]} : vector<1x8xf32> to vector<1x1xf32>
    %123 = vector.shape_cast %122 : vector<1x1xf32> to vector<1x1x1x1xf32>
    %124 = vector.extract_strided_slice %4 {offsets = [0, 1, 0, 0], sizes = [1, 1, 16, 16], strides = [1, 1, 1, 1]} : vector<1x8x16x16xf32> to vector<1x1x16x16xf32>
    %125 = vector.broadcast %123 : vector<1x1x1x1xf32> to vector<1x1x16x16xf32>
    %126 = arith.mulf %125, %124 : vector<1x1x16x16xf32>
    %127 = vector.extract_strided_slice %112 {offsets = [0, 2], sizes = [1, 1], strides = [1, 1]} : vector<1x8xf32> to vector<1x1xf32>
    %128 = vector.shape_cast %127 : vector<1x1xf32> to vector<1x1x1x1xf32>
    %129 = vector.extract_strided_slice %4 {offsets = [0, 2, 0, 0], sizes = [1, 1, 16, 16], strides = [1, 1, 1, 1]} : vector<1x8x16x16xf32> to vector<1x1x16x16xf32>
    %130 = vector.broadcast %128 : vector<1x1x1x1xf32> to vector<1x1x16x16xf32>
    %131 = arith.mulf %130, %129 : vector<1x1x16x16xf32>
    %132 = vector.extract_strided_slice %112 {offsets = [0, 3], sizes = [1, 1], strides = [1, 1]} : vector<1x8xf32> to vector<1x1xf32>
    %133 = vector.shape_cast %132 : vector<1x1xf32> to vector<1x1x1x1xf32>
    %134 = vector.extract_strided_slice %4 {offsets = [0, 3, 0, 0], sizes = [1, 1, 16, 16], strides = [1, 1, 1, 1]} : vector<1x8x16x16xf32> to vector<1x1x16x16xf32>
    %135 = vector.broadcast %133 : vector<1x1x1x1xf32> to vector<1x1x16x16xf32>
    %136 = arith.mulf %135, %134 : vector<1x1x16x16xf32>
    %137 = vector.extract_strided_slice %112 {offsets = [0, 4], sizes = [1, 1], strides = [1, 1]} : vector<1x8xf32> to vector<1x1xf32>
    %138 = vector.shape_cast %137 : vector<1x1xf32> to vector<1x1x1x1xf32>
    %139 = vector.extract_strided_slice %4 {offsets = [0, 4, 0, 0], sizes = [1, 1, 16, 16], strides = [1, 1, 1, 1]} : vector<1x8x16x16xf32> to vector<1x1x16x16xf32>
    %140 = vector.broadcast %138 : vector<1x1x1x1xf32> to vector<1x1x16x16xf32>
    %141 = arith.mulf %140, %139 : vector<1x1x16x16xf32>
    %142 = vector.extract_strided_slice %112 {offsets = [0, 5], sizes = [1, 1], strides = [1, 1]} : vector<1x8xf32> to vector<1x1xf32>
    %143 = vector.shape_cast %142 : vector<1x1xf32> to vector<1x1x1x1xf32>
    %144 = vector.extract_strided_slice %4 {offsets = [0, 5, 0, 0], sizes = [1, 1, 16, 16], strides = [1, 1, 1, 1]} : vector<1x8x16x16xf32> to vector<1x1x16x16xf32>
    %145 = vector.broadcast %143 : vector<1x1x1x1xf32> to vector<1x1x16x16xf32>
    %146 = arith.mulf %145, %144 : vector<1x1x16x16xf32>
    %147 = vector.extract_strided_slice %112 {offsets = [0, 6], sizes = [1, 1], strides = [1, 1]} : vector<1x8xf32> to vector<1x1xf32>
    %148 = vector.shape_cast %147 : vector<1x1xf32> to vector<1x1x1x1xf32>
    %149 = vector.extract_strided_slice %4 {offsets = [0, 6, 0, 0], sizes = [1, 1, 16, 16], strides = [1, 1, 1, 1]} : vector<1x8x16x16xf32> to vector<1x1x16x16xf32>
    %150 = vector.broadcast %148 : vector<1x1x1x1xf32> to vector<1x1x16x16xf32>
    %151 = arith.mulf %150, %149 : vector<1x1x16x16xf32>
    %152 = vector.extract_strided_slice %112 {offsets = [0, 7], sizes = [1, 1], strides = [1, 1]} : vector<1x8xf32> to vector<1x1xf32>
    %153 = vector.shape_cast %152 : vector<1x1xf32> to vector<1x1x1x1xf32>
    %154 = vector.extract_strided_slice %4 {offsets = [0, 7, 0, 0], sizes = [1, 1, 16, 16], strides = [1, 1, 1, 1]} : vector<1x8x16x16xf32> to vector<1x1x16x16xf32>
    %155 = vector.broadcast %153 : vector<1x1x1x1xf32> to vector<1x1x16x16xf32>
    %156 = arith.mulf %155, %154 : vector<1x1x16x16xf32>
    %157 = tpu.concatenate %121, %126, %131, %136, %141, %146, %151, %156 in 1 : vector<1x1x16x16xf32>, vector<1x1x16x16xf32>, vector<1x1x16x16xf32>, vector<1x1x16x16xf32>, vector<1x1x16x16xf32>, vector<1x1x16x16xf32>, vector<1x1x16x16xf32>, vector<1x1x16x16xf32> -> vector<1x8x16x16xf32>
    %158 = vector.extract_strided_slice %157 {offsets = [0, 0, 0, 0], sizes = [1, 1, 16, 16], strides = [1, 1, 1, 1]} : vector<1x8x16x16xf32> to vector<1x1x16x16xf32>
    %159 = vector.shape_cast %158 : vector<1x1x16x16xf32> to vector<1x16x16xf32>
    %160 = vector.extract_strided_slice %157 {offsets = [0, 0, 0, 0], sizes = [1, 1, 16, 16], strides = [1, 1, 1, 1]} : vector<1x8x16x16xf32> to vector<1x1x16x16xf32>
    %161 = vector.shape_cast %160 : vector<1x1x16x16xf32> to vector<1x16x16xf32>
    %162 = vector.extract_strided_slice %157 {offsets = [0, 1, 0, 0], sizes = [1, 1, 16, 16], strides = [1, 1, 1, 1]} : vector<1x8x16x16xf32> to vector<1x1x16x16xf32>
    %163 = vector.shape_cast %162 : vector<1x1x16x16xf32> to vector<1x16x16xf32>
    %164 = arith.maximumf %159, %163 : vector<1x16x16xf32>
    %165 = vector.extract_strided_slice %157 {offsets = [0, 1, 0, 0], sizes = [1, 1, 16, 16], strides = [1, 1, 1, 1]} : vector<1x8x16x16xf32> to vector<1x1x16x16xf32>
    %166 = vector.shape_cast %165 : vector<1x1x16x16xf32> to vector<1x16x16xf32>
    %167 = arith.addf %161, %166 : vector<1x16x16xf32>
    %168 = vector.extract_strided_slice %157 {offsets = [0, 2, 0, 0], sizes = [1, 1, 16, 16], strides = [1, 1, 1, 1]} : vector<1x8x16x16xf32> to vector<1x1x16x16xf32>
    %169 = vector.shape_cast %168 : vector<1x1x16x16xf32> to vector<1x16x16xf32>
    %170 = arith.maximumf %164, %169 : vector<1x16x16xf32>
    %171 = vector.extract_strided_slice %157 {offsets = [0, 2, 0, 0], sizes = [1, 1, 16, 16], strides = [1, 1, 1, 1]} : vector<1x8x16x16xf32> to vector<1x1x16x16xf32>
    %172 = vector.shape_cast %171 : vector<1x1x16x16xf32> to vector<1x16x16xf32>
    %173 = arith.addf %167, %172 : vector<1x16x16xf32>
    %174 = vector.extract_strided_slice %157 {offsets = [0, 3, 0, 0], sizes = [1, 1, 16, 16], strides = [1, 1, 1, 1]} : vector<1x8x16x16xf32> to vector<1x1x16x16xf32>
    %175 = vector.shape_cast %174 : vector<1x1x16x16xf32> to vector<1x16x16xf32>
    %176 = arith.maximumf %170, %175 : vector<1x16x16xf32>
    %177 = vector.extract_strided_slice %157 {offsets = [0, 3, 0, 0], sizes = [1, 1, 16, 16], strides = [1, 1, 1, 1]} : vector<1x8x16x16xf32> to vector<1x1x16x16xf32>
    %178 = vector.shape_cast %177 : vector<1x1x16x16xf32> to vector<1x16x16xf32>
    %179 = arith.addf %173, %178 : vector<1x16x16xf32>
    %180 = vector.extract_strided_slice %157 {offsets = [0, 4, 0, 0], sizes = [1, 1, 16, 16], strides = [1, 1, 1, 1]} : vector<1x8x16x16xf32> to vector<1x1x16x16xf32>
    %181 = vector.shape_cast %180 : vector<1x1x16x16xf32> to vector<1x16x16xf32>
    %182 = arith.maximumf %176, %181 : vector<1x16x16xf32>
    %183 = vector.extract_strided_slice %157 {offsets = [0, 4, 0, 0], sizes = [1, 1, 16, 16], strides = [1, 1, 1, 1]} : vector<1x8x16x16xf32> to vector<1x1x16x16xf32>
    %184 = vector.shape_cast %183 : vector<1x1x16x16xf32> to vector<1x16x16xf32>
    %185 = arith.addf %179, %184 : vector<1x16x16xf32>
    %186 = vector.extract_strided_slice %157 {offsets = [0, 5, 0, 0], sizes = [1, 1, 16, 16], strides = [1, 1, 1, 1]} : vector<1x8x16x16xf32> to vector<1x1x16x16xf32>
    %187 = vector.shape_cast %186 : vector<1x1x16x16xf32> to vector<1x16x16xf32>
    %188 = arith.maximumf %182, %187 : vector<1x16x16xf32>
    %189 = vector.extract_strided_slice %157 {offsets = [0, 5, 0, 0], sizes = [1, 1, 16, 16], strides = [1, 1, 1, 1]} : vector<1x8x16x16xf32> to vector<1x1x16x16xf32>
    %190 = vector.shape_cast %189 : vector<1x1x16x16xf32> to vector<1x16x16xf32>
    %191 = arith.addf %185, %190 : vector<1x16x16xf32>
    %192 = vector.extract_strided_slice %157 {offsets = [0, 6, 0, 0], sizes = [1, 1, 16, 16], strides = [1, 1, 1, 1]} : vector<1x8x16x16xf32> to vector<1x1x16x16xf32>
    %193 = vector.shape_cast %192 : vector<1x1x16x16xf32> to vector<1x16x16xf32>
    %194 = arith.maximumf %188, %193 : vector<1x16x16xf32>
    %195 = vector.extract_strided_slice %157 {offsets = [0, 6, 0, 0], sizes = [1, 1, 16, 16], strides = [1, 1, 1, 1]} : vector<1x8x16x16xf32> to vector<1x1x16x16xf32>
    %196 = vector.shape_cast %195 : vector<1x1x16x16xf32> to vector<1x16x16xf32>
    %197 = arith.addf %191, %196 : vector<1x16x16xf32>
    %198 = vector.extract_strided_slice %157 {offsets = [0, 7, 0, 0], sizes = [1, 1, 16, 16], strides = [1, 1, 1, 1]} : vector<1x8x16x16xf32> to vector<1x1x16x16xf32>
    %199 = vector.shape_cast %198 : vector<1x1x16x16xf32> to vector<1x16x16xf32>
    %200 = arith.maximumf %194, %199 : vector<1x16x16xf32>
    %201 = vector.extract_strided_slice %157 {offsets = [0, 7, 0, 0], sizes = [1, 1, 16, 16], strides = [1, 1, 1, 1]} : vector<1x8x16x16xf32> to vector<1x1x16x16xf32>
    %202 = vector.shape_cast %201 : vector<1x1x16x16xf32> to vector<1x16x16xf32>
    %203 = arith.addf %197, %202 : vector<1x16x16xf32>
    %c0_45 = arith.constant 0 : index
    %c0_46 = arith.constant 0 : index
    %c3 = arith.constant 3 : index
    %c3_47 = arith.constant 3 : index
    %204 = vector.load %arg14[%c0_45, %c0_46, %c3, %c3_47] : memref<2x1x22x22xf32, #tpu.memory_space<vmem>>, vector<1x1x16x16xf32>
    %205 = vector.shape_cast %204 : vector<1x1x16x16xf32> to vector<1x16x16xf32>
    %206 = vector.shape_cast %200 : vector<1x16x16xf32> to vector<1x1x16x16xf32>
    tpu.vector_store %arg14[%c0_45, %c0_46, %c3, %c3_47], %206 {strides = array<i32>} : memref<2x1x22x22xf32, #tpu.memory_space<vmem>>, vector<1x1x16x16xf32>,
    %cst_48 = arith.constant 1.250000e-01 : f32
    %207 = vector.broadcast %cst_48 : f32 to vector<1x16x16xf32>
    %208 = arith.mulf %203, %207 : vector<1x16x16xf32>
    %c1 = arith.constant 1 : index
    %c0_49 = arith.constant 0 : index
    %c3_50 = arith.constant 3 : index
    %c3_51 = arith.constant 3 : index
    %209 = vector.load %arg14[%c1, %c0_49, %c3_50, %c3_51] : memref<2x1x22x22xf32, #tpu.memory_space<vmem>>, vector<1x1x16x16xf32>
    %210 = vector.shape_cast %209 : vector<1x1x16x16xf32> to vector<1x16x16xf32>
    %211 = vector.shape_cast %208 : vector<1x16x16xf32> to vector<1x1x16x16xf32>
    tpu.vector_store %arg14[%c1, %c0_49, %c3_50, %c3_51], %211 {strides = array<i32>} : memref<2x1x22x22xf32, #tpu.memory_space<vmem>>, vector<1x1x16x16xf32>,
    %cst_52 = arith.constant 0.000000e+00 : f32
    %212 = vector.broadcast %cst_52 : f32 to vector<1x16x16xf32>
    %c0_53 = arith.constant 0 : index
    %213 = memref.load %arg8[%c0_53] : memref<1xf32, #tpu.memory_space<smem>>
    %214 = vector.broadcast %213 : f32 to vector<1x16x16xf32>
    %215 = arith.addf %212, %214 : vector<1x16x16xf32>
    %c0_54 = arith.constant 0 : index
    %216 = memref.load %arg7[%c0_54] : memref<98xf32, #tpu.memory_space<smem>>
    %c0_55 = arith.constant 0 : index
    %c0_56 = arith.constant 0 : index
    %c0_57 = arith.constant 0 : index
    %c0_58 = arith.constant 0 : index
    %217 = vector.load %arg14[%c0_55, %c0_56, %c0_57, %c0_58] : memref<2x1x22x22xf32, #tpu.memory_space<vmem>>, vector<1x1x16x16xf32>
    %218 = vector.shape_cast %217 : vector<1x1x16x16xf32> to vector<1x16x16xf32>
    %219 = vector.broadcast %216 : f32 to vector<1x16x16xf32>
    %220 = arith.mulf %219, %218 : vector<1x16x16xf32>
    %221 = arith.addf %215, %220 : vector<1x16x16xf32>
    %c1_59 = arith.constant 1 : index
    %222 = memref.load %arg7[%c1_59] : memref<98xf32, #tpu.memory_space<smem>>
    %c0_60 = arith.constant 0 : index
    %c0_61 = arith.constant 0 : index
    %c0_62 = arith.constant 0 : index
    %c1_63 = arith.constant 1 : index
    %223 = vector.load %arg14[%c0_60, %c0_61, %c0_62, %c1_63] : memref<2x1x22x22xf32, #tpu.memory_space<vmem>>, vector<1x1x16x16xf32>
    %224 = vector.shape_cast %223 : vector<1x1x16x16xf32> to vector<1x16x16xf32>
    %225 = vector.broadcast %222 : f32 to vector<1x16x16xf32>
    %226 = arith.mulf %225, %224 : vector<1x16x16xf32>
    %227 = arith.addf %221, %226 : vector<1x16x16xf32>
    %c2 = arith.constant 2 : index
    %228 = memref.load %arg7[%c2] : memref<98xf32, #tpu.memory_space<smem>>
    %c0_64 = arith.constant 0 : index
    %c0_65 = arith.constant 0 : index
    %c0_66 = arith.constant 0 : index
    %c2_67 = arith.constant 2 : index
    %229 = vector.load %arg14[%c0_64, %c0_65, %c0_66, %c2_67] : memref<2x1x22x22xf32, #tpu.memory_space<vmem>>, vector<1x1x16x16xf32>
    %230 = vector.shape_cast %229 : vector<1x1x16x16xf32> to vector<1x16x16xf32>
    %231 = vector.broadcast %228 : f32 to vector<1x16x16xf32>
    %232 = arith.mulf %231, %230 : vector<1x16x16xf32>
    %233 = arith.addf %227, %232 : vector<1x16x16xf32>
    %c3_68 = arith.constant 3 : index
    %234 = memref.load %arg7[%c3_68] : memref<98xf32, #tpu.memory_space<smem>>
    %c0_69 = arith.constant 0 : index
    %c0_70 = arith.constant 0 : index
    %c0_71 = arith.constant 0 : index
    %c3_72 = arith.constant 3 : index
    %235 = vector.load %arg14[%c0_69, %c0_70, %c0_71, %c3_72] : memref<2x1x22x22xf32, #tpu.memory_space<vmem>>, vector<1x1x16x16xf32>
    %236 = vector.shape_cast %235 : vector<1x1x16x16xf32> to vector<1x16x16xf32>
    %237 = vector.broadcast %234 : f32 to vector<1x16x16xf32>
    %238 = arith.mulf %237, %236 : vector<1x16x16xf32>
    %239 = arith.addf %233, %238 : vector<1x16x16xf32>
    %c4 = arith.constant 4 : index
    %240 = memref.load %arg7[%c4] : memref<98xf32, #tpu.memory_space<smem>>
    %c0_73 = arith.constant 0 : index
    %c0_74 = arith.constant 0 : index
    %c0_75 = arith.constant 0 : index
    %c4_76 = arith.constant 4 : index
    %241 = vector.load %arg14[%c0_73, %c0_74, %c0_75, %c4_76] : memref<2x1x22x22xf32, #tpu.memory_space<vmem>>, vector<1x1x16x16xf32>
    %242 = vector.shape_cast %241 : vector<1x1x16x16xf32> to vector<1x16x16xf32>
    %243 = vector.broadcast %240 : f32 to vector<1x16x16xf32>
    %244 = arith.mulf %243, %242 : vector<1x16x16xf32>
    %245 = arith.addf %239, %244 : vector<1x16x16xf32>
    %c5 = arith.constant 5 : index
    %246 = memref.load %arg7[%c5] : memref<98xf32, #tpu.memory_space<smem>>
    %c0_77 = arith.constant 0 : index
    %c0_78 = arith.constant 0 : index
    %c0_79 = arith.constant 0 : index
    %c5_80 = arith.constant 5 : index
    %247 = vector.load %arg14[%c0_77, %c0_78, %c0_79, %c5_80] : memref<2x1x22x22xf32, #tpu.memory_space<vmem>>, vector<1x1x16x16xf32>
    %248 = vector.shape_cast %247 : vector<1x1x16x16xf32> to vector<1x16x16xf32>
    %249 = vector.broadcast %246 : f32 to vector<1x16x16xf32>
    %250 = arith.mulf %249, %248 : vector<1x16x16xf32>
    %251 = arith.addf %245, %250 : vector<1x16x16xf32>
    %c6 = arith.constant 6 : index
    %252 = memref.load %arg7[%c6] : memref<98xf32, #tpu.memory_space<smem>>
    %c0_81 = arith.constant 0 : index
    %c0_82 = arith.constant 0 : index
    %c0_83 = arith.constant 0 : index
    %c6_84 = arith.constant 6 : index
    %253 = vector.load %arg14[%c0_81, %c0_82, %c0_83, %c6_84] : memref<2x1x22x22xf32, #tpu.memory_space<vmem>>, vector<1x1x16x16xf32>
    %254 = vector.shape_cast %253 : vector<1x1x16x16xf32> to vector<1x16x16xf32>
    %255 = vector.broadcast %252 : f32 to vector<1x16x16xf32>
    %256 = arith.mulf %255, %254 : vector<1x16x16xf32>
    %257 = arith.addf %251, %256 : vector<1x16x16xf32>
    %c7 = arith.constant 7 : index
    %258 = memref.load %arg7[%c7] : memref<98xf32, #tpu.memory_space<smem>>
    %c0_85 = arith.constant 0 : index
    %c0_86 = arith.constant 0 : index
    %c1_87 = arith.constant 1 : index
    %c0_88 = arith.constant 0 : index
    %259 = vector.load %arg14[%c0_85, %c0_86, %c1_87, %c0_88] : memref<2x1x22x22xf32, #tpu.memory_space<vmem>>, vector<1x1x16x16xf32>
    %260 = vector.shape_cast %259 : vector<1x1x16x16xf32> to vector<1x16x16xf32>
    %261 = vector.broadcast %258 : f32 to vector<1x16x16xf32>
    %262 = arith.mulf %261, %260 : vector<1x16x16xf32>
    %263 = arith.addf %257, %262 : vector<1x16x16xf32>
    %c8 = arith.constant 8 : index
    %264 = memref.load %arg7[%c8] : memref<98xf32, #tpu.memory_space<smem>>
    %c0_89 = arith.constant 0 : index
    %c0_90 = arith.constant 0 : index
    %c1_91 = arith.constant 1 : index
    %c1_92 = arith.constant 1 : index
    %265 = vector.load %arg14[%c0_89, %c0_90, %c1_91, %c1_92] : memref<2x1x22x22xf32, #tpu.memory_space<vmem>>, vector<1x1x16x16xf32>
    %266 = vector.shape_cast %265 : vector<1x1x16x16xf32> to vector<1x16x16xf32>
    %267 = vector.broadcast %264 : f32 to vector<1x16x16xf32>
    %268 = arith.mulf %267, %266 : vector<1x16x16xf32>
    %269 = arith.addf %263, %268 : vector<1x16x16xf32>
    %c9 = arith.constant 9 : index
    %270 = memref.load %arg7[%c9] : memref<98xf32, #tpu.memory_space<smem>>
    %c0_93 = arith.constant 0 : index
    %c0_94 = arith.constant 0 : index
    %c1_95 = arith.constant 1 : index
    %c2_96 = arith.constant 2 : index
    %271 = vector.load %arg14[%c0_93, %c0_94, %c1_95, %c2_96] : memref<2x1x22x22xf32, #tpu.memory_space<vmem>>, vector<1x1x16x16xf32>
    %272 = vector.shape_cast %271 : vector<1x1x16x16xf32> to vector<1x16x16xf32>
    %273 = vector.broadcast %270 : f32 to vector<1x16x16xf32>
    %274 = arith.mulf %273, %272 : vector<1x16x16xf32>
    %275 = arith.addf %269, %274 : vector<1x16x16xf32>
    %c10 = arith.constant 10 : index
    %276 = memref.load %arg7[%c10] : memref<98xf32, #tpu.memory_space<smem>>
    %c0_97 = arith.constant 0 : index
    %c0_98 = arith.constant 0 : index
    %c1_99 = arith.constant 1 : index
    %c3_100 = arith.constant 3 : index
    %277 = vector.load %arg14[%c0_97, %c0_98, %c1_99, %c3_100] : memref<2x1x22x22xf32, #tpu.memory_space<vmem>>, vector<1x1x16x16xf32>
    %278 = vector.shape_cast %277 : vector<1x1x16x16xf32> to vector<1x16x16xf32>
    %279 = vector.broadcast %276 : f32 to vector<1x16x16xf32>
    %280 = arith.mulf %279, %278 : vector<1x16x16xf32>
    %281 = arith.addf %275, %280 : vector<1x16x16xf32>
    %c11 = arith.constant 11 : index
    %282 = memref.load %arg7[%c11] : memref<98xf32, #tpu.memory_space<smem>>
    %c0_101 = arith.constant 0 : index
    %c0_102 = arith.constant 0 : index
    %c1_103 = arith.constant 1 : index
    %c4_104 = arith.constant 4 : index
    %283 = vector.load %arg14[%c0_101, %c0_102, %c1_103, %c4_104] : memref<2x1x22x22xf32, #tpu.memory_space<vmem>>, vector<1x1x16x16xf32>
    %284 = vector.shape_cast %283 : vector<1x1x16x16xf32> to vector<1x16x16xf32>
    %285 = vector.broadcast %282 : f32 to vector<1x16x16xf32>
    %286 = arith.mulf %285, %284 : vector<1x16x16xf32>
    %287 = arith.addf %281, %286 : vector<1x16x16xf32>
    %c12 = arith.constant 12 : index
    %288 = memref.load %arg7[%c12] : memref<98xf32, #tpu.memory_space<smem>>
    %c0_105 = arith.constant 0 : index
    %c0_106 = arith.constant 0 : index
    %c1_107 = arith.constant 1 : index
    %c5_108 = arith.constant 5 : index
    %289 = vector.load %arg14[%c0_105, %c0_106, %c1_107, %c5_108] : memref<2x1x22x22xf32, #tpu.memory_space<vmem>>, vector<1x1x16x16xf32>
    %290 = vector.shape_cast %289 : vector<1x1x16x16xf32> to vector<1x16x16xf32>
    %291 = vector.broadcast %288 : f32 to vector<1x16x16xf32>
    %292 = arith.mulf %291, %290 : vector<1x16x16xf32>
    %293 = arith.addf %287, %292 : vector<1x16x16xf32>
    %c13 = arith.constant 13 : index
    %294 = memref.load %arg7[%c13] : memref<98xf32, #tpu.memory_space<smem>>
    %c0_109 = arith.constant 0 : index
    %c0_110 = arith.constant 0 : index
    %c1_111 = arith.constant 1 : index
    %c6_112 = arith.constant 6 : index
    %295 = vector.load %arg14[%c0_109, %c0_110, %c1_111, %c6_112] : memref<2x1x22x22xf32, #tpu.memory_space<vmem>>, vector<1x1x16x16xf32>
    %296 = vector.shape_cast %295 : vector<1x1x16x16xf32> to vector<1x16x16xf32>
    %297 = vector.broadcast %294 : f32 to vector<1x16x16xf32>
    %298 = arith.mulf %297, %296 : vector<1x16x16xf32>
    %299 = arith.addf %293, %298 : vector<1x16x16xf32>
    %c14 = arith.constant 14 : index
    %300 = memref.load %arg7[%c14] : memref<98xf32, #tpu.memory_space<smem>>
    %c0_113 = arith.constant 0 : index
    %c0_114 = arith.constant 0 : index
    %c2_115 = arith.constant 2 : index
    %c0_116 = arith.constant 0 : index
    %301 = vector.load %arg14[%c0_113, %c0_114, %c2_115, %c0_116] : memref<2x1x22x22xf32, #tpu.memory_space<vmem>>, vector<1x1x16x16xf32>
    %302 = vector.shape_cast %301 : vector<1x1x16x16xf32> to vector<1x16x16xf32>
    %303 = vector.broadcast %300 : f32 to vector<1x16x16xf32>
    %304 = arith.mulf %303, %302 : vector<1x16x16xf32>
    %305 = arith.addf %299, %304 : vector<1x16x16xf32>
    %c15 = arith.constant 15 : index
    %306 = memref.load %arg7[%c15] : memref<98xf32, #tpu.memory_space<smem>>
    %c0_117 = arith.constant 0 : index
    %c0_118 = arith.constant 0 : index
    %c2_119 = arith.constant 2 : index
    %c1_120 = arith.constant 1 : index
    %307 = vector.load %arg14[%c0_117, %c0_118, %c2_119, %c1_120] : memref<2x1x22x22xf32, #tpu.memory_space<vmem>>, vector<1x1x16x16xf32>
    %308 = vector.shape_cast %307 : vector<1x1x16x16xf32> to vector<1x16x16xf32>
    %309 = vector.broadcast %306 : f32 to vector<1x16x16xf32>
    %310 = arith.mulf %309, %308 : vector<1x16x16xf32>
    %311 = arith.addf %305, %310 : vector<1x16x16xf32>
    %c16 = arith.constant 16 : index
    %312 = memref.load %arg7[%c16] : memref<98xf32, #tpu.memory_space<smem>>
    %c0_121 = arith.constant 0 : index
    %c0_122 = arith.constant 0 : index
    %c2_123 = arith.constant 2 : index
    %c2_124 = arith.constant 2 : index
    %313 = vector.load %arg14[%c0_121, %c0_122, %c2_123, %c2_124] : memref<2x1x22x22xf32, #tpu.memory_space<vmem>>, vector<1x1x16x16xf32>
    %314 = vector.shape_cast %313 : vector<1x1x16x16xf32> to vector<1x16x16xf32>
    %315 = vector.broadcast %312 : f32 to vector<1x16x16xf32>
    %316 = arith.mulf %315, %314 : vector<1x16x16xf32>
    %317 = arith.addf %311, %316 : vector<1x16x16xf32>
    %c17 = arith.constant 17 : index
    %318 = memref.load %arg7[%c17] : memref<98xf32, #tpu.memory_space<smem>>
    %c0_125 = arith.constant 0 : index
    %c0_126 = arith.constant 0 : index
    %c2_127 = arith.constant 2 : index
    %c3_128 = arith.constant 3 : index
    %319 = vector.load %arg14[%c0_125, %c0_126, %c2_127, %c3_128] : memref<2x1x22x22xf32, #tpu.memory_space<vmem>>, vector<1x1x16x16xf32>
    %320 = vector.shape_cast %319 : vector<1x1x16x16xf32> to vector<1x16x16xf32>
    %321 = vector.broadcast %318 : f32 to vector<1x16x16xf32>
    %322 = arith.mulf %321, %320 : vector<1x16x16xf32>
    %323 = arith.addf %317, %322 : vector<1x16x16xf32>
    %c18 = arith.constant 18 : index
    %324 = memref.load %arg7[%c18] : memref<98xf32, #tpu.memory_space<smem>>
    %c0_129 = arith.constant 0 : index
    %c0_130 = arith.constant 0 : index
    %c2_131 = arith.constant 2 : index
    %c4_132 = arith.constant 4 : index
    %325 = vector.load %arg14[%c0_129, %c0_130, %c2_131, %c4_132] : memref<2x1x22x22xf32, #tpu.memory_space<vmem>>, vector<1x1x16x16xf32>
    %326 = vector.shape_cast %325 : vector<1x1x16x16xf32> to vector<1x16x16xf32>
    %327 = vector.broadcast %324 : f32 to vector<1x16x16xf32>
    %328 = arith.mulf %327, %326 : vector<1x16x16xf32>
    %329 = arith.addf %323, %328 : vector<1x16x16xf32>
    %c19 = arith.constant 19 : index
    %330 = memref.load %arg7[%c19] : memref<98xf32, #tpu.memory_space<smem>>
    %c0_133 = arith.constant 0 : index
    %c0_134 = arith.constant 0 : index
    %c2_135 = arith.constant 2 : index
    %c5_136 = arith.constant 5 : index
    %331 = vector.load %arg14[%c0_133, %c0_134, %c2_135, %c5_136] : memref<2x1x22x22xf32, #tpu.memory_space<vmem>>, vector<1x1x16x16xf32>
    %332 = vector.shape_cast %331 : vector<1x1x16x16xf32> to vector<1x16x16xf32>
    %333 = vector.broadcast %330 : f32 to vector<1x16x16xf32>
    %334 = arith.mulf %333, %332 : vector<1x16x16xf32>
    %335 = arith.addf %329, %334 : vector<1x16x16xf32>
    %c20 = arith.constant 20 : index
    %336 = memref.load %arg7[%c20] : memref<98xf32, #tpu.memory_space<smem>>
    %c0_137 = arith.constant 0 : index
    %c0_138 = arith.constant 0 : index
    %c2_139 = arith.constant 2 : index
    %c6_140 = arith.constant 6 : index
    %337 = vector.load %arg14[%c0_137, %c0_138, %c2_139, %c6_140] : memref<2x1x22x22xf32, #tpu.memory_space<vmem>>, vector<1x1x16x16xf32>
    %338 = vector.shape_cast %337 : vector<1x1x16x16xf32> to vector<1x16x16xf32>
    %339 = vector.broadcast %336 : f32 to vector<1x16x16xf32>
    %340 = arith.mulf %339, %338 : vector<1x16x16xf32>
    %341 = arith.addf %335, %340 : vector<1x16x16xf32>
    %c21 = arith.constant 21 : index
    %342 = memref.load %arg7[%c21] : memref<98xf32, #tpu.memory_space<smem>>
    %c0_141 = arith.constant 0 : index
    %c0_142 = arith.constant 0 : index
    %c3_143 = arith.constant 3 : index
    %c0_144 = arith.constant 0 : index
    %343 = vector.load %arg14[%c0_141, %c0_142, %c3_143, %c0_144] : memref<2x1x22x22xf32, #tpu.memory_space<vmem>>, vector<1x1x16x16xf32>
    %344 = vector.shape_cast %343 : vector<1x1x16x16xf32> to vector<1x16x16xf32>
    %345 = vector.broadcast %342 : f32 to vector<1x16x16xf32>
    %346 = arith.mulf %345, %344 : vector<1x16x16xf32>
    %347 = arith.addf %341, %346 : vector<1x16x16xf32>
    %c22 = arith.constant 22 : index
    %348 = memref.load %arg7[%c22] : memref<98xf32, #tpu.memory_space<smem>>
    %c0_145 = arith.constant 0 : index
    %c0_146 = arith.constant 0 : index
    %c3_147 = arith.constant 3 : index
    %c1_148 = arith.constant 1 : index
    %349 = vector.load %arg14[%c0_145, %c0_146, %c3_147, %c1_148] : memref<2x1x22x22xf32, #tpu.memory_space<vmem>>, vector<1x1x16x16xf32>
    %350 = vector.shape_cast %349 : vector<1x1x16x16xf32> to vector<1x16x16xf32>
    %351 = vector.broadcast %348 : f32 to vector<1x16x16xf32>
    %352 = arith.mulf %351, %350 : vector<1x16x16xf32>
    %353 = arith.addf %347, %352 : vector<1x16x16xf32>
    %c23 = arith.constant 23 : index
    %354 = memref.load %arg7[%c23] : memref<98xf32, #tpu.memory_space<smem>>
    %c0_149 = arith.constant 0 : index
    %c0_150 = arith.constant 0 : index
    %c3_151 = arith.constant 3 : index
    %c2_152 = arith.constant 2 : index
    %355 = vector.load %arg14[%c0_149, %c0_150, %c3_151, %c2_152] : memref<2x1x22x22xf32, #tpu.memory_space<vmem>>, vector<1x1x16x16xf32>
    %356 = vector.shape_cast %355 : vector<1x1x16x16xf32> to vector<1x16x16xf32>
    %357 = vector.broadcast %354 : f32 to vector<1x16x16xf32>
    %358 = arith.mulf %357, %356 : vector<1x16x16xf32>
    %359 = arith.addf %353, %358 : vector<1x16x16xf32>
    %c24 = arith.constant 24 : index
    %360 = memref.load %arg7[%c24] : memref<98xf32, #tpu.memory_space<smem>>
    %c0_153 = arith.constant 0 : index
    %c0_154 = arith.constant 0 : index
    %c3_155 = arith.constant 3 : index
    %c3_156 = arith.constant 3 : index
    %361 = vector.load %arg14[%c0_153, %c0_154, %c3_155, %c3_156] : memref<2x1x22x22xf32, #tpu.memory_space<vmem>>, vector<1x1x16x16xf32>
    %362 = vector.shape_cast %361 : vector<1x1x16x16xf32> to vector<1x16x16xf32>
    %363 = vector.broadcast %360 : f32 to vector<1x16x16xf32>
    %364 = arith.mulf %363, %362 : vector<1x16x16xf32>
    %365 = arith.addf %359, %364 : vector<1x16x16xf32>
    %c25 = arith.constant 25 : index
    %366 = memref.load %arg7[%c25] : memref<98xf32, #tpu.memory_space<smem>>
    %c0_157 = arith.constant 0 : index
    %c0_158 = arith.constant 0 : index
    %c3_159 = arith.constant 3 : index
    %c4_160 = arith.constant 4 : index
    %367 = vector.load %arg14[%c0_157, %c0_158, %c3_159, %c4_160] : memref<2x1x22x22xf32, #tpu.memory_space<vmem>>, vector<1x1x16x16xf32>
    %368 = vector.shape_cast %367 : vector<1x1x16x16xf32> to vector<1x16x16xf32>
    %369 = vector.broadcast %366 : f32 to vector<1x16x16xf32>
    %370 = arith.mulf %369, %368 : vector<1x16x16xf32>
    %371 = arith.addf %365, %370 : vector<1x16x16xf32>
    %c26 = arith.constant 26 : index
    %372 = memref.load %arg7[%c26] : memref<98xf32, #tpu.memory_space<smem>>
    %c0_161 = arith.constant 0 : index
    %c0_162 = arith.constant 0 : index
    %c3_163 = arith.constant 3 : index
    %c5_164 = arith.constant 5 : index
    %373 = vector.load %arg14[%c0_161, %c0_162, %c3_163, %c5_164] : memref<2x1x22x22xf32, #tpu.memory_space<vmem>>, vector<1x1x16x16xf32>
    %374 = vector.shape_cast %373 : vector<1x1x16x16xf32> to vector<1x16x16xf32>
    %375 = vector.broadcast %372 : f32 to vector<1x16x16xf32>
    %376 = arith.mulf %375, %374 : vector<1x16x16xf32>
    %377 = arith.addf %371, %376 : vector<1x16x16xf32>
    %c27 = arith.constant 27 : index
    %378 = memref.load %arg7[%c27] : memref<98xf32, #tpu.memory_space<smem>>
    %c0_165 = arith.constant 0 : index
    %c0_166 = arith.constant 0 : index
    %c3_167 = arith.constant 3 : index
    %c6_168 = arith.constant 6 : index
    %379 = vector.load %arg14[%c0_165, %c0_166, %c3_167, %c6_168] : memref<2x1x22x22xf32, #tpu.memory_space<vmem>>, vector<1x1x16x16xf32>
    %380 = vector.shape_cast %379 : vector<1x1x16x16xf32> to vector<1x16x16xf32>
    %381 = vector.broadcast %378 : f32 to vector<1x16x16xf32>
    %382 = arith.mulf %381, %380 : vector<1x16x16xf32>
    %383 = arith.addf %377, %382 : vector<1x16x16xf32>
    %c28 = arith.constant 28 : index
    %384 = memref.load %arg7[%c28] : memref<98xf32, #tpu.memory_space<smem>>
    %c0_169 = arith.constant 0 : index
    %c0_170 = arith.constant 0 : index
    %c4_171 = arith.constant 4 : index
    %c0_172 = arith.constant 0 : index
    %385 = vector.load %arg14[%c0_169, %c0_170, %c4_171, %c0_172] : memref<2x1x22x22xf32, #tpu.memory_space<vmem>>, vector<1x1x16x16xf32>
    %386 = vector.shape_cast %385 : vector<1x1x16x16xf32> to vector<1x16x16xf32>
    %387 = vector.broadcast %384 : f32 to vector<1x16x16xf32>
    %388 = arith.mulf %387, %386 : vector<1x16x16xf32>
    %389 = arith.addf %383, %388 : vector<1x16x16xf32>
    %c29 = arith.constant 29 : index
    %390 = memref.load %arg7[%c29] : memref<98xf32, #tpu.memory_space<smem>>
    %c0_173 = arith.constant 0 : index
    %c0_174 = arith.constant 0 : index
    %c4_175 = arith.constant 4 : index
    %c1_176 = arith.constant 1 : index
    %391 = vector.load %arg14[%c0_173, %c0_174, %c4_175, %c1_176] : memref<2x1x22x22xf32, #tpu.memory_space<vmem>>, vector<1x1x16x16xf32>
    %392 = vector.shape_cast %391 : vector<1x1x16x16xf32> to vector<1x16x16xf32>
    %393 = vector.broadcast %390 : f32 to vector<1x16x16xf32>
    %394 = arith.mulf %393, %392 : vector<1x16x16xf32>
    %395 = arith.addf %389, %394 : vector<1x16x16xf32>
    %c30 = arith.constant 30 : index
    %396 = memref.load %arg7[%c30] : memref<98xf32, #tpu.memory_space<smem>>
    %c0_177 = arith.constant 0 : index
    %c0_178 = arith.constant 0 : index
    %c4_179 = arith.constant 4 : index
    %c2_180 = arith.constant 2 : index
    %397 = vector.load %arg14[%c0_177, %c0_178, %c4_179, %c2_180] : memref<2x1x22x22xf32, #tpu.memory_space<vmem>>, vector<1x1x16x16xf32>
    %398 = vector.shape_cast %397 : vector<1x1x16x16xf32> to vector<1x16x16xf32>
    %399 = vector.broadcast %396 : f32 to vector<1x16x16xf32>
    %400 = arith.mulf %399, %398 : vector<1x16x16xf32>
    %401 = arith.addf %395, %400 : vector<1x16x16xf32>
    %c31 = arith.constant 31 : index
    %402 = memref.load %arg7[%c31] : memref<98xf32, #tpu.memory_space<smem>>
    %c0_181 = arith.constant 0 : index
    %c0_182 = arith.constant 0 : index
    %c4_183 = arith.constant 4 : index
    %c3_184 = arith.constant 3 : index
    %403 = vector.load %arg14[%c0_181, %c0_182, %c4_183, %c3_184] : memref<2x1x22x22xf32, #tpu.memory_space<vmem>>, vector<1x1x16x16xf32>
    %404 = vector.shape_cast %403 : vector<1x1x16x16xf32> to vector<1x16x16xf32>
    %405 = vector.broadcast %402 : f32 to vector<1x16x16xf32>
    %406 = arith.mulf %405, %404 : vector<1x16x16xf32>
    %407 = arith.addf %401, %406 : vector<1x16x16xf32>
    %c32 = arith.constant 32 : index
    %408 = memref.load %arg7[%c32] : memref<98xf32, #tpu.memory_space<smem>>
    %c0_185 = arith.constant 0 : index
    %c0_186 = arith.constant 0 : index
    %c4_187 = arith.constant 4 : index
    %c4_188 = arith.constant 4 : index
    %409 = vector.load %arg14[%c0_185, %c0_186, %c4_187, %c4_188] : memref<2x1x22x22xf32, #tpu.memory_space<vmem>>, vector<1x1x16x16xf32>
    %410 = vector.shape_cast %409 : vector<1x1x16x16xf32> to vector<1x16x16xf32>
    %411 = vector.broadcast %408 : f32 to vector<1x16x16xf32>
    %412 = arith.mulf %411, %410 : vector<1x16x16xf32>
    %413 = arith.addf %407, %412 : vector<1x16x16xf32>
    %c33 = arith.constant 33 : index
    %414 = memref.load %arg7[%c33] : memref<98xf32, #tpu.memory_space<smem>>
    %c0_189 = arith.constant 0 : index
    %c0_190 = arith.constant 0 : index
    %c4_191 = arith.constant 4 : index
    %c5_192 = arith.constant 5 : index
    %415 = vector.load %arg14[%c0_189, %c0_190, %c4_191, %c5_192] : memref<2x1x22x22xf32, #tpu.memory_space<vmem>>, vector<1x1x16x16xf32>
    %416 = vector.shape_cast %415 : vector<1x1x16x16xf32> to vector<1x16x16xf32>
    %417 = vector.broadcast %414 : f32 to vector<1x16x16xf32>
    %418 = arith.mulf %417, %416 : vector<1x16x16xf32>
    %419 = arith.addf %413, %418 : vector<1x16x16xf32>
    %c34 = arith.constant 34 : index
    %420 = memref.load %arg7[%c34] : memref<98xf32, #tpu.memory_space<smem>>
    %c0_193 = arith.constant 0 : index
    %c0_194 = arith.constant 0 : index
    %c4_195 = arith.constant 4 : index
    %c6_196 = arith.constant 6 : index
    %421 = vector.load %arg14[%c0_193, %c0_194, %c4_195, %c6_196] : memref<2x1x22x22xf32, #tpu.memory_space<vmem>>, vector<1x1x16x16xf32>
    %422 = vector.shape_cast %421 : vector<1x1x16x16xf32> to vector<1x16x16xf32>
    %423 = vector.broadcast %420 : f32 to vector<1x16x16xf32>
    %424 = arith.mulf %423, %422 : vector<1x16x16xf32>
    %425 = arith.addf %419, %424 : vector<1x16x16xf32>
    %c35 = arith.constant 35 : index
    %426 = memref.load %arg7[%c35] : memref<98xf32, #tpu.memory_space<smem>>
    %c0_197 = arith.constant 0 : index
    %c0_198 = arith.constant 0 : index
    %c5_199 = arith.constant 5 : index
    %c0_200 = arith.constant 0 : index
    %427 = vector.load %arg14[%c0_197, %c0_198, %c5_199, %c0_200] : memref<2x1x22x22xf32, #tpu.memory_space<vmem>>, vector<1x1x16x16xf32>
    %428 = vector.shape_cast %427 : vector<1x1x16x16xf32> to vector<1x16x16xf32>
    %429 = vector.broadcast %426 : f32 to vector<1x16x16xf32>
    %430 = arith.mulf %429, %428 : vector<1x16x16xf32>
    %431 = arith.addf %425, %430 : vector<1x16x16xf32>
    %c36 = arith.constant 36 : index
    %432 = memref.load %arg7[%c36] : memref<98xf32, #tpu.memory_space<smem>>
    %c0_201 = arith.constant 0 : index
    %c0_202 = arith.constant 0 : index
    %c5_203 = arith.constant 5 : index
    %c1_204 = arith.constant 1 : index
    %433 = vector.load %arg14[%c0_201, %c0_202, %c5_203, %c1_204] : memref<2x1x22x22xf32, #tpu.memory_space<vmem>>, vector<1x1x16x16xf32>
    %434 = vector.shape_cast %433 : vector<1x1x16x16xf32> to vector<1x16x16xf32>
    %435 = vector.broadcast %432 : f32 to vector<1x16x16xf32>
    %436 = arith.mulf %435, %434 : vector<1x16x16xf32>
    %437 = arith.addf %431, %436 : vector<1x16x16xf32>
    %c37 = arith.constant 37 : index
    %438 = memref.load %arg7[%c37] : memref<98xf32, #tpu.memory_space<smem>>
    %c0_205 = arith.constant 0 : index
    %c0_206 = arith.constant 0 : index
    %c5_207 = arith.constant 5 : index
    %c2_208 = arith.constant 2 : index
    %439 = vector.load %arg14[%c0_205, %c0_206, %c5_207, %c2_208] : memref<2x1x22x22xf32, #tpu.memory_space<vmem>>, vector<1x1x16x16xf32>
    %440 = vector.shape_cast %439 : vector<1x1x16x16xf32> to vector<1x16x16xf32>
    %441 = vector.broadcast %438 : f32 to vector<1x16x16xf32>
    %442 = arith.mulf %441, %440 : vector<1x16x16xf32>
    %443 = arith.addf %437, %442 : vector<1x16x16xf32>
    %c38 = arith.constant 38 : index
    %444 = memref.load %arg7[%c38] : memref<98xf32, #tpu.memory_space<smem>>
    %c0_209 = arith.constant 0 : index
    %c0_210 = arith.constant 0 : index
    %c5_211 = arith.constant 5 : index
    %c3_212 = arith.constant 3 : index
    %445 = vector.load %arg14[%c0_209, %c0_210, %c5_211, %c3_212] : memref<2x1x22x22xf32, #tpu.memory_space<vmem>>, vector<1x1x16x16xf32>
    %446 = vector.shape_cast %445 : vector<1x1x16x16xf32> to vector<1x16x16xf32>
    %447 = vector.broadcast %444 : f32 to vector<1x16x16xf32>
    %448 = arith.mulf %447, %446 : vector<1x16x16xf32>
    %449 = arith.addf %443, %448 : vector<1x16x16xf32>
    %c39 = arith.constant 39 : index
    %450 = memref.load %arg7[%c39] : memref<98xf32, #tpu.memory_space<smem>>
    %c0_213 = arith.constant 0 : index
    %c0_214 = arith.constant 0 : index
    %c5_215 = arith.constant 5 : index
    %c4_216 = arith.constant 4 : index
    %451 = vector.load %arg14[%c0_213, %c0_214, %c5_215, %c4_216] : memref<2x1x22x22xf32, #tpu.memory_space<vmem>>, vector<1x1x16x16xf32>
    %452 = vector.shape_cast %451 : vector<1x1x16x16xf32> to vector<1x16x16xf32>
    %453 = vector.broadcast %450 : f32 to vector<1x16x16xf32>
    %454 = arith.mulf %453, %452 : vector<1x16x16xf32>
    %455 = arith.addf %449, %454 : vector<1x16x16xf32>
    %c40 = arith.constant 40 : index
    %456 = memref.load %arg7[%c40] : memref<98xf32, #tpu.memory_space<smem>>
    %c0_217 = arith.constant 0 : index
    %c0_218 = arith.constant 0 : index
    %c5_219 = arith.constant 5 : index
    %c5_220 = arith.constant 5 : index
    %457 = vector.load %arg14[%c0_217, %c0_218, %c5_219, %c5_220] : memref<2x1x22x22xf32, #tpu.memory_space<vmem>>, vector<1x1x16x16xf32>
    %458 = vector.shape_cast %457 : vector<1x1x16x16xf32> to vector<1x16x16xf32>
    %459 = vector.broadcast %456 : f32 to vector<1x16x16xf32>
    %460 = arith.mulf %459, %458 : vector<1x16x16xf32>
    %461 = arith.addf %455, %460 : vector<1x16x16xf32>
    %c41 = arith.constant 41 : index
    %462 = memref.load %arg7[%c41] : memref<98xf32, #tpu.memory_space<smem>>
    %c0_221 = arith.constant 0 : index
    %c0_222 = arith.constant 0 : index
    %c5_223 = arith.constant 5 : index
    %c6_224 = arith.constant 6 : index
    %463 = vector.load %arg14[%c0_221, %c0_222, %c5_223, %c6_224] : memref<2x1x22x22xf32, #tpu.memory_space<vmem>>, vector<1x1x16x16xf32>
    %464 = vector.shape_cast %463 : vector<1x1x16x16xf32> to vector<1x16x16xf32>
    %465 = vector.broadcast %462 : f32 to vector<1x16x16xf32>
    %466 = arith.mulf %465, %464 : vector<1x16x16xf32>
    %467 = arith.addf %461, %466 : vector<1x16x16xf32>
    %c42 = arith.constant 42 : index
    %468 = memref.load %arg7[%c42] : memref<98xf32, #tpu.memory_space<smem>>
    %c0_225 = arith.constant 0 : index
    %c0_226 = arith.constant 0 : index
    %c6_227 = arith.constant 6 : index
    %c0_228 = arith.constant 0 : index
    %469 = vector.load %arg14[%c0_225, %c0_226, %c6_227, %c0_228] : memref<2x1x22x22xf32, #tpu.memory_space<vmem>>, vector<1x1x16x16xf32>
    %470 = vector.shape_cast %469 : vector<1x1x16x16xf32> to vector<1x16x16xf32>
    %471 = vector.broadcast %468 : f32 to vector<1x16x16xf32>
    %472 = arith.mulf %471, %470 : vector<1x16x16xf32>
    %473 = arith.addf %467, %472 : vector<1x16x16xf32>
    %c43 = arith.constant 43 : index
    %474 = memref.load %arg7[%c43] : memref<98xf32, #tpu.memory_space<smem>>
    %c0_229 = arith.constant 0 : index
    %c0_230 = arith.constant 0 : index
    %c6_231 = arith.constant 6 : index
    %c1_232 = arith.constant 1 : index
    %475 = vector.load %arg14[%c0_229, %c0_230, %c6_231, %c1_232] : memref<2x1x22x22xf32, #tpu.memory_space<vmem>>, vector<1x1x16x16xf32>
    %476 = vector.shape_cast %475 : vector<1x1x16x16xf32> to vector<1x16x16xf32>
    %477 = vector.broadcast %474 : f32 to vector<1x16x16xf32>
    %478 = arith.mulf %477, %476 : vector<1x16x16xf32>
    %479 = arith.addf %473, %478 : vector<1x16x16xf32>
    %c44 = arith.constant 44 : index
    %480 = memref.load %arg7[%c44] : memref<98xf32, #tpu.memory_space<smem>>
    %c0_233 = arith.constant 0 : index
    %c0_234 = arith.constant 0 : index
    %c6_235 = arith.constant 6 : index
    %c2_236 = arith.constant 2 : index
    %481 = vector.load %arg14[%c0_233, %c0_234, %c6_235, %c2_236] : memref<2x1x22x22xf32, #tpu.memory_space<vmem>>, vector<1x1x16x16xf32>
    %482 = vector.shape_cast %481 : vector<1x1x16x16xf32> to vector<1x16x16xf32>
    %483 = vector.broadcast %480 : f32 to vector<1x16x16xf32>
    %484 = arith.mulf %483, %482 : vector<1x16x16xf32>
    %485 = arith.addf %479, %484 : vector<1x16x16xf32>
    %c45 = arith.constant 45 : index
    %486 = memref.load %arg7[%c45] : memref<98xf32, #tpu.memory_space<smem>>
    %c0_237 = arith.constant 0 : index
    %c0_238 = arith.constant 0 : index
    %c6_239 = arith.constant 6 : index
    %c3_240 = arith.constant 3 : index
    %487 = vector.load %arg14[%c0_237, %c0_238, %c6_239, %c3_240] : memref<2x1x22x22xf32, #tpu.memory_space<vmem>>, vector<1x1x16x16xf32>
    %488 = vector.shape_cast %487 : vector<1x1x16x16xf32> to vector<1x16x16xf32>
    %489 = vector.broadcast %486 : f32 to vector<1x16x16xf32>
    %490 = arith.mulf %489, %488 : vector<1x16x16xf32>
    %491 = arith.addf %485, %490 : vector<1x16x16xf32>
    %c46 = arith.constant 46 : index
    %492 = memref.load %arg7[%c46] : memref<98xf32, #tpu.memory_space<smem>>
    %c0_241 = arith.constant 0 : index
    %c0_242 = arith.constant 0 : index
    %c6_243 = arith.constant 6 : index
    %c4_244 = arith.constant 4 : index
    %493 = vector.load %arg14[%c0_241, %c0_242, %c6_243, %c4_244] : memref<2x1x22x22xf32, #tpu.memory_space<vmem>>, vector<1x1x16x16xf32>
    %494 = vector.shape_cast %493 : vector<1x1x16x16xf32> to vector<1x16x16xf32>
    %495 = vector.broadcast %492 : f32 to vector<1x16x16xf32>
    %496 = arith.mulf %495, %494 : vector<1x16x16xf32>
    %497 = arith.addf %491, %496 : vector<1x16x16xf32>
    %c47 = arith.constant 47 : index
    %498 = memref.load %arg7[%c47] : memref<98xf32, #tpu.memory_space<smem>>
    %c0_245 = arith.constant 0 : index
    %c0_246 = arith.constant 0 : index
    %c6_247 = arith.constant 6 : index
    %c5_248 = arith.constant 5 : index
    %499 = vector.load %arg14[%c0_245, %c0_246, %c6_247, %c5_248] : memref<2x1x22x22xf32, #tpu.memory_space<vmem>>, vector<1x1x16x16xf32>
    %500 = vector.shape_cast %499 : vector<1x1x16x16xf32> to vector<1x16x16xf32>
    %501 = vector.broadcast %498 : f32 to vector<1x16x16xf32>
    %502 = arith.mulf %501, %500 : vector<1x16x16xf32>
    %503 = arith.addf %497, %502 : vector<1x16x16xf32>
    %c48 = arith.constant 48 : index
    %504 = memref.load %arg7[%c48] : memref<98xf32, #tpu.memory_space<smem>>
    %c0_249 = arith.constant 0 : index
    %c0_250 = arith.constant 0 : index
    %c6_251 = arith.constant 6 : index
    %c6_252 = arith.constant 6 : index
    %505 = vector.load %arg14[%c0_249, %c0_250, %c6_251, %c6_252] : memref<2x1x22x22xf32, #tpu.memory_space<vmem>>, vector<1x1x16x16xf32>
    %506 = vector.shape_cast %505 : vector<1x1x16x16xf32> to vector<1x16x16xf32>
    %507 = vector.broadcast %504 : f32 to vector<1x16x16xf32>
    %508 = arith.mulf %507, %506 : vector<1x16x16xf32>
    %509 = arith.addf %503, %508 : vector<1x16x16xf32>
    %c49 = arith.constant 49 : index
    %510 = memref.load %arg7[%c49] : memref<98xf32, #tpu.memory_space<smem>>
    %c1_253 = arith.constant 1 : index
    %c0_254 = arith.constant 0 : index
    %c0_255 = arith.constant 0 : index
    %c0_256 = arith.constant 0 : index
    %511 = vector.load %arg14[%c1_253, %c0_254, %c0_255, %c0_256] : memref<2x1x22x22xf32, #tpu.memory_space<vmem>>, vector<1x1x16x16xf32>
    %512 = vector.shape_cast %511 : vector<1x1x16x16xf32> to vector<1x16x16xf32>
    %513 = vector.broadcast %510 : f32 to vector<1x16x16xf32>
    %514 = arith.mulf %513, %512 : vector<1x16x16xf32>
    %515 = arith.addf %509, %514 : vector<1x16x16xf32>
    %c50 = arith.constant 50 : index
    %516 = memref.load %arg7[%c50] : memref<98xf32, #tpu.memory_space<smem>>
    %c1_257 = arith.constant 1 : index
    %c0_258 = arith.constant 0 : index
    %c0_259 = arith.constant 0 : index
    %c1_260 = arith.constant 1 : index
    %517 = vector.load %arg14[%c1_257, %c0_258, %c0_259, %c1_260] : memref<2x1x22x22xf32, #tpu.memory_space<vmem>>, vector<1x1x16x16xf32>
    %518 = vector.shape_cast %517 : vector<1x1x16x16xf32> to vector<1x16x16xf32>
    %519 = vector.broadcast %516 : f32 to vector<1x16x16xf32>
    %520 = arith.mulf %519, %518 : vector<1x16x16xf32>
    %521 = arith.addf %515, %520 : vector<1x16x16xf32>
    %c51 = arith.constant 51 : index
    %522 = memref.load %arg7[%c51] : memref<98xf32, #tpu.memory_space<smem>>
    %c1_261 = arith.constant 1 : index
    %c0_262 = arith.constant 0 : index
    %c0_263 = arith.constant 0 : index
    %c2_264 = arith.constant 2 : index
    %523 = vector.load %arg14[%c1_261, %c0_262, %c0_263, %c2_264] : memref<2x1x22x22xf32, #tpu.memory_space<vmem>>, vector<1x1x16x16xf32>
    %524 = vector.shape_cast %523 : vector<1x1x16x16xf32> to vector<1x16x16xf32>
    %525 = vector.broadcast %522 : f32 to vector<1x16x16xf32>
    %526 = arith.mulf %525, %524 : vector<1x16x16xf32>
    %527 = arith.addf %521, %526 : vector<1x16x16xf32>
    %c52 = arith.constant 52 : index
    %528 = memref.load %arg7[%c52] : memref<98xf32, #tpu.memory_space<smem>>
    %c1_265 = arith.constant 1 : index
    %c0_266 = arith.constant 0 : index
    %c0_267 = arith.constant 0 : index
    %c3_268 = arith.constant 3 : index
    %529 = vector.load %arg14[%c1_265, %c0_266, %c0_267, %c3_268] : memref<2x1x22x22xf32, #tpu.memory_space<vmem>>, vector<1x1x16x16xf32>
    %530 = vector.shape_cast %529 : vector<1x1x16x16xf32> to vector<1x16x16xf32>
    %531 = vector.broadcast %528 : f32 to vector<1x16x16xf32>
    %532 = arith.mulf %531, %530 : vector<1x16x16xf32>
    %533 = arith.addf %527, %532 : vector<1x16x16xf32>
    %c53 = arith.constant 53 : index
    %534 = memref.load %arg7[%c53] : memref<98xf32, #tpu.memory_space<smem>>
    %c1_269 = arith.constant 1 : index
    %c0_270 = arith.constant 0 : index
    %c0_271 = arith.constant 0 : index
    %c4_272 = arith.constant 4 : index
    %535 = vector.load %arg14[%c1_269, %c0_270, %c0_271, %c4_272] : memref<2x1x22x22xf32, #tpu.memory_space<vmem>>, vector<1x1x16x16xf32>
    %536 = vector.shape_cast %535 : vector<1x1x16x16xf32> to vector<1x16x16xf32>
    %537 = vector.broadcast %534 : f32 to vector<1x16x16xf32>
    %538 = arith.mulf %537, %536 : vector<1x16x16xf32>
    %539 = arith.addf %533, %538 : vector<1x16x16xf32>
    %c54 = arith.constant 54 : index
    %540 = memref.load %arg7[%c54] : memref<98xf32, #tpu.memory_space<smem>>
    %c1_273 = arith.constant 1 : index
    %c0_274 = arith.constant 0 : index
    %c0_275 = arith.constant 0 : index
    %c5_276 = arith.constant 5 : index
    %541 = vector.load %arg14[%c1_273, %c0_274, %c0_275, %c5_276] : memref<2x1x22x22xf32, #tpu.memory_space<vmem>>, vector<1x1x16x16xf32>
    %542 = vector.shape_cast %541 : vector<1x1x16x16xf32> to vector<1x16x16xf32>
    %543 = vector.broadcast %540 : f32 to vector<1x16x16xf32>
    %544 = arith.mulf %543, %542 : vector<1x16x16xf32>
    %545 = arith.addf %539, %544 : vector<1x16x16xf32>
    %c55 = arith.constant 55 : index
    %546 = memref.load %arg7[%c55] : memref<98xf32, #tpu.memory_space<smem>>
    %c1_277 = arith.constant 1 : index
    %c0_278 = arith.constant 0 : index
    %c0_279 = arith.constant 0 : index
    %c6_280 = arith.constant 6 : index
    %547 = vector.load %arg14[%c1_277, %c0_278, %c0_279, %c6_280] : memref<2x1x22x22xf32, #tpu.memory_space<vmem>>, vector<1x1x16x16xf32>
    %548 = vector.shape_cast %547 : vector<1x1x16x16xf32> to vector<1x16x16xf32>
    %549 = vector.broadcast %546 : f32 to vector<1x16x16xf32>
    %550 = arith.mulf %549, %548 : vector<1x16x16xf32>
    %551 = arith.addf %545, %550 : vector<1x16x16xf32>
    %c56 = arith.constant 56 : index
    %552 = memref.load %arg7[%c56] : memref<98xf32, #tpu.memory_space<smem>>
    %c1_281 = arith.constant 1 : index
    %c0_282 = arith.constant 0 : index
    %c1_283 = arith.constant 1 : index
    %c0_284 = arith.constant 0 : index
    %553 = vector.load %arg14[%c1_281, %c0_282, %c1_283, %c0_284] : memref<2x1x22x22xf32, #tpu.memory_space<vmem>>, vector<1x1x16x16xf32>
    %554 = vector.shape_cast %553 : vector<1x1x16x16xf32> to vector<1x16x16xf32>
    %555 = vector.broadcast %552 : f32 to vector<1x16x16xf32>
    %556 = arith.mulf %555, %554 : vector<1x16x16xf32>
    %557 = arith.addf %551, %556 : vector<1x16x16xf32>
    %c57 = arith.constant 57 : index
    %558 = memref.load %arg7[%c57] : memref<98xf32, #tpu.memory_space<smem>>
    %c1_285 = arith.constant 1 : index
    %c0_286 = arith.constant 0 : index
    %c1_287 = arith.constant 1 : index
    %c1_288 = arith.constant 1 : index
    %559 = vector.load %arg14[%c1_285, %c0_286, %c1_287, %c1_288] : memref<2x1x22x22xf32, #tpu.memory_space<vmem>>, vector<1x1x16x16xf32>
    %560 = vector.shape_cast %559 : vector<1x1x16x16xf32> to vector<1x16x16xf32>
    %561 = vector.broadcast %558 : f32 to vector<1x16x16xf32>
    %562 = arith.mulf %561, %560 : vector<1x16x16xf32>
    %563 = arith.addf %557, %562 : vector<1x16x16xf32>
    %c58 = arith.constant 58 : index
    %564 = memref.load %arg7[%c58] : memref<98xf32, #tpu.memory_space<smem>>
    %c1_289 = arith.constant 1 : index
    %c0_290 = arith.constant 0 : index
    %c1_291 = arith.constant 1 : index
    %c2_292 = arith.constant 2 : index
    %565 = vector.load %arg14[%c1_289, %c0_290, %c1_291, %c2_292] : memref<2x1x22x22xf32, #tpu.memory_space<vmem>>, vector<1x1x16x16xf32>
    %566 = vector.shape_cast %565 : vector<1x1x16x16xf32> to vector<1x16x16xf32>
    %567 = vector.broadcast %564 : f32 to vector<1x16x16xf32>
    %568 = arith.mulf %567, %566 : vector<1x16x16xf32>
    %569 = arith.addf %563, %568 : vector<1x16x16xf32>
    %c59 = arith.constant 59 : index
    %570 = memref.load %arg7[%c59] : memref<98xf32, #tpu.memory_space<smem>>
    %c1_293 = arith.constant 1 : index
    %c0_294 = arith.constant 0 : index
    %c1_295 = arith.constant 1 : index
    %c3_296 = arith.constant 3 : index
    %571 = vector.load %arg14[%c1_293, %c0_294, %c1_295, %c3_296] : memref<2x1x22x22xf32, #tpu.memory_space<vmem>>, vector<1x1x16x16xf32>
    %572 = vector.shape_cast %571 : vector<1x1x16x16xf32> to vector<1x16x16xf32>
    %573 = vector.broadcast %570 : f32 to vector<1x16x16xf32>
    %574 = arith.mulf %573, %572 : vector<1x16x16xf32>
    %575 = arith.addf %569, %574 : vector<1x16x16xf32>
    %c60 = arith.constant 60 : index
    %576 = memref.load %arg7[%c60] : memref<98xf32, #tpu.memory_space<smem>>
    %c1_297 = arith.constant 1 : index
    %c0_298 = arith.constant 0 : index
    %c1_299 = arith.constant 1 : index
    %c4_300 = arith.constant 4 : index
    %577 = vector.load %arg14[%c1_297, %c0_298, %c1_299, %c4_300] : memref<2x1x22x22xf32, #tpu.memory_space<vmem>>, vector<1x1x16x16xf32>
    %578 = vector.shape_cast %577 : vector<1x1x16x16xf32> to vector<1x16x16xf32>
    %579 = vector.broadcast %576 : f32 to vector<1x16x16xf32>
    %580 = arith.mulf %579, %578 : vector<1x16x16xf32>
    %581 = arith.addf %575, %580 : vector<1x16x16xf32>
    %c61 = arith.constant 61 : index
    %582 = memref.load %arg7[%c61] : memref<98xf32, #tpu.memory_space<smem>>
    %c1_301 = arith.constant 1 : index
    %c0_302 = arith.constant 0 : index
    %c1_303 = arith.constant 1 : index
    %c5_304 = arith.constant 5 : index
    %583 = vector.load %arg14[%c1_301, %c0_302, %c1_303, %c5_304] : memref<2x1x22x22xf32, #tpu.memory_space<vmem>>, vector<1x1x16x16xf32>
    %584 = vector.shape_cast %583 : vector<1x1x16x16xf32> to vector<1x16x16xf32>
    %585 = vector.broadcast %582 : f32 to vector<1x16x16xf32>
    %586 = arith.mulf %585, %584 : vector<1x16x16xf32>
    %587 = arith.addf %581, %586 : vector<1x16x16xf32>
    %c62 = arith.constant 62 : index
    %588 = memref.load %arg7[%c62] : memref<98xf32, #tpu.memory_space<smem>>
    %c1_305 = arith.constant 1 : index
    %c0_306 = arith.constant 0 : index
    %c1_307 = arith.constant 1 : index
    %c6_308 = arith.constant 6 : index
    %589 = vector.load %arg14[%c1_305, %c0_306, %c1_307, %c6_308] : memref<2x1x22x22xf32, #tpu.memory_space<vmem>>, vector<1x1x16x16xf32>
    %590 = vector.shape_cast %589 : vector<1x1x16x16xf32> to vector<1x16x16xf32>
    %591 = vector.broadcast %588 : f32 to vector<1x16x16xf32>
    %592 = arith.mulf %591, %590 : vector<1x16x16xf32>
    %593 = arith.addf %587, %592 : vector<1x16x16xf32>
    %c63 = arith.constant 63 : index
    %594 = memref.load %arg7[%c63] : memref<98xf32, #tpu.memory_space<smem>>
    %c1_309 = arith.constant 1 : index
    %c0_310 = arith.constant 0 : index
    %c2_311 = arith.constant 2 : index
    %c0_312 = arith.constant 0 : index
    %595 = vector.load %arg14[%c1_309, %c0_310, %c2_311, %c0_312] : memref<2x1x22x22xf32, #tpu.memory_space<vmem>>, vector<1x1x16x16xf32>
    %596 = vector.shape_cast %595 : vector<1x1x16x16xf32> to vector<1x16x16xf32>
    %597 = vector.broadcast %594 : f32 to vector<1x16x16xf32>
    %598 = arith.mulf %597, %596 : vector<1x16x16xf32>
    %599 = arith.addf %593, %598 : vector<1x16x16xf32>
    %c64 = arith.constant 64 : index
    %600 = memref.load %arg7[%c64] : memref<98xf32, #tpu.memory_space<smem>>
    %c1_313 = arith.constant 1 : index
    %c0_314 = arith.constant 0 : index
    %c2_315 = arith.constant 2 : index
    %c1_316 = arith.constant 1 : index
    %601 = vector.load %arg14[%c1_313, %c0_314, %c2_315, %c1_316] : memref<2x1x22x22xf32, #tpu.memory_space<vmem>>, vector<1x1x16x16xf32>
    %602 = vector.shape_cast %601 : vector<1x1x16x16xf32> to vector<1x16x16xf32>
    %603 = vector.broadcast %600 : f32 to vector<1x16x16xf32>
    %604 = arith.mulf %603, %602 : vector<1x16x16xf32>
    %605 = arith.addf %599, %604 : vector<1x16x16xf32>
    %c65 = arith.constant 65 : index
    %606 = memref.load %arg7[%c65] : memref<98xf32, #tpu.memory_space<smem>>
    %c1_317 = arith.constant 1 : index
    %c0_318 = arith.constant 0 : index
    %c2_319 = arith.constant 2 : index
    %c2_320 = arith.constant 2 : index
    %607 = vector.load %arg14[%c1_317, %c0_318, %c2_319, %c2_320] : memref<2x1x22x22xf32, #tpu.memory_space<vmem>>, vector<1x1x16x16xf32>
    %608 = vector.shape_cast %607 : vector<1x1x16x16xf32> to vector<1x16x16xf32>
    %609 = vector.broadcast %606 : f32 to vector<1x16x16xf32>
    %610 = arith.mulf %609, %608 : vector<1x16x16xf32>
    %611 = arith.addf %605, %610 : vector<1x16x16xf32>
    %c66 = arith.constant 66 : index
    %612 = memref.load %arg7[%c66] : memref<98xf32, #tpu.memory_space<smem>>
    %c1_321 = arith.constant 1 : index
    %c0_322 = arith.constant 0 : index
    %c2_323 = arith.constant 2 : index
    %c3_324 = arith.constant 3 : index
    %613 = vector.load %arg14[%c1_321, %c0_322, %c2_323, %c3_324] : memref<2x1x22x22xf32, #tpu.memory_space<vmem>>, vector<1x1x16x16xf32>
    %614 = vector.shape_cast %613 : vector<1x1x16x16xf32> to vector<1x16x16xf32>
    %615 = vector.broadcast %612 : f32 to vector<1x16x16xf32>
    %616 = arith.mulf %615, %614 : vector<1x16x16xf32>
    %617 = arith.addf %611, %616 : vector<1x16x16xf32>
    %c67 = arith.constant 67 : index
    %618 = memref.load %arg7[%c67] : memref<98xf32, #tpu.memory_space<smem>>
    %c1_325 = arith.constant 1 : index
    %c0_326 = arith.constant 0 : index
    %c2_327 = arith.constant 2 : index
    %c4_328 = arith.constant 4 : index
    %619 = vector.load %arg14[%c1_325, %c0_326, %c2_327, %c4_328] : memref<2x1x22x22xf32, #tpu.memory_space<vmem>>, vector<1x1x16x16xf32>
    %620 = vector.shape_cast %619 : vector<1x1x16x16xf32> to vector<1x16x16xf32>
    %621 = vector.broadcast %618 : f32 to vector<1x16x16xf32>
    %622 = arith.mulf %621, %620 : vector<1x16x16xf32>
    %623 = arith.addf %617, %622 : vector<1x16x16xf32>
    %c68 = arith.constant 68 : index
    %624 = memref.load %arg7[%c68] : memref<98xf32, #tpu.memory_space<smem>>
    %c1_329 = arith.constant 1 : index
    %c0_330 = arith.constant 0 : index
    %c2_331 = arith.constant 2 : index
    %c5_332 = arith.constant 5 : index
    %625 = vector.load %arg14[%c1_329, %c0_330, %c2_331, %c5_332] : memref<2x1x22x22xf32, #tpu.memory_space<vmem>>, vector<1x1x16x16xf32>
    %626 = vector.shape_cast %625 : vector<1x1x16x16xf32> to vector<1x16x16xf32>
    %627 = vector.broadcast %624 : f32 to vector<1x16x16xf32>
    %628 = arith.mulf %627, %626 : vector<1x16x16xf32>
    %629 = arith.addf %623, %628 : vector<1x16x16xf32>
    %c69 = arith.constant 69 : index
    %630 = memref.load %arg7[%c69] : memref<98xf32, #tpu.memory_space<smem>>
    %c1_333 = arith.constant 1 : index
    %c0_334 = arith.constant 0 : index
    %c2_335 = arith.constant 2 : index
    %c6_336 = arith.constant 6 : index
    %631 = vector.load %arg14[%c1_333, %c0_334, %c2_335, %c6_336] : memref<2x1x22x22xf32, #tpu.memory_space<vmem>>, vector<1x1x16x16xf32>
    %632 = vector.shape_cast %631 : vector<1x1x16x16xf32> to vector<1x16x16xf32>
    %633 = vector.broadcast %630 : f32 to vector<1x16x16xf32>
    %634 = arith.mulf %633, %632 : vector<1x16x16xf32>
    %635 = arith.addf %629, %634 : vector<1x16x16xf32>
    %c70 = arith.constant 70 : index
    %636 = memref.load %arg7[%c70] : memref<98xf32, #tpu.memory_space<smem>>
    %c1_337 = arith.constant 1 : index
    %c0_338 = arith.constant 0 : index
    %c3_339 = arith.constant 3 : index
    %c0_340 = arith.constant 0 : index
    %637 = vector.load %arg14[%c1_337, %c0_338, %c3_339, %c0_340] : memref<2x1x22x22xf32, #tpu.memory_space<vmem>>, vector<1x1x16x16xf32>
    %638 = vector.shape_cast %637 : vector<1x1x16x16xf32> to vector<1x16x16xf32>
    %639 = vector.broadcast %636 : f32 to vector<1x16x16xf32>
    %640 = arith.mulf %639, %638 : vector<1x16x16xf32>
    %641 = arith.addf %635, %640 : vector<1x16x16xf32>
    %c71 = arith.constant 71 : index
    %642 = memref.load %arg7[%c71] : memref<98xf32, #tpu.memory_space<smem>>
    %c1_341 = arith.constant 1 : index
    %c0_342 = arith.constant 0 : index
    %c3_343 = arith.constant 3 : index
    %c1_344 = arith.constant 1 : index
    %643 = vector.load %arg14[%c1_341, %c0_342, %c3_343, %c1_344] : memref<2x1x22x22xf32, #tpu.memory_space<vmem>>, vector<1x1x16x16xf32>
    %644 = vector.shape_cast %643 : vector<1x1x16x16xf32> to vector<1x16x16xf32>
    %645 = vector.broadcast %642 : f32 to vector<1x16x16xf32>
    %646 = arith.mulf %645, %644 : vector<1x16x16xf32>
    %647 = arith.addf %641, %646 : vector<1x16x16xf32>
    %c72 = arith.constant 72 : index
    %648 = memref.load %arg7[%c72] : memref<98xf32, #tpu.memory_space<smem>>
    %c1_345 = arith.constant 1 : index
    %c0_346 = arith.constant 0 : index
    %c3_347 = arith.constant 3 : index
    %c2_348 = arith.constant 2 : index
    %649 = vector.load %arg14[%c1_345, %c0_346, %c3_347, %c2_348] : memref<2x1x22x22xf32, #tpu.memory_space<vmem>>, vector<1x1x16x16xf32>
    %650 = vector.shape_cast %649 : vector<1x1x16x16xf32> to vector<1x16x16xf32>
    %651 = vector.broadcast %648 : f32 to vector<1x16x16xf32>
    %652 = arith.mulf %651, %650 : vector<1x16x16xf32>
    %653 = arith.addf %647, %652 : vector<1x16x16xf32>
    %c73 = arith.constant 73 : index
    %654 = memref.load %arg7[%c73] : memref<98xf32, #tpu.memory_space<smem>>
    %c1_349 = arith.constant 1 : index
    %c0_350 = arith.constant 0 : index
    %c3_351 = arith.constant 3 : index
    %c3_352 = arith.constant 3 : index
    %655 = vector.load %arg14[%c1_349, %c0_350, %c3_351, %c3_352] : memref<2x1x22x22xf32, #tpu.memory_space<vmem>>, vector<1x1x16x16xf32>
    %656 = vector.shape_cast %655 : vector<1x1x16x16xf32> to vector<1x16x16xf32>
    %657 = vector.broadcast %654 : f32 to vector<1x16x16xf32>
    %658 = arith.mulf %657, %656 : vector<1x16x16xf32>
    %659 = arith.addf %653, %658 : vector<1x16x16xf32>
    %c74 = arith.constant 74 : index
    %660 = memref.load %arg7[%c74] : memref<98xf32, #tpu.memory_space<smem>>
    %c1_353 = arith.constant 1 : index
    %c0_354 = arith.constant 0 : index
    %c3_355 = arith.constant 3 : index
    %c4_356 = arith.constant 4 : index
    %661 = vector.load %arg14[%c1_353, %c0_354, %c3_355, %c4_356] : memref<2x1x22x22xf32, #tpu.memory_space<vmem>>, vector<1x1x16x16xf32>
    %662 = vector.shape_cast %661 : vector<1x1x16x16xf32> to vector<1x16x16xf32>
    %663 = vector.broadcast %660 : f32 to vector<1x16x16xf32>
    %664 = arith.mulf %663, %662 : vector<1x16x16xf32>
    %665 = arith.addf %659, %664 : vector<1x16x16xf32>
    %c75 = arith.constant 75 : index
    %666 = memref.load %arg7[%c75] : memref<98xf32, #tpu.memory_space<smem>>
    %c1_357 = arith.constant 1 : index
    %c0_358 = arith.constant 0 : index
    %c3_359 = arith.constant 3 : index
    %c5_360 = arith.constant 5 : index
    %667 = vector.load %arg14[%c1_357, %c0_358, %c3_359, %c5_360] : memref<2x1x22x22xf32, #tpu.memory_space<vmem>>, vector<1x1x16x16xf32>
    %668 = vector.shape_cast %667 : vector<1x1x16x16xf32> to vector<1x16x16xf32>
    %669 = vector.broadcast %666 : f32 to vector<1x16x16xf32>
    %670 = arith.mulf %669, %668 : vector<1x16x16xf32>
    %671 = arith.addf %665, %670 : vector<1x16x16xf32>
    %c76 = arith.constant 76 : index
    %672 = memref.load %arg7[%c76] : memref<98xf32, #tpu.memory_space<smem>>
    %c1_361 = arith.constant 1 : index
    %c0_362 = arith.constant 0 : index
    %c3_363 = arith.constant 3 : index
    %c6_364 = arith.constant 6 : index
    %673 = vector.load %arg14[%c1_361, %c0_362, %c3_363, %c6_364] : memref<2x1x22x22xf32, #tpu.memory_space<vmem>>, vector<1x1x16x16xf32>
    %674 = vector.shape_cast %673 : vector<1x1x16x16xf32> to vector<1x16x16xf32>
    %675 = vector.broadcast %672 : f32 to vector<1x16x16xf32>
    %676 = arith.mulf %675, %674 : vector<1x16x16xf32>
    %677 = arith.addf %671, %676 : vector<1x16x16xf32>
    %c77 = arith.constant 77 : index
    %678 = memref.load %arg7[%c77] : memref<98xf32, #tpu.memory_space<smem>>
    %c1_365 = arith.constant 1 : index
    %c0_366 = arith.constant 0 : index
    %c4_367 = arith.constant 4 : index
    %c0_368 = arith.constant 0 : index
    %679 = vector.load %arg14[%c1_365, %c0_366, %c4_367, %c0_368] : memref<2x1x22x22xf32, #tpu.memory_space<vmem>>, vector<1x1x16x16xf32>
    %680 = vector.shape_cast %679 : vector<1x1x16x16xf32> to vector<1x16x16xf32>
    %681 = vector.broadcast %678 : f32 to vector<1x16x16xf32>
    %682 = arith.mulf %681, %680 : vector<1x16x16xf32>
    %683 = arith.addf %677, %682 : vector<1x16x16xf32>
    %c78 = arith.constant 78 : index
    %684 = memref.load %arg7[%c78] : memref<98xf32, #tpu.memory_space<smem>>
    %c1_369 = arith.constant 1 : index
    %c0_370 = arith.constant 0 : index
    %c4_371 = arith.constant 4 : index
    %c1_372 = arith.constant 1 : index
    %685 = vector.load %arg14[%c1_369, %c0_370, %c4_371, %c1_372] : memref<2x1x22x22xf32, #tpu.memory_space<vmem>>, vector<1x1x16x16xf32>
    %686 = vector.shape_cast %685 : vector<1x1x16x16xf32> to vector<1x16x16xf32>
    %687 = vector.broadcast %684 : f32 to vector<1x16x16xf32>
    %688 = arith.mulf %687, %686 : vector<1x16x16xf32>
    %689 = arith.addf %683, %688 : vector<1x16x16xf32>
    %c79 = arith.constant 79 : index
    %690 = memref.load %arg7[%c79] : memref<98xf32, #tpu.memory_space<smem>>
    %c1_373 = arith.constant 1 : index
    %c0_374 = arith.constant 0 : index
    %c4_375 = arith.constant 4 : index
    %c2_376 = arith.constant 2 : index
    %691 = vector.load %arg14[%c1_373, %c0_374, %c4_375, %c2_376] : memref<2x1x22x22xf32, #tpu.memory_space<vmem>>, vector<1x1x16x16xf32>
    %692 = vector.shape_cast %691 : vector<1x1x16x16xf32> to vector<1x16x16xf32>
    %693 = vector.broadcast %690 : f32 to vector<1x16x16xf32>
    %694 = arith.mulf %693, %692 : vector<1x16x16xf32>
    %695 = arith.addf %689, %694 : vector<1x16x16xf32>
    %c80 = arith.constant 80 : index
    %696 = memref.load %arg7[%c80] : memref<98xf32, #tpu.memory_space<smem>>
    %c1_377 = arith.constant 1 : index
    %c0_378 = arith.constant 0 : index
    %c4_379 = arith.constant 4 : index
    %c3_380 = arith.constant 3 : index
    %697 = vector.load %arg14[%c1_377, %c0_378, %c4_379, %c3_380] : memref<2x1x22x22xf32, #tpu.memory_space<vmem>>, vector<1x1x16x16xf32>
    %698 = vector.shape_cast %697 : vector<1x1x16x16xf32> to vector<1x16x16xf32>
    %699 = vector.broadcast %696 : f32 to vector<1x16x16xf32>
    %700 = arith.mulf %699, %698 : vector<1x16x16xf32>
    %701 = arith.addf %695, %700 : vector<1x16x16xf32>
    %c81 = arith.constant 81 : index
    %702 = memref.load %arg7[%c81] : memref<98xf32, #tpu.memory_space<smem>>
    %c1_381 = arith.constant 1 : index
    %c0_382 = arith.constant 0 : index
    %c4_383 = arith.constant 4 : index
    %c4_384 = arith.constant 4 : index
    %703 = vector.load %arg14[%c1_381, %c0_382, %c4_383, %c4_384] : memref<2x1x22x22xf32, #tpu.memory_space<vmem>>, vector<1x1x16x16xf32>
    %704 = vector.shape_cast %703 : vector<1x1x16x16xf32> to vector<1x16x16xf32>
    %705 = vector.broadcast %702 : f32 to vector<1x16x16xf32>
    %706 = arith.mulf %705, %704 : vector<1x16x16xf32>
    %707 = arith.addf %701, %706 : vector<1x16x16xf32>
    %c82 = arith.constant 82 : index
    %708 = memref.load %arg7[%c82] : memref<98xf32, #tpu.memory_space<smem>>
    %c1_385 = arith.constant 1 : index
    %c0_386 = arith.constant 0 : index
    %c4_387 = arith.constant 4 : index
    %c5_388 = arith.constant 5 : index
    %709 = vector.load %arg14[%c1_385, %c0_386, %c4_387, %c5_388] : memref<2x1x22x22xf32, #tpu.memory_space<vmem>>, vector<1x1x16x16xf32>
    %710 = vector.shape_cast %709 : vector<1x1x16x16xf32> to vector<1x16x16xf32>
    %711 = vector.broadcast %708 : f32 to vector<1x16x16xf32>
    %712 = arith.mulf %711, %710 : vector<1x16x16xf32>
    %713 = arith.addf %707, %712 : vector<1x16x16xf32>
    %c83 = arith.constant 83 : index
    %714 = memref.load %arg7[%c83] : memref<98xf32, #tpu.memory_space<smem>>
    %c1_389 = arith.constant 1 : index
    %c0_390 = arith.constant 0 : index
    %c4_391 = arith.constant 4 : index
    %c6_392 = arith.constant 6 : index
    %715 = vector.load %arg14[%c1_389, %c0_390, %c4_391, %c6_392] : memref<2x1x22x22xf32, #tpu.memory_space<vmem>>, vector<1x1x16x16xf32>
    %716 = vector.shape_cast %715 : vector<1x1x16x16xf32> to vector<1x16x16xf32>
    %717 = vector.broadcast %714 : f32 to vector<1x16x16xf32>
    %718 = arith.mulf %717, %716 : vector<1x16x16xf32>
    %719 = arith.addf %713, %718 : vector<1x16x16xf32>
    %c84 = arith.constant 84 : index
    %720 = memref.load %arg7[%c84] : memref<98xf32, #tpu.memory_space<smem>>
    %c1_393 = arith.constant 1 : index
    %c0_394 = arith.constant 0 : index
    %c5_395 = arith.constant 5 : index
    %c0_396 = arith.constant 0 : index
    %721 = vector.load %arg14[%c1_393, %c0_394, %c5_395, %c0_396] : memref<2x1x22x22xf32, #tpu.memory_space<vmem>>, vector<1x1x16x16xf32>
    %722 = vector.shape_cast %721 : vector<1x1x16x16xf32> to vector<1x16x16xf32>
    %723 = vector.broadcast %720 : f32 to vector<1x16x16xf32>
    %724 = arith.mulf %723, %722 : vector<1x16x16xf32>
    %725 = arith.addf %719, %724 : vector<1x16x16xf32>
    %c85 = arith.constant 85 : index
    %726 = memref.load %arg7[%c85] : memref<98xf32, #tpu.memory_space<smem>>
    %c1_397 = arith.constant 1 : index
    %c0_398 = arith.constant 0 : index
    %c5_399 = arith.constant 5 : index
    %c1_400 = arith.constant 1 : index
    %727 = vector.load %arg14[%c1_397, %c0_398, %c5_399, %c1_400] : memref<2x1x22x22xf32, #tpu.memory_space<vmem>>, vector<1x1x16x16xf32>
    %728 = vector.shape_cast %727 : vector<1x1x16x16xf32> to vector<1x16x16xf32>
    %729 = vector.broadcast %726 : f32 to vector<1x16x16xf32>
    %730 = arith.mulf %729, %728 : vector<1x16x16xf32>
    %731 = arith.addf %725, %730 : vector<1x16x16xf32>
    %c86 = arith.constant 86 : index
    %732 = memref.load %arg7[%c86] : memref<98xf32, #tpu.memory_space<smem>>
    %c1_401 = arith.constant 1 : index
    %c0_402 = arith.constant 0 : index
    %c5_403 = arith.constant 5 : index
    %c2_404 = arith.constant 2 : index
    %733 = vector.load %arg14[%c1_401, %c0_402, %c5_403, %c2_404] : memref<2x1x22x22xf32, #tpu.memory_space<vmem>>, vector<1x1x16x16xf32>
    %734 = vector.shape_cast %733 : vector<1x1x16x16xf32> to vector<1x16x16xf32>
    %735 = vector.broadcast %732 : f32 to vector<1x16x16xf32>
    %736 = arith.mulf %735, %734 : vector<1x16x16xf32>
    %737 = arith.addf %731, %736 : vector<1x16x16xf32>
    %c87 = arith.constant 87 : index
    %738 = memref.load %arg7[%c87] : memref<98xf32, #tpu.memory_space<smem>>
    %c1_405 = arith.constant 1 : index
    %c0_406 = arith.constant 0 : index
    %c5_407 = arith.constant 5 : index
    %c3_408 = arith.constant 3 : index
    %739 = vector.load %arg14[%c1_405, %c0_406, %c5_407, %c3_408] : memref<2x1x22x22xf32, #tpu.memory_space<vmem>>, vector<1x1x16x16xf32>
    %740 = vector.shape_cast %739 : vector<1x1x16x16xf32> to vector<1x16x16xf32>
    %741 = vector.broadcast %738 : f32 to vector<1x16x16xf32>
    %742 = arith.mulf %741, %740 : vector<1x16x16xf32>
    %743 = arith.addf %737, %742 : vector<1x16x16xf32>
    %c88 = arith.constant 88 : index
    %744 = memref.load %arg7[%c88] : memref<98xf32, #tpu.memory_space<smem>>
    %c1_409 = arith.constant 1 : index
    %c0_410 = arith.constant 0 : index
    %c5_411 = arith.constant 5 : index
    %c4_412 = arith.constant 4 : index
    %745 = vector.load %arg14[%c1_409, %c0_410, %c5_411, %c4_412] : memref<2x1x22x22xf32, #tpu.memory_space<vmem>>, vector<1x1x16x16xf32>
    %746 = vector.shape_cast %745 : vector<1x1x16x16xf32> to vector<1x16x16xf32>
    %747 = vector.broadcast %744 : f32 to vector<1x16x16xf32>
    %748 = arith.mulf %747, %746 : vector<1x16x16xf32>
    %749 = arith.addf %743, %748 : vector<1x16x16xf32>
    %c89 = arith.constant 89 : index
    %750 = memref.load %arg7[%c89] : memref<98xf32, #tpu.memory_space<smem>>
    %c1_413 = arith.constant 1 : index
    %c0_414 = arith.constant 0 : index
    %c5_415 = arith.constant 5 : index
    %c5_416 = arith.constant 5 : index
    %751 = vector.load %arg14[%c1_413, %c0_414, %c5_415, %c5_416] : memref<2x1x22x22xf32, #tpu.memory_space<vmem>>, vector<1x1x16x16xf32>
    %752 = vector.shape_cast %751 : vector<1x1x16x16xf32> to vector<1x16x16xf32>
    %753 = vector.broadcast %750 : f32 to vector<1x16x16xf32>
    %754 = arith.mulf %753, %752 : vector<1x16x16xf32>
    %755 = arith.addf %749, %754 : vector<1x16x16xf32>
    %c90 = arith.constant 90 : index
    %756 = memref.load %arg7[%c90] : memref<98xf32, #tpu.memory_space<smem>>
    %c1_417 = arith.constant 1 : index
    %c0_418 = arith.constant 0 : index
    %c5_419 = arith.constant 5 : index
    %c6_420 = arith.constant 6 : index
    %757 = vector.load %arg14[%c1_417, %c0_418, %c5_419, %c6_420] : memref<2x1x22x22xf32, #tpu.memory_space<vmem>>, vector<1x1x16x16xf32>
    %758 = vector.shape_cast %757 : vector<1x1x16x16xf32> to vector<1x16x16xf32>
    %759 = vector.broadcast %756 : f32 to vector<1x16x16xf32>
    %760 = arith.mulf %759, %758 : vector<1x16x16xf32>
    %761 = arith.addf %755, %760 : vector<1x16x16xf32>
    %c91 = arith.constant 91 : index
    %762 = memref.load %arg7[%c91] : memref<98xf32, #tpu.memory_space<smem>>
    %c1_421 = arith.constant 1 : index
    %c0_422 = arith.constant 0 : index
    %c6_423 = arith.constant 6 : index
    %c0_424 = arith.constant 0 : index
    %763 = vector.load %arg14[%c1_421, %c0_422, %c6_423, %c0_424] : memref<2x1x22x22xf32, #tpu.memory_space<vmem>>, vector<1x1x16x16xf32>
    %764 = vector.shape_cast %763 : vector<1x1x16x16xf32> to vector<1x16x16xf32>
    %765 = vector.broadcast %762 : f32 to vector<1x16x16xf32>
    %766 = arith.mulf %765, %764 : vector<1x16x16xf32>
    %767 = arith.addf %761, %766 : vector<1x16x16xf32>
    %c92 = arith.constant 92 : index
    %768 = memref.load %arg7[%c92] : memref<98xf32, #tpu.memory_space<smem>>
    %c1_425 = arith.constant 1 : index
    %c0_426 = arith.constant 0 : index
    %c6_427 = arith.constant 6 : index
    %c1_428 = arith.constant 1 : index
    %769 = vector.load %arg14[%c1_425, %c0_426, %c6_427, %c1_428] : memref<2x1x22x22xf32, #tpu.memory_space<vmem>>, vector<1x1x16x16xf32>
    %770 = vector.shape_cast %769 : vector<1x1x16x16xf32> to vector<1x16x16xf32>
    %771 = vector.broadcast %768 : f32 to vector<1x16x16xf32>
    %772 = arith.mulf %771, %770 : vector<1x16x16xf32>
    %773 = arith.addf %767, %772 : vector<1x16x16xf32>
    %c93 = arith.constant 93 : index
    %774 = memref.load %arg7[%c93] : memref<98xf32, #tpu.memory_space<smem>>
    %c1_429 = arith.constant 1 : index
    %c0_430 = arith.constant 0 : index
    %c6_431 = arith.constant 6 : index
    %c2_432 = arith.constant 2 : index
    %775 = vector.load %arg14[%c1_429, %c0_430, %c6_431, %c2_432] : memref<2x1x22x22xf32, #tpu.memory_space<vmem>>, vector<1x1x16x16xf32>
    %776 = vector.shape_cast %775 : vector<1x1x16x16xf32> to vector<1x16x16xf32>
    %777 = vector.broadcast %774 : f32 to vector<1x16x16xf32>
    %778 = arith.mulf %777, %776 : vector<1x16x16xf32>
    %779 = arith.addf %773, %778 : vector<1x16x16xf32>
    %c94 = arith.constant 94 : index
    %780 = memref.load %arg7[%c94] : memref<98xf32, #tpu.memory_space<smem>>
    %c1_433 = arith.constant 1 : index
    %c0_434 = arith.constant 0 : index
    %c6_435 = arith.constant 6 : index
    %c3_436 = arith.constant 3 : index
    %781 = vector.load %arg14[%c1_433, %c0_434, %c6_435, %c3_436] : memref<2x1x22x22xf32, #tpu.memory_space<vmem>>, vector<1x1x16x16xf32>
    %782 = vector.shape_cast %781 : vector<1x1x16x16xf32> to vector<1x16x16xf32>
    %783 = vector.broadcast %780 : f32 to vector<1x16x16xf32>
    %784 = arith.mulf %783, %782 : vector<1x16x16xf32>
    %785 = arith.addf %779, %784 : vector<1x16x16xf32>
    %c95 = arith.constant 95 : index
    %786 = memref.load %arg7[%c95] : memref<98xf32, #tpu.memory_space<smem>>
    %c1_437 = arith.constant 1 : index
    %c0_438 = arith.constant 0 : index
    %c6_439 = arith.constant 6 : index
    %c4_440 = arith.constant 4 : index
    %787 = vector.load %arg14[%c1_437, %c0_438, %c6_439, %c4_440] : memref<2x1x22x22xf32, #tpu.memory_space<vmem>>, vector<1x1x16x16xf32>
    %788 = vector.shape_cast %787 : vector<1x1x16x16xf32> to vector<1x16x16xf32>
    %789 = vector.broadcast %786 : f32 to vector<1x16x16xf32>
    %790 = arith.mulf %789, %788 : vector<1x16x16xf32>
    %791 = arith.addf %785, %790 : vector<1x16x16xf32>
    %c96 = arith.constant 96 : index
    %792 = memref.load %arg7[%c96] : memref<98xf32, #tpu.memory_space<smem>>
    %c1_441 = arith.constant 1 : index
    %c0_442 = arith.constant 0 : index
    %c6_443 = arith.constant 6 : index
    %c5_444 = arith.constant 5 : index
    %793 = vector.load %arg14[%c1_441, %c0_442, %c6_443, %c5_444] : memref<2x1x22x22xf32, #tpu.memory_space<vmem>>, vector<1x1x16x16xf32>
    %794 = vector.shape_cast %793 : vector<1x1x16x16xf32> to vector<1x16x16xf32>
    %795 = vector.broadcast %792 : f32 to vector<1x16x16xf32>
    %796 = arith.mulf %795, %794 : vector<1x16x16xf32>
    %797 = arith.addf %791, %796 : vector<1x16x16xf32>
    %c97 = arith.constant 97 : index
    %798 = memref.load %arg7[%c97] : memref<98xf32, #tpu.memory_space<smem>>
    %c1_445 = arith.constant 1 : index
    %c0_446 = arith.constant 0 : index
    %c6_447 = arith.constant 6 : index
    %c6_448 = arith.constant 6 : index
    %799 = vector.load %arg14[%c1_445, %c0_446, %c6_447, %c6_448] : memref<2x1x22x22xf32, #tpu.memory_space<vmem>>, vector<1x1x16x16xf32>
    %800 = vector.shape_cast %799 : vector<1x1x16x16xf32> to vector<1x16x16xf32>
    %801 = vector.broadcast %798 : f32 to vector<1x16x16xf32>
    %802 = arith.mulf %801, %800 : vector<1x16x16xf32>
    %803 = arith.addf %797, %802 : vector<1x16x16xf32>
    %c0_449 = arith.constant 0 : index
    %c0_450 = arith.constant 0 : index
    %c0_451 = arith.constant 0 : index
    %804 = vector.load %arg13[%c0_449, %c0_450, %c0_451] : memref<1x16x16xf32, #tpu.memory_space<vmem>>, vector<1x16x16xf32>
    %805 = arith.addf %804, %803 : vector<1x16x16xf32>
    %cst_452 = arith.constant 1.000000e+00 : f32
    %806 = vector.broadcast %cst_452 : f32 to vector<1x16x16xf32>
    %807 = arith.cmpf oge, %805, %806 : vector<1x16x16xf32>
    %808 = arith.extui %807 : vector<1x16x16xi1> to vector<1x16x16xi32>
    %809 = arith.sitofp %808 : vector<1x16x16xi32> to vector<1x16x16xf32>
    %cst_453 = arith.constant 1.000000e+00 : f32
    %810 = vector.broadcast %cst_453 : f32 to vector<1x16x16xf32>
    %811 = arith.subf %810, %809 : vector<1x16x16xf32>
    %812 = arith.mulf %805, %811 : vector<1x16x16xf32>
    %c0_454 = arith.constant 0 : index
    %c0_455 = arith.constant 0 : index
    %c0_456 = arith.constant 0 : index
    %813 = vector.load %arg13[%c0_454, %c0_455, %c0_456] : memref<1x16x16xf32, #tpu.memory_space<vmem>>, vector<1x16x16xf32>
    tpu.vector_store %arg13[%c0_454, %c0_455, %c0_456], %812 {strides = array<i32>} : memref<1x16x16xf32, #tpu.memory_space<vmem>>, vector<1x16x16xf32>,
    %814 = vector.shape_cast %809 : vector<1x16x16xf32> to vector<1x1x16x16xf32>
    %815 = vector.broadcast %814 : vector<1x1x16x16xf32> to vector<1x8x16x16xf32>
    %816 = arith.mulf %815, %157 : vector<1x8x16x16xf32>
    %c0_457 = arith.constant 0 : index
    %c0_458 = arith.constant 0 : index
    %c0_459 = arith.constant 0 : index
    %c0_460 = arith.constant 0 : index
    %c0_461 = arith.constant 0 : index
    %817 = vector.load %arg9[%c0_457, %c0_458, %c0_459, %c0_460, %c0_461] : memref<1x1x8x16x16xf32, #tpu.memory_space<vmem>>, vector<1x1x8x16x16xf32>
    %818 = vector.shape_cast %817 : vector<1x1x8x16x16xf32> to vector<1x8x16x16xf32>
    %819 = vector.shape_cast %816 : vector<1x8x16x16xf32> to vector<1x1x8x16x16xf32>
    tpu.vector_store %arg9[%c0_457, %c0_458, %c0_459, %c0_460, %c0_461], %819 {strides = array<i32>} : memref<1x1x8x16x16xf32, #tpu.memory_space<vmem>>, vector<1x1x8x16x16xf32>,
    return
  }
  func.func @transform_0(%arg0: i32, %arg1: i32) -> (i32, i32, i32, i32, i32) {
    %c0_i32 = arith.constant 0 : i32
    %c0_i32_0 = arith.constant 0 : i32
    %c0_i32_1 = arith.constant 0 : i32
    %c0_i32_2 = arith.constant 0 : i32
    return %arg1, %arg0, %c0_i32, %c0_i32_0, %c0_i32_1 : i32, i32, i32, i32, i32
  }
  func.func @transform_1(%arg0: i32, %arg1: i32) -> (i32, i32, i32) {
    %c0_i32 = arith.constant 0 : i32
    %c0_i32_0 = arith.constant 0 : i32
    %c0_i32_1 = arith.constant 0 : i32
    %c0_i32_2 = arith.constant 0 : i32
    return %c0_i32, %c0_i32_0, %c0_i32_1 : i32, i32, i32
  }
  func.func @transform_2(%arg0: i32, %arg1: i32) -> (i32, i32, i32) {
    %c0_i32 = arith.constant 0 : i32
    %c0_i32_0 = arith.constant 0 : i32
    %c0_i32_1 = arith.constant 0 : i32
    %c0_i32_2 = arith.constant 0 : i32
    return %c0_i32, %c0_i32_0, %c0_i32_1 : i32, i32, i32
  }
  func.func @transform_3(%arg0: i32, %arg1: i32) -> (i32, i32, i32) {
    %c0_i32 = arith.constant 0 : i32
    %c0_i32_0 = arith.constant 0 : i32
    %c0_i32_1 = arith.constant 0 : i32
    %c0_i32_2 = arith.constant 0 : i32
    return %c0_i32, %c0_i32_0, %c0_i32_1 : i32, i32, i32
  }
  func.func @transform_4(%arg0: i32, %arg1: i32) -> (i32, i32, i32) {
    %c0_i32 = arith.constant 0 : i32
    %c0_i32_0 = arith.constant 0 : i32
    %c0_i32_1 = arith.constant 0 : i32
    %c0_i32_2 = arith.constant 0 : i32
    return %c0_i32, %c0_i32_0, %c0_i32_1 : i32, i32, i32
  }
  func.func @transform_5(%arg0: i32, %arg1: i32) -> i32 {
    %c0_i32 = arith.constant 0 : i32
    %c0_i32_0 = arith.constant 0 : i32
    return %c0_i32 : i32
  }
  func.func @transform_6(%arg0: i32, %arg1: i32) -> i32 {
    %c0_i32 = arith.constant 0 : i32
    %c0_i32_0 = arith.constant 0 : i32
    return %c0_i32 : i32
  }
  func.func @transform_7(%arg0: i32, %arg1: i32) -> (i32, i32, i32, i32, i32) {
    %c0_i32 = arith.constant 0 : i32
    %c0_i32_0 = arith.constant 0 : i32
    %c0_i32_1 = arith.constant 0 : i32
    %c0_i32_2 = arith.constant 0 : i32
    return %arg1, %arg0, %c0_i32, %c0_i32_0, %c0_i32_1 : i32, i32, i32, i32, i32
  }
}

</mosaic_0001>

<llo_original>
// kernel: tpu_custom_call.1
$region0: #{tpu_custom_call.1}
  #allocation0 [shape = 'u32[]', space=smem, size = 0x4, offset = 0x4, fixed_abs, tag = 'smem constant byte address 0x4 - core index']
  #allocation1 [shape = 'u32[144,128]{1,0:T(1,128)}', space=vmem, size = 0x12000, scoped, tag = 'internal scratch']
  #allocation2 [shape = 'f32[2,1,4]{2,1,0:T(1,128)}', space=vmem, size = 0x400, scoped, tag = 'scratch operand']
  #allocation3 [shape = 'f32[2,1,8]{2,1,0:T(1,128)}', space=vmem, size = 0x400, scoped, tag = 'scratch operand']
  #allocation4 [shape = 'f32[1,8]{1,0:T(1,128)}', space=vmem, size = 0x200, scoped, tag = 'scratch operand']
  #allocation5 [shape = 'f32[1,16,16]{2,1,0:T(8,128)}', space=vmem, size = 0x2000, scoped, tag = 'scratch operand']
  #allocation6 [shape = 'f32[2,1,22,22]{3,2,1,0:T(8,128)}', space=vmem, size = 0x6000, scoped, tag = 'scratch operand']
  #allocation7 [shape = 'f32[1]{0:T(128)S(6)}', space=smem, size = 0x200, scoped, tag = 'scoped memory for tpu_custom_call.1']
  %s0 = inlined_call_operand.hbm [shape: f32[4,2,8,16,16], index: 0, kind: input, shape index: {}]
  %s1 = inlined_call_operand.vmem [shape: f32[2,8,4], index: 1, kind: input, shape index: {}]
  %s2 = inlined_call_operand.vmem [shape: f32[2,1,4], index: 2, kind: input, shape index: {}]
  %s3 = inlined_call_operand.vmem [shape: f32[2,4,8], index: 3, kind: input, shape index: {}]
  %s4 = inlined_call_operand.vmem [shape: f32[2,1,8], index: 4, kind: input, shape index: {}]
  %s5 = inlined_call_operand.vmem [shape: f32[98], index: 5, kind: input, shape index: {}]
  %s6 = inlined_call_operand.<no memory space> [shape: f32[1], index: 6, kind: input, shape index: {}]
  %s7 = inlined_call_operand.hbm [shape: f32[4,2,8,16,16], index: 7, kind: output, shape index: {}]
  %s8 = sld [smem:[#allocation0]]
  $region73: #{tpu_custom_call.1} parent=0
    _
  %s10 = ssub.s32 1, %s8
  %s11 = scalar_select 0, %s10, %s8
  %12 = sst [smem:[#allocation7]] %s6
  $region1: #{tpu_custom_call.1} parent=0
    #allocation8 [shape = 'u8[131072]{0}', space=vmem, size = 0x20000, scoped, tag = 'input window, operand 0']
    #allocation9 [shape = 's32[2]{0}', space=sflag, size = 0x8, scoped, tag = 'scoped memory for tpu_custom_call.1']
    #allocation10 [shape = 's32[2]{0}', space=sflag, size = 0x8, scoped, tag = 'scoped memory for tpu_custom_call.1']
    #allocation11 [shape = 's32[2]{0}', space=sflag, size = 0x8, scoped, tag = 'scoped memory for tpu_custom_call.1']
    #allocation12 [shape = 'u8[512]{0}', space=smem, size = 0x200, scoped, tag = 'input window, operand 5, single buffered']
    #allocation13 [shape = 'u8[131072]{0}', space=vmem, size = 0x20000, scoped, tag = 'output window, operand 0']
    %13 = vsyncpa [#allocation9], 0
    %s14 = scalar_lea.sflag [#allocation9], 1
    %15 = vsyncpa %s14, 0
    %16 = vsyncpa [#allocation11], 0
    %17 = vsyncpa [#allocation10], 0
    %s18 = scalar_lea.sflag [#allocation10], 1
    %19 = vsyncpa %s18, 0
    loop: start=0, step=1, limit=10
    $region2: #{tpu_custom_call.1} parent=1 // loop_pre_header
      _
    $region3: #{tpu_custom_call.1} parent=1 // loop_header
      %s21 = sphi 0, %s25
      %p22 = scmp.ge.s32.totalorder %s21, 10
      %s28 = sphi 0, %s40
      %s29 = sphi 0, %s36
      %s30 = sphi 0, %s28
      %s31 = sphi 0, %s29
      %s32 = sphi 0, %s30
      %s33 = sphi 0, %s31
      %s45 = sphi 0, %s47
      %s48 = sphi 0, %s45
      %s49 = sphi 0, %s48
      %s65 = sphi 0, %s49
      %s69 = sphi 0, %s69
      %s71 = sphi 0, %s69
      %s72 = sphi 0, %s71
      %s86 = sphi 0, %s72
      %s90 = sphi 0, %s90
      %s92 = sphi 0, %s90
      %s93 = sphi 0, %s92
      %s107 = sphi 0, %s93
      %s111 = sphi 0, %s111
      %s113 = sphi 0, %s111
      %s114 = sphi 0, %s113
      %s128 = sphi 0, %s114
      %s132 = sphi 0, %s132
      %s134 = sphi 0, %s132
      %s135 = sphi 0, %s134
      %s149 = sphi 0, %s135
      %s153 = sphi 0, %s153
      %s155 = sphi 0, %s153
      %s156 = sphi 0, %s155
      %s170 = sphi 0, %s156
      %s174 = sphi 0, %s174
      %s176 = sphi 0, %s174
      %s177 = sphi 0, %s176
      %s191 = sphi 0, %s177
      %s199 = sphi 0, %s201
      %s202 = sphi 0, %s199
      %s203 = sphi 0, %s202
      %s219 = sphi 0, %s203
    $region4: #{tpu_custom_call.1} parent=1 // loop_header_branch
      %24 = sbr.rel (%p22) target = $region8
    $region5: #{tpu_custom_call.1} parent=1 // loop_body
      %s26 = ssub.s32 %s21, 1
      %s27 = ssub.s32 %s21, 2
      %s34 = sadd.s32 1, %s29
      %p35 = scmp.ge.s32.totalorder %s34, 4
      %s36 = scalar_select %p35, 0, %s34
      %s37 = sadd.s32 1, %s28
      %s38 = scalar_select %p35, %s37, %s28
      %p39 = scmp.ge.s32.totalorder %s38, 2
      %s40 = scalar_select %p39, 0, %s38
      %s41 = ssub.s32 %s29, %s36
      %s42 = ssub.s32 %s28, %s40
      %s43 = sor.u32 %s41, %s42
      %p44 = scmp.eq.s32.totalorder %s43, 0
      %s46 = sadd.s32 %s45, 1
      %s47 = scalar_select %p44, %s45, %s46
      %p50 = pneg %p44
      %p51 = scmp.eq.s32.totalorder %s21, 7
      %p52 = por %p50, %p51
      %p53 = scmp.ne.s32.totalorder %s45, %s48
      %p54 = scmp.eq.s32.totalorder %s21, 0
      %p55 = por %p53, %p54
      %p56 = scmp.ne.s32.totalorder %s45, %s48
      %p57 = scmp.eq.s32.totalorder %s26, 7
      %p58 = por %p56, %p57
      %p59 = scmp.ne.s32.totalorder %s48, %s49
      %p60 = scmp.eq.s32.totalorder %s26, 0
      %p61 = por %p59, %p60
      %p62 = scmp.ne.s32.totalorder %s48, %s49
      %p63 = scmp.eq.s32.totalorder %s27, 7
      %p64 = por %p62, %p63
      %p66 = scmp.ne.s32.totalorder %s49, %s65
      %p67 = scmp.eq.s32.totalorder %s27, 0
      %p68 = por %p66, %p67
      %s70 = sadd.s32 %s69, 1
      %p73 = scmp.eq.s32.totalorder %s21, 7
      %p74 = scmp.ne.s32.totalorder %s69, %s71
      %p75 = scmp.eq.s32.totalorder %s21, 0
      %p76 = por %p74, %p75
      %p77 = scmp.ne.s32.totalorder %s69, %s71
      %p78 = scmp.eq.s32.totalorder %s26, 7
      %p79 = por %p77, %p78
      %p80 = scmp.ne.s32.totalorder %s71, %s72
      %p81 = scmp.eq.s32.totalorder %s26, 0
      %p82 = por %p80, %p81
      %p83 = scmp.ne.s32.totalorder %s71, %s72
      %p84 = scmp.eq.s32.totalorder %s27, 7
      %p85 = por %p83, %p84
      %p87 = scmp.ne.s32.totalorder %s72, %s86
      %p88 = scmp.eq.s32.totalorder %s27, 0
      %p89 = por %p87, %p88
      %s91 = sadd.s32 %s90, 1
      %p94 = scmp.eq.s32.totalorder %s21, 7
      %p95 = scmp.ne.s32.totalorder %s90, %s92
      %p96 = scmp.eq.s32.totalorder %s21, 0
      %p97 = por %p95, %p96
      %p98 = scmp.ne.s32.totalorder %s90, %s92
      %p99 = scmp.eq.s32.totalorder %s26, 7
      %p100 = por %p98, %p99
      %p101 = scmp.ne.s32.totalorder %s92, %s93
      %p102 = scmp.eq.s32.totalorder %s26, 0
      %p103 = por %p101, %p102
      %p104 = scmp.ne.s32.totalorder %s92, %s93
      %p105 = scmp.eq.s32.totalorder %s27, 7
      %p106 = por %p104, %p105
      %p108 = scmp.ne.s32.totalorder %s93, %s107
      %p109 = scmp.eq.s32.totalorder %s27, 0
      %p110 = por %p108, %p109
      %s112 = sadd.s32 %s111, 1
      %p115 = scmp.eq.s32.totalorder %s21, 7
      %p116 = scmp.ne.s32.totalorder %s111, %s113
      %p117 = scmp.eq.s32.totalorder %s21, 0
      %p118 = por %p116, %p117
      %p119 = scmp.ne.s32.totalorder %s111, %s113
      %p120 = scmp.eq.s32.totalorder %s26, 7
      %p121 = por %p119, %p120
      %p122 = scmp.ne.s32.totalorder %s113, %s114
      %p123 = scmp.eq.s32.totalorder %s26, 0
      %p124 = por %p122, %p123
      %p125 = scmp.ne.s32.totalorder %s113, %s114
      %p126 = scmp.eq.s32.totalorder %s27, 7
      %p127 = por %p125, %p126
      %p129 = scmp.ne.s32.totalorder %s114, %s128
      %p130 = scmp.eq.s32.totalorder %s27, 0
      %p131 = por %p129, %p130
      %s133 = sadd.s32 %s132, 1
      %p136 = scmp.eq.s32.totalorder %s21, 7
      %p137 = scmp.ne.s32.totalorder %s132, %s134
      %p138 = scmp.eq.s32.totalorder %s21, 0
      %p139 = por %p137, %p138
      %p140 = scmp.ne.s32.totalorder %s132, %s134
      %p141 = scmp.eq.s32.totalorder %s26, 7
      %p142 = por %p140, %p141
      %p143 = scmp.ne.s32.totalorder %s134, %s135
      %p144 = scmp.eq.s32.totalorder %s26, 0
      %p145 = por %p143, %p144
      %p146 = scmp.ne.s32.totalorder %s134, %s135
      %p147 = scmp.eq.s32.totalorder %s27, 7
      %p148 = por %p146, %p147
      %p150 = scmp.ne.s32.totalorder %s135, %s149
      %p151 = scmp.eq.s32.totalorder %s27, 0
      %p152 = por %p150, %p151
      %s154 = sadd.s32 %s153, 1
      %p157 = scmp.eq.s32.totalorder %s21, 7
      %p158 = scmp.ne.s32.totalorder %s153, %s155
      %p159 = scmp.eq.s32.totalorder %s21, 0
      %p160 = por %p158, %p159
      %p161 = scmp.ne.s32.totalorder %s153, %s155
      %p162 = scmp.eq.s32.totalorder %s26, 7
      %p163 = por %p161, %p162
      %p164 = scmp.ne.s32.totalorder %s155, %s156
      %p165 = scmp.eq.s32.totalorder %s26, 0
      %p166 = por %p164, %p165
      %p167 = scmp.ne.s32.totalorder %s155, %s156
      %p168 = scmp.eq.s32.totalorder %s27, 7
      %p169 = por %p167, %p168
      %p171 = scmp.ne.s32.totalorder %s156, %s170
      %p172 = scmp.eq.s32.totalorder %s27, 0
      %p173 = por %p171, %p172
      %s175 = sadd.s32 %s174, 1
      %p178 = scmp.eq.s32.totalorder %s21, 7
      %p179 = scmp.ne.s32.totalorder %s174, %s176
      %p180 = scmp.eq.s32.totalorder %s21, 0
      %p181 = por %p179, %p180
      %p182 = scmp.ne.s32.totalorder %s174, %s176
      %p183 = scmp.eq.s32.totalorder %s26, 7
      %p184 = por %p182, %p183
      %p185 = scmp.ne.s32.totalorder %s176, %s177
      %p186 = scmp.eq.s32.totalorder %s26, 0
      %p187 = por %p185, %p186
      %p188 = scmp.ne.s32.totalorder %s176, %s177
      %p189 = scmp.eq.s32.totalorder %s27, 7
      %p190 = por %p188, %p189
      %p192 = scmp.ne.s32.totalorder %s177, %s191
      %p193 = scmp.eq.s32.totalorder %s27, 0
      %p194 = por %p192, %p193
      %s195 = ssub.s32 %s29, %s36
      %s196 = ssub.s32 %s28, %s40
      %s197 = sor.u32 %s195, %s196
      %p198 = scmp.eq.s32.totalorder %s197, 0
      %s200 = sadd.s32 %s199, 1
      %s201 = scalar_select %p198, %s199, %s200
      %p204 = pneg %p198
      %p205 = scmp.eq.s32.totalorder %s21, 7
      %p206 = por %p204, %p205
      %p207 = scmp.ne.s32.totalorder %s199, %s202
      %p208 = scmp.eq.s32.totalorder %s21, 0
      %p209 = por %p207, %p208
      %p210 = scmp.ne.s32.totalorder %s199, %s202
      %p211 = scmp.eq.s32.totalorder %s26, 7
      %p212 = por %p210, %p211
      %p213 = scmp.ne.s32.totalorder %s202, %s203
      %p214 = scmp.eq.s32.totalorder %s26, 0
      %p215 = por %p213, %p214
      %p216 = scmp.ne.s32.totalorder %s202, %s203
      %p217 = scmp.eq.s32.totalorder %s27, 7
      %p218 = por %p216, %p217
      %p220 = scmp.ne.s32.totalorder %s203, %s219
      %p221 = scmp.eq.s32.totalorder %s27, 0
      %p222 = por %p220, %p221
      %p223 = scmp.le.s32.totalorder 1, %s21
      %p224 = scmp.lt.s32.totalorder %s21, 9
      %p225 = pnand %p223, %p224
      %p226 = pneg %p225
      // Predicated region
      $region9: #{tpu_custom_call.1} parent=5 // pred_check
        _
      $region10: #{tpu_custom_call.1} parent=5 // pred_check_branch
        %228 = sbr.rel (%p225) target = $region12
      $region11: #{tpu_custom_call.1} parent=5 // pred_region
        %s229 = ssub.s32 %s21, 1
        // Predicated region
        $region13: #{tpu_custom_call.1} parent=11 // pred_check
          %p230 = pneg %p82
        $region14: #{tpu_custom_call.1} parent=11 // pred_check_branch
          %232 = sbr.rel (%p230) target = $region16
        $region15: #{tpu_custom_call.1} parent=11 // pred_region
          _
        $region16: #{tpu_custom_call.1} parent=11 // pred_fallthru
          _
        // Predicated region
        $region17: #{tpu_custom_call.1} parent=11 // pred_check
          %p233 = pneg %p103
        $region18: #{tpu_custom_call.1} parent=11 // pred_check_branch
          %235 = sbr.rel (%p233) target = $region20
        $region19: #{tpu_custom_call.1} parent=11 // pred_region
          _
        $region20: #{tpu_custom_call.1} parent=11 // pred_fallthru
          _
        // Predicated region
        $region21: #{tpu_custom_call.1} parent=11 // pred_check
          %p236 = pneg %p124
        $region22: #{tpu_custom_call.1} parent=11 // pred_check_branch
          %238 = sbr.rel (%p236) target = $region24
        $region23: #{tpu_custom_call.1} parent=11 // pred_region
          _
        $region24: #{tpu_custom_call.1} parent=11 // pred_fallthru
          _
        // Predicated region
        $region25: #{tpu_custom_call.1} parent=11 // pred_check
          %p239 = pneg %p145
        $region26: #{tpu_custom_call.1} parent=11 // pred_check_branch
          %241 = sbr.rel (%p239) target = $region28
        $region27: #{tpu_custom_call.1} parent=11 // pred_region
          _
        $region28: #{tpu_custom_call.1} parent=11 // pred_fallthru
          _
        // Predicated region
        $region29: #{tpu_custom_call.1} parent=11 // pred_check
          %p242 = pneg %p166
        $region30: #{tpu_custom_call.1} parent=11 // pred_check_branch
          %244 = sbr.rel (%p242) target = $region32
        $region31: #{tpu_custom_call.1} parent=11 // pred_region
          %s246 = ssub.s32 16, 16
          %247 = vsyncadd [#allocation11], %s246
          %s249 = sshll.u32 %s5, 4
          %s250 = int_to_ptr.vmem [resolvable:$true] %s249
          %252 = dma.vmem_to_smem %s250, 16, [#allocation12], [#allocation11]
        $region32: #{tpu_custom_call.1} parent=11 // pred_fallthru
          _
        // Predicated region
        $region33: #{tpu_custom_call.1} parent=11 // pred_check
          %p253 = pneg %p187
        $region34: #{tpu_custom_call.1} parent=11 // pred_check_branch
          %255 = sbr.rel (%p253) target = $region36
        $region35: #{tpu_custom_call.1} parent=11 // pred_region
          _
        $region36: #{tpu_custom_call.1} parent=11 // pred_fallthru
          _
      $region12: #{tpu_custom_call.1} parent=5 // pred_fallthru
        _
      %p256 = scmp.lt.s32.totalorder %s21, 8
      // Predicated region
      $region37: #{tpu_custom_call.1} parent=5 // pred_check
        %p257 = pneg %p256
      $region38: #{tpu_custom_call.1} parent=5 // pred_check_branch
        %259 = sbr.rel (%p257) target = $region40
      $region39: #{tpu_custom_call.1} parent=5 // pred_region
        // Predicated region
        $region41: #{tpu_custom_call.1} parent=39 // pred_check
          %p260 = pneg %p55
        $region42: #{tpu_custom_call.1} parent=39 // pred_check_branch
          %262 = sbr.rel (%p260) target = $region44
        $region43: #{tpu_custom_call.1} parent=39 // pred_region
          %s263 = sand.u32 %s45, 1
          %s264 = scalar_lea.sflag [#allocation9], %s263
          %s265 = sand.u32 %s45, 1
          %s266 = smul.addr %s265, 128
          %s267 = scalar_lea.vmem [#allocation8], %s266
          %s269 = ssub.s32 2048, 2048
          %270 = vsyncadd %s264, %s269
          %s271 = smul.addr %s28, 16
          %s272 = smul.addr %s29, 32
          %s273 = sadd.s32 %s271, %s272
          %s274 = smul.addr %s273, 128
          %s275 = scalar_lea.hbm %s0, %s274
          %s276 = sshll.u32 %s267, 4
          %s277 = int_to_ptr.vmem [resolvable:$true] %s276
          %282 = dma.hbm_to_vmem [thread:$0]  %s275, 2048, %s277, %s264, 128, 128, 8
        $region44: #{tpu_custom_call.1} parent=39 // pred_fallthru
          _
      $region40: #{tpu_custom_call.1} parent=5 // pred_fallthru
        _
      %p283 = scmp.le.s32.totalorder 1, %s21
      %p284 = scmp.lt.s32.totalorder %s21, 9
      %p285 = pnand %p283, %p284
      %p286 = pneg %p285
      // Predicated region
      $region45: #{tpu_custom_call.1} parent=5 // pred_check
        _
      $region46: #{tpu_custom_call.1} parent=5 // pred_check_branch
        %288 = sbr.rel (%p285) target = $region48
      $region47: #{tpu_custom_call.1} parent=5 // pred_region
        %s289 = ssub.s32 %s21, 1
        %s290 = sand.u32 %s48, 1
        %s291 = scalar_lea.sflag [#allocation9], %s290
        %s292 = sand.u32 %s48, 1
        %s293 = smul.addr %s292, 128
        %s294 = scalar_lea.vmem [#allocation8], %s293
        // Predicated region
        $region49: #{tpu_custom_call.1} parent=47 // pred_check
          %p295 = pneg %p61
        $region50: #{tpu_custom_call.1} parent=47 // pred_check_branch
          %297 = sbr.rel (%p295) target = $region52
        $region51: #{tpu_custom_call.1} parent=47 // pred_region
          %298 = dma.done %s291, 2048
        $region52: #{tpu_custom_call.1} parent=47 // pred_fallthru
          _
        // Predicated region
        $region53: #{tpu_custom_call.1} parent=47 // pred_check
          %p299 = pneg %p166
        $region54: #{tpu_custom_call.1} parent=47 // pred_check_branch
          %301 = sbr.rel (%p299) target = $region56
        $region55: #{tpu_custom_call.1} parent=47 // pred_region
          %302 = dma.done [#allocation11], 16
        $region56: #{tpu_custom_call.1} parent=47 // pred_fallthru
          _
        %303 = sfence
        %s304 = sand.u32 %s48, 1
        %s305 = scalar_lea.sflag [#allocation9], %s304
        %s306 = sand.u32 %s48, 1
        %s307 = smul.addr %s306, 128
        %s308 = scalar_lea.vmem [#allocation8], %s307
        %p309 = pneg %p61
        %p310 = pneg %p58
        %p311 = pneg %p82
        %p312 = pneg %p79
        %p313 = pneg %p103
        %p314 = pneg %p100
        %p315 = pneg %p124
        %p316 = pneg %p121
        %p317 = pneg %p145
        %p318 = pneg %p142
        %p319 = pneg %p166
        %p320 = pneg %p163
        %p321 = pneg %p187
        %p322 = pneg %p184
        %p323 = pneg %p215
        %p324 = pneg %p212
        %s325 = sand.u32 %s202, 1
        %s326 = scalar_lea.sflag [#allocation10], %s325
        %s327 = sand.u32 %s202, 1
        %s328 = smul.addr %s327, 128
        %s329 = scalar_lea.vmem [#allocation13], %s328
        %p330 = scmp.eq.s32.totalorder %s31, 0
        // Predicated region
        $region57: #{tpu_custom_call.1} parent=47 // pred_check
          %p331 = pneg %p330
        $region58: #{tpu_custom_call.1} parent=47 // pred_check_branch
          %333 = sbr.rel (%p331) target = $region60
        $region59: #{tpu_custom_call.1} parent=47 // pred_region
          %vm334 = vcmask 24576
          %335 = vst.msk [vmem:[#allocation2] sm:$0x1] %vm334, 0.0
          %336 = vst.msk [vmem:[#allocation2 + $0x1] sm:$0x1] %vm334, 0.0
          %vm337 = vcmask 57344
          %338 = vst.msk [vmem:[#allocation3] sm:$0x1] %vm337, 0.0
          %339 = vst.msk [vmem:[#allocation3 + $0x1] sm:$0x1] %vm337, 0.0
          %340 = vst.msk [vmem:[#allocation4] sm:$0x1] %vm337, 0.0
          %vm341 = vcmask 130048
          %342 = vst.msk [vmem:[#allocation5] sm:$0xff] %vm341, 0.0
          %343 = vst.msk [vmem:[#allocation5 + $0x8] sm:$0xff] %vm341, 0.0
          %vm344 = vcmask 179200
          %345 = vst.msk [vmem:[#allocation6] sm:$0xff] %vm344, 0.0
          %346 = vst.msk [vmem:[#allocation6 + $0x8] sm:$0xff] %vm344, 0.0
          %vm347 = vcmask 177152
          %348 = vst.msk [vmem:[#allocation6 + $0x10] sm:$0x3f] %vm347, 0.0
          %349 = vst.msk [vmem:[#allocation6 + $0x18] sm:$0xff] %vm344, 0.0
          %350 = vst.msk [vmem:[#allocation6 + $0x20] sm:$0xff] %vm344, 0.0
          %351 = vst.msk [vmem:[#allocation6 + $0x28] sm:$0x3f] %vm347, 0.0
        $region60: #{tpu_custom_call.1} parent=47 // pred_fallthru
          _
        %v352 = vld [vmem:[%s294] sm:$0xff]
        %v353 = vld [vmem:[%s294 + $0x8] sm:$0xff]
        %v354 = vld [vmem:[%s294 + $0x10] sm:$0xff]
        %v355 = vld [vmem:[%s294 + $0x18] sm:$0xff]
        %v356 = vld [vmem:[%s294 + $0x20] sm:$0xff]
        %v357 = vld [vmem:[%s294 + $0x28] sm:$0xff]
        %v358 = vld [vmem:[%s294 + $0x30] sm:$0xff]
        %v359 = vld [vmem:[%s294 + $0x38] sm:$0xff]
        %v360 = vld [vmem:[%s294 + $0x40] sm:$0xff]
        %v361 = vld [vmem:[%s294 + $0x48] sm:$0xff]
        %v362 = vld [vmem:[%s294 + $0x50] sm:$0xff]
        %v363 = vld [vmem:[%s294 + $0x58] sm:$0xff]
        %v364 = vld [vmem:[%s294 + $0x60] sm:$0xff]
        %v365 = vld [vmem:[%s294 + $0x68] sm:$0xff]
        %v366 = vld [vmem:[%s294 + $0x70] sm:$0xff]
        %v367 = vld [vmem:[%s294 + $0x78] sm:$0xff]
        %vm368 = vcmask 130048
        %v369 = vsel %vm368, %v352, -inf
        %370 = vmax.xlane.f32.xlu0 %v369
        %v371 = vpop.xlane.xlu0 %370
        %v372 = vsel %vm368, %v353, -inf
        %373 = vmax.xlane.f32.xlu0 %v372
        %v374 = vpop.xlane.xlu0 %373
        %v375 = vsel %vm368, %v354, -inf
        %376 = vmax.xlane.f32.xlu0 %v375
        %v377 = vpop.xlane.xlu0 %376
        %v378 = vsel %vm368, %v355, -inf
        %379 = vmax.xlane.f32.xlu0 %v378
        %v380 = vpop.xlane.xlu0 %379
        %v381 = vsel %vm368, %v356, -inf
        %382 = vmax.xlane.f32.xlu0 %v381
        %v383 = vpop.xlane.xlu0 %382
        %v384 = vsel %vm368, %v357, -inf
        %385 = vmax.xlane.f32.xlu0 %v384
        %v386 = vpop.xlane.xlu0 %385
        %v387 = vsel %vm368, %v358, -inf
        %388 = vmax.xlane.f32.xlu0 %v387
        %v389 = vpop.xlane.xlu0 %388
        %v390 = vsel %vm368, %v359, -inf
        %391 = vmax.xlane.f32.xlu0 %v390
        %v392 = vpop.xlane.xlu0 %391
        %v393 = vsel %vm368, %v360, -inf
        %394 = vmax.xlane.f32.xlu0 %v393
        %v395 = vpop.xlane.xlu0 %394
        %v396 = vsel %vm368, %v361, -inf
        %397 = vmax.xlane.f32.xlu0 %v396
        %v398 = vpop.xlane.xlu0 %397
        %v399 = vsel %vm368, %v362, -inf
        %400 = vmax.xlane.f32.xlu0 %v399
        %v401 = vpop.xlane.xlu0 %400
        %v402 = vsel %vm368, %v363, -inf
        %403 = vmax.xlane.f32.xlu0 %v402
        %v404 = vpop.xlane.xlu0 %403
        %v405 = vsel %vm368, %v364, -inf
        %406 = vmax.xlane.f32.xlu0 %v405
        %v407 = vpop.xlane.xlu0 %406
        %v408 = vsel %vm368, %v365, -inf
        %409 = vmax.xlane.f32.xlu0 %v408
        %v410 = vpop.xlane.xlu0 %409
        %v411 = vsel %vm368, %v366, -inf
        %412 = vmax.xlane.f32.xlu0 %v411
        %v413 = vpop.xlane.xlu0 %412
        %v414 = vsel %vm368, %v367, -inf
        %415 = vmax.xlane.f32.xlu0 %v414
        %v416 = vpop.xlane.xlu0 %415
        %v433 = vlaneseq
        %v434 = vand.u32 %v433, 127
        %v435 = vlaneseq
        %v436 = vshrl.u32 %v435, 7
        %v437 = vsub.s32 %v434, %v436
        %v438 = vrot.slane %v371, %v437
        %v439 = vadd.s32 %v434, 4294967288
        %v440 = vlaneseq
        %v441 = vshrl.u32 %v440, 7
        %v442 = vsub.s32 %v439, %v441
        %v443 = vrot.slane %v374, %v442
        %vm444 = vcmask 130112
        %v445 = vsel %vm444, %v443, %v438
        %v446 = vlaneseq
        %v447 = vshrl.u32 %v446, 7
        %v448 = vsub.s32 %v434, %v447
        %v449 = vrot.slane %v377, %v448
        %v450 = vlaneseq
        %v451 = vshrl.u32 %v450, 7
        %v452 = vsub.s32 %v439, %v451
        %v453 = vrot.slane %v380, %v452
        %v454 = vsel %vm444, %v453, %v449
        %v455 = vlaneseq
        %v456 = vshrl.u32 %v455, 7
        %v457 = vsub.s32 %v434, %v456
        %v458 = vrot.slane %v383, %v457
        %v459 = vlaneseq
        %v460 = vshrl.u32 %v459, 7
        %v461 = vsub.s32 %v439, %v460
        %v462 = vrot.slane %v386, %v461
        %v463 = vsel %vm444, %v462, %v458
        %v464 = vlaneseq
        %v465 = vshrl.u32 %v464, 7
        %v466 = vsub.s32 %v434, %v465
        %v467 = vrot.slane %v389, %v466
        %v468 = vlaneseq
        %v469 = vshrl.u32 %v468, 7
        %v470 = vsub.s32 %v439, %v469
        %v471 = vrot.slane %v392, %v470
        %v472 = vsel %vm444, %v471, %v467
        %v473 = vlaneseq
        %v474 = vshrl.u32 %v473, 7
        %v475 = vsub.s32 %v434, %v474
        %v476 = vrot.slane %v395, %v475
        %v477 = vlaneseq
        %v478 = vshrl.u32 %v477, 7
        %v479 = vsub.s32 %v439, %v478
        %v480 = vrot.slane %v398, %v479
        %v481 = vsel %vm444, %v480, %v476
        %v482 = vlaneseq
        %v483 = vshrl.u32 %v482, 7
        %v484 = vsub.s32 %v434, %v483
        %v485 = vrot.slane %v401, %v484
        %v486 = vlaneseq
        %v487 = vshrl.u32 %v486, 7
        %v488 = vsub.s32 %v439, %v487
        %v489 = vrot.slane %v404, %v488
        %v490 = vsel %vm444, %v489, %v485
        %v491 = vlaneseq
        %v492 = vshrl.u32 %v491, 7
        %v493 = vsub.s32 %v434, %v492
        %v494 = vrot.slane %v407, %v493
        %v495 = vlaneseq
        %v496 = vshrl.u32 %v495, 7
        %v497 = vsub.s32 %v439, %v496
        %v498 = vrot.slane %v410, %v497
        %v499 = vsel %vm444, %v498, %v494
        %v500 = vlaneseq
        %v501 = vshrl.u32 %v500, 7
        %v502 = vsub.s32 %v434, %v501
        %v503 = vrot.slane %v413, %v502
        %v504 = vlaneseq
        %v505 = vshrl.u32 %v504, 7
        %v506 = vsub.s32 %v439, %v505
        %v507 = vrot.slane %v416, %v506
        %v508 = vsel %vm444, %v507, %v503
        %vm509 = vcmask 1041409
        %v510 = vsel %vm509, %v454, %v445
        %vm511 = vcmask 1042434
        %v512 = vsel %vm511, %v463, %v510
        %vm513 = vcmask 1043459
        %v514 = vsel %vm513, %v472, %v512
        %vm515 = vcmask 1044484
        %v516 = vsel %vm515, %v481, %v514
        %vm517 = vcmask 1045509
        %v518 = vsel %vm517, %v490, %v516
        %vm519 = vcmask 1046534
        %v520 = vsel %vm519, %v499, %v518
        %vm521 = vcmask 1047559
        %v522 = vsel %vm521, %v508, %v520
        %v524 = vsel %vm368, %v522, -inf
        %525 = vmax.xlane.f32.xlu0 %v524
        %v526 = vpop.xlane.xlu0 %525
        %v527 = vsel %vm368, %v352, 0.0
        %528 = vadd.xlane.f32.xlu0 %v527
        %v529 = vpop.xlane.xlu0 %528
        %v530 = vsel %vm368, %v353, 0.0
        %531 = vadd.xlane.f32.xlu0 %v530
        %v532 = vpop.xlane.xlu0 %531
        %v533 = vsel %vm368, %v354, 0.0
        %534 = vadd.xlane.f32.xlu0 %v533
        %v535 = vpop.xlane.xlu0 %534
        %v536 = vsel %vm368, %v355, 0.0
        %537 = vadd.xlane.f32.xlu0 %v536
        %v538 = vpop.xlane.xlu0 %537
        %v539 = vsel %vm368, %v356, 0.0
        %540 = vadd.xlane.f32.xlu0 %v539
        %v541 = vpop.xlane.xlu0 %540
        %v542 = vsel %vm368, %v357, 0.0
        %543 = vadd.xlane.f32.xlu0 %v542
        %v544 = vpop.xlane.xlu0 %543
        %v545 = vsel %vm368, %v358, 0.0
        %546 = vadd.xlane.f32.xlu0 %v545
        %v547 = vpop.xlane.xlu0 %546
        %v548 = vsel %vm368, %v359, 0.0
        %549 = vadd.xlane.f32.xlu0 %v548
        %v550 = vpop.xlane.xlu0 %549
        %v551 = vsel %vm368, %v360, 0.0
        %552 = vadd.xlane.f32.xlu0 %v551
        %v553 = vpop.xlane.xlu0 %552
        %v554 = vsel %vm368, %v361, 0.0
        %555 = vadd.xlane.f32.xlu0 %v554
        %v556 = vpop.xlane.xlu0 %555
        %v557 = vsel %vm368, %v362, 0.0
        %558 = vadd.xlane.f32.xlu0 %v557
        %v559 = vpop.xlane.xlu0 %558
        %v560 = vsel %vm368, %v363, 0.0
        %561 = vadd.xlane.f32.xlu0 %v560
        %v562 = vpop.xlane.xlu0 %561
        %v563 = vsel %vm368, %v364, 0.0
        %564 = vadd.xlane.f32.xlu0 %v563
        %v565 = vpop.xlane.xlu0 %564
        %v566 = vsel %vm368, %v365, 0.0
        %567 = vadd.xlane.f32.xlu0 %v566
        %v568 = vpop.xlane.xlu0 %567
        %v569 = vsel %vm368, %v366, 0.0
        %570 = vadd.xlane.f32.xlu0 %v569
        %v571 = vpop.xlane.xlu0 %570
        %v572 = vsel %vm368, %v367, 0.0
        %573 = vadd.xlane.f32.xlu0 %v572
        %v574 = vpop.xlane.xlu0 %573
        %v591 = vlaneseq
        %v592 = vshrl.u32 %v591, 7
        %v593 = vsub.s32 %v434, %v592
        %v594 = vrot.slane %v529, %v593
        %v595 = vlaneseq
        %v596 = vshrl.u32 %v595, 7
        %v597 = vsub.s32 %v439, %v596
        %v598 = vrot.slane %v532, %v597
        %v599 = vsel %vm444, %v598, %v594
        %v600 = vlaneseq
        %v601 = vshrl.u32 %v600, 7
        %v602 = vsub.s32 %v434, %v601
        %v603 = vrot.slane %v535, %v602
        %v604 = vlaneseq
        %v605 = vshrl.u32 %v604, 7
        %v606 = vsub.s32 %v439, %v605
        %v607 = vrot.slane %v538, %v606
        %v608 = vsel %vm444, %v607, %v603
        %v609 = vlaneseq
        %v610 = vshrl.u32 %v609, 7
        %v611 = vsub.s32 %v434, %v610
        %v612 = vrot.slane %v541, %v611
        %v613 = vlaneseq
        %v614 = vshrl.u32 %v613, 7
        %v615 = vsub.s32 %v439, %v614
        %v616 = vrot.slane %v544, %v615
        %v617 = vsel %vm444, %v616, %v612
        %v618 = vlaneseq
        %v619 = vshrl.u32 %v618, 7
        %v620 = vsub.s32 %v434, %v619
        %v621 = vrot.slane %v547, %v620
        %v622 = vlaneseq
        %v623 = vshrl.u32 %v622, 7
        %v624 = vsub.s32 %v439, %v623
        %v625 = vrot.slane %v550, %v624
        %v626 = vsel %vm444, %v625, %v621
        %v627 = vlaneseq
        %v628 = vshrl.u32 %v627, 7
        %v629 = vsub.s32 %v434, %v628
        %v630 = vrot.slane %v553, %v629
        %v631 = vlaneseq
        %v632 = vshrl.u32 %v631, 7
        %v633 = vsub.s32 %v439, %v632
        %v634 = vrot.slane %v556, %v633
        %v635 = vsel %vm444, %v634, %v630
        %v636 = vlaneseq
        %v637 = vshrl.u32 %v636, 7
        %v638 = vsub.s32 %v434, %v637
        %v639 = vrot.slane %v559, %v638
        %v640 = vlaneseq
        %v641 = vshrl.u32 %v640, 7
        %v642 = vsub.s32 %v439, %v641
        %v643 = vrot.slane %v562, %v642
        %v644 = vsel %vm444, %v643, %v639
        %v645 = vlaneseq
        %v646 = vshrl.u32 %v645, 7
        %v647 = vsub.s32 %v434, %v646
        %v648 = vrot.slane %v565, %v647
        %v649 = vlaneseq
        %v650 = vshrl.u32 %v649, 7
        %v651 = vsub.s32 %v439, %v650
        %v652 = vrot.slane %v568, %v651
        %v653 = vsel %vm444, %v652, %v648
        %v654 = vlaneseq
        %v655 = vshrl.u32 %v654, 7
        %v656 = vsub.s32 %v434, %v655
        %v657 = vrot.slane %v571, %v656
        %v658 = vlaneseq
        %v659 = vshrl.u32 %v658, 7
        %v660 = vsub.s32 %v439, %v659
        %v661 = vrot.slane %v574, %v660
        %v662 = vsel %vm444, %v661, %v657
        %v663 = vsel %vm509, %v608, %v599
        %v664 = vsel %vm511, %v617, %v663
        %v665 = vsel %vm513, %v626, %v664
        %v666 = vsel %vm515, %v635, %v665
        %v667 = vsel %vm517, %v644, %v666
        %v668 = vsel %vm519, %v653, %v667
        %v669 = vsel %vm521, %v662, %v668
        %v671 = vsel %vm368, %v669, 0.0
        %672 = vadd.xlane.f32.xlu0 %v671
        %v673 = vpop.xlane.xlu0 %672
        %v674 = vmul.f32 %v673, 0.00390625
        %v675 = vld [vmem:[%s1] sm:$0xff]
        %v676 = vld [vmem:[%s1 + $0x8] sm:$0xff]
        %v677 = vld [vmem:[%s2] sm:$0x1]
        %v678 = vld [vmem:[%s2 + $0x1] sm:$0x1]
        %v679 = vadd.f32 %v677, 0.0
        %v680 = vadd.f32 %v678, 0.0
        %682 = vset.pattern.permute.xlu0 0
        %683 = vperm.xlu0 %682, %v526
        %v684 = vpop.permute.xlu0 %683
        %687 = vset.pattern.permute.xlu0 0
        %688 = vperm.xlu0 %687, %v674
        %v689 = vpop.permute.xlu0 %688
        %v691 = vmul.f32 %v684, %v675
        %v692 = vmul.f32 %v689, %v676
        %v693 = vadd.f32 %v679, %v691
        %v694 = vadd.f32 %v680, %v692
        %v698 = vunpack.c.l.s4 1966171168
        %v699 = vunpack.c.0.s8 %v698
        %v700 = vlaneseq
        %v701 = vshrl.u32 %v700, 7
        %v702 = vsub.s32 %v699, %v701
        %v703 = vrot.slane %v691, %v702
        %v704 = vcombine.high %v703, %v703
        %v706 = vunpack.c.l.s4 1966171168
        %v707 = vunpack.c.0.s8 %v706
        %v708 = vlaneseq
        %v709 = vshrl.u32 %v708, 7
        %v710 = vsub.s32 %v707, %v709
        %v711 = vrot.slane %v703, %v710
        %v713 = vunpack.c.l.s4 1966171168
        %v714 = vunpack.c.0.s8 %v713
        %v715 = vlaneseq
        %v716 = vshrl.u32 %v715, 7
        %v717 = vsub.s32 %v714, %v716
        %v718 = vrot.slane %v704, %v717
        %v720 = vunpack.c.l.s4 1966171168
        %v721 = vunpack.c.0.s8 %v720
        %v722 = vlaneseq
        %v723 = vshrl.u32 %v722, 7
        %v724 = vsub.s32 %v721, %v723
        %v725 = vrot.slane %v692, %v724
        %v726 = vcombine.high %v725, %v725
        %v728 = vunpack.c.l.s4 1966171168
        %v729 = vunpack.c.0.s8 %v728
        %v730 = vlaneseq
        %v731 = vshrl.u32 %v730, 7
        %v732 = vsub.s32 %v729, %v731
        %v733 = vrot.slane %v725, %v732
        %v735 = vunpack.c.l.s4 1966171168
        %v736 = vunpack.c.0.s8 %v735
        %v737 = vlaneseq
        %v738 = vshrl.u32 %v737, 7
        %v739 = vsub.s32 %v736, %v738
        %v740 = vrot.slane %v726, %v739
        %v743 = vadd.f32 %v693, %v718
        %v744 = vadd.f32 %v694, %v740
        %v745 = vcombine.high %v711, %v711
        %v746 = vcombine.high %v733, %v733
        %v749 = vadd.f32 %v743, %v745
        %v750 = vadd.f32 %v744, %v746
        %v751 = vcombine.high %v718, %v718
        %v752 = vcombine.high %v740, %v740
        %v755 = vadd.f32 %v749, %v751
        %v756 = vadd.f32 %v750, %v752
        %v757 = vcombine.high %v691, %v691
        %v759 = vunpack.c.l.s4 1966171168
        %v760 = vunpack.c.0.s8 %v759
        %v761 = vlaneseq
        %v762 = vshrl.u32 %v761, 7
        %v763 = vsub.s32 %v760, %v762
        %v764 = vrot.slane %v757, %v763
        %v766 = vunpack.c.l.s4 1966171168
        %v767 = vunpack.c.0.s8 %v766
        %v768 = vlaneseq
        %v769 = vshrl.u32 %v768, 7
        %v770 = vsub.s32 %v767, %v769
        %v771 = vrot.slane %v764, %v770
        %v772 = vcombine.high %v692, %v692
        %v774 = vunpack.c.l.s4 1966171168
        %v775 = vunpack.c.0.s8 %v774
        %v776 = vlaneseq
        %v777 = vshrl.u32 %v776, 7
        %v778 = vsub.s32 %v775, %v777
        %v779 = vrot.slane %v772, %v778
        %v781 = vunpack.c.l.s4 1966171168
        %v782 = vunpack.c.0.s8 %v781
        %v783 = vlaneseq
        %v784 = vshrl.u32 %v783, 7
        %v785 = vsub.s32 %v782, %v784
        %v786 = vrot.slane %v779, %v785
        %v789 = vadd.f32 %v755, %v771
        %v790 = vadd.f32 %v756, %v786
        %v791 = vcombine.high %v764, %v764
        %v793 = vunpack.c.l.s4 1966171168
        %v794 = vunpack.c.0.s8 %v793
        %v795 = vlaneseq
        %v796 = vshrl.u32 %v795, 7
        %v797 = vsub.s32 %v794, %v796
        %v798 = vrot.slane %v791, %v797
        %v799 = vcombine.high %v779, %v779
        %v801 = vunpack.c.l.s4 1966171168
        %v802 = vunpack.c.0.s8 %v801
        %v803 = vlaneseq
        %v804 = vshrl.u32 %v803, 7
        %v805 = vsub.s32 %v802, %v804
        %v806 = vrot.slane %v799, %v805
        %v809 = vadd.f32 %v789, %v798
        %v810 = vadd.f32 %v790, %v806
        %v811 = vcombine.high %v771, %v771
        %v812 = vcombine.high %v786, %v786
        %v815 = vadd.f32 %v809, %v811
        %v816 = vadd.f32 %v810, %v812
        %v817 = vcombine.high %v798, %v798
        %v818 = vcombine.high %v806, %v806
        %v821 = vadd.f32 %v815, %v817
        %v822 = vadd.f32 %v816, %v818
        %v823 = vld [vmem:[#allocation2] sm:$0x1]
        %v824 = vld [vmem:[#allocation2 + $0x1] sm:$0x1]
        %v825 = vadd.f32 %v823, %v821
        %v826 = vadd.f32 %v824, %v822
        %vm827 = vcmp.ge.f32.partialorder %v825, 1.0
        %vm828 = vcmp.ge.f32.partialorder %v826, 1.0
        %v829 = vsel %vm827, 1, 0
        %v830 = vsel %vm828, 1, 0
        %v831 = vcvt.s32.f32 %v829
        %v832 = vcvt.s32.f32 %v830
        %v833 = vsub.f32 1.0, %v831
        %v834 = vsub.f32 1.0, %v832
        %v835 = vmul.f32 %v825, %v833
        %v836 = vmul.f32 %v826, %v834
        %vm837 = vcmask 24576
        %838 = vst.msk [vmem:[#allocation2] sm:$0x1] %vm837, %v835
        %839 = vst.msk [vmem:[#allocation2 + $0x1] sm:$0x1] %vm837, %v836
        %v840 = vld [vmem:[%s3] sm:$0xf]
        %v841 = vld [vmem:[%s3 + $0x4] sm:$0xf]
        %v842 = vld [vmem:[%s4] sm:$0x1]
        %v843 = vld [vmem:[%s4 + $0x1] sm:$0x1]
        %v844 = vadd.f32 %v842, 0.0
        %v845 = vadd.f32 %v843, 0.0
        %847 = vset.pattern.permute.xlu0 0
        %848 = vperm.xlu0 %847, %v831
        %v849 = vpop.permute.xlu0 %848
        %v851 = vlaneseq
        %v852 = vshrl.u32 %v851, 7
        %v853 = vsub.s32 0, %v852
        %v854 = vrot.slane %v849, %v853
        %856 = vset.pattern.permute.xlu0 0
        %857 = vperm.xlu0 %856, %v832
        %v858 = vpop.permute.xlu0 %857
        %v860 = vlaneseq
        %v861 = vshrl.u32 %v860, 7
        %v862 = vsub.s32 0, %v861
        %v863 = vrot.slane %v858, %v862
        %v864 = vmul.f32 %v854, %v840
        %v865 = vmul.f32 %v863, %v841
        %v866 = vadd.f32 %v844, %v864
        %v867 = vadd.f32 %v845, %v865
        %868 = vset.pattern.permute.xlu0 1
        %869 = vperm.xlu0 %868, %v831
        %v870 = vpop.permute.xlu0 %869
        %v872 = vlaneseq
        %v873 = vshrl.u32 %v872, 7
        %v874 = vsub.s32 0, %v873
        %v875 = vrot.slane %v870, %v874
        %876 = vset.pattern.permute.xlu0 1
        %877 = vperm.xlu0 %876, %v832
        %v878 = vpop.permute.xlu0 %877
        %v880 = vlaneseq
        %v881 = vshrl.u32 %v880, 7
        %v882 = vsub.s32 0, %v881
        %v883 = vrot.slane %v878, %v882
        %v884 = vmul.f32 %v875, %v840
        %v885 = vmul.f32 %v883, %v841
        %v889 = vunpack.c.l.s4 1966171168
        %v890 = vunpack.c.0.s8 %v889
        %v891 = vlaneseq
        %v892 = vshrl.u32 %v891, 7
        %v893 = vsub.s32 %v890, %v892
        %v894 = vrot.slane %v884, %v893
        %v895 = vcombine.high %v894, %v894
        %v897 = vunpack.c.l.s4 1966171168
        %v898 = vunpack.c.0.s8 %v897
        %v899 = vlaneseq
        %v900 = vshrl.u32 %v899, 7
        %v901 = vsub.s32 %v898, %v900
        %v902 = vrot.slane %v895, %v901
        %v904 = vunpack.c.l.s4 1966171168
        %v905 = vunpack.c.0.s8 %v904
        %v906 = vlaneseq
        %v907 = vshrl.u32 %v906, 7
        %v908 = vsub.s32 %v905, %v907
        %v909 = vrot.slane %v885, %v908
        %v910 = vcombine.high %v909, %v909
        %v912 = vunpack.c.l.s4 1966171168
        %v913 = vunpack.c.0.s8 %v912
        %v914 = vlaneseq
        %v915 = vshrl.u32 %v914, 7
        %v916 = vsub.s32 %v913, %v915
        %v917 = vrot.slane %v910, %v916
        %v920 = vadd.f32 %v866, %v902
        %v921 = vadd.f32 %v867, %v917
        %922 = vset.pattern.permute.xlu0 2
        %923 = vperm.xlu0 %922, %v831
        %v924 = vpop.permute.xlu0 %923
        %v926 = vlaneseq
        %v927 = vshrl.u32 %v926, 7
        %v928 = vsub.s32 0, %v927
        %v929 = vrot.slane %v924, %v928
        %930 = vset.pattern.permute.xlu0 2
        %931 = vperm.xlu0 %930, %v832
        %v932 = vpop.permute.xlu0 %931
        %v934 = vlaneseq
        %v935 = vshrl.u32 %v934, 7
        %v936 = vsub.s32 0, %v935
        %v937 = vrot.slane %v932, %v936
        %v938 = vmul.f32 %v929, %v840
        %v939 = vmul.f32 %v937, %v841
        %v943 = vunpack.c.l.s4 1966171168
        %v944 = vunpack.c.0.s8 %v943
        %v945 = vlaneseq
        %v946 = vshrl.u32 %v945, 7
        %v947 = vsub.s32 %v944, %v946
        %v948 = vrot.slane %v938, %v947
        %v950 = vunpack.c.l.s4 1966171168
        %v951 = vunpack.c.0.s8 %v950
        %v952 = vlaneseq
        %v953 = vshrl.u32 %v952, 7
        %v954 = vsub.s32 %v951, %v953
        %v955 = vrot.slane %v948, %v954
        %v956 = vcombine.high %v955, %v955
        %v958 = vunpack.c.l.s4 1966171168
        %v959 = vunpack.c.0.s8 %v958
        %v960 = vlaneseq
        %v961 = vshrl.u32 %v960, 7
        %v962 = vsub.s32 %v959, %v961
        %v963 = vrot.slane %v939, %v962
        %v965 = vunpack.c.l.s4 1966171168
        %v966 = vunpack.c.0.s8 %v965
        %v967 = vlaneseq
        %v968 = vshrl.u32 %v967, 7
        %v969 = vsub.s32 %v966, %v968
        %v970 = vrot.slane %v963, %v969
        %v971 = vcombine.high %v970, %v970
        %v974 = vadd.f32 %v920, %v956
        %v975 = vadd.f32 %v921, %v971
        %976 = vset.pattern.permute.xlu0 3
        %977 = vperm.xlu0 %976, %v831
        %v978 = vpop.permute.xlu0 %977
        %v980 = vlaneseq
        %v981 = vshrl.u32 %v980, 7
        %v982 = vsub.s32 0, %v981
        %v983 = vrot.slane %v978, %v982
        %984 = vset.pattern.permute.xlu0 3
        %985 = vperm.xlu0 %984, %v832
        %v986 = vpop.permute.xlu0 %985
        %v988 = vlaneseq
        %v989 = vshrl.u32 %v988, 7
        %v990 = vsub.s32 0, %v989
        %v991 = vrot.slane %v986, %v990
        %v992 = vmul.f32 %v983, %v840
        %v993 = vmul.f32 %v991, %v841
        %v997 = vunpack.c.l.s4 1966171168
        %v998 = vunpack.c.0.s8 %v997
        %v999 = vlaneseq
        %v1000 = vshrl.u32 %v999, 7
        %v1001 = vsub.s32 %v998, %v1000
        %v1002 = vrot.slane %v992, %v1001
        %v1003 = vcombine.high %v1002, %v1002
        %v1005 = vunpack.c.l.s4 1966171168
        %v1006 = vunpack.c.0.s8 %v1005
        %v1007 = vlaneseq
        %v1008 = vshrl.u32 %v1007, 7
        %v1009 = vsub.s32 %v1006, %v1008
        %v1010 = vrot.slane %v1003, %v1009
        %v1011 = vcombine.high %v1010, %v1010
        %v1013 = vunpack.c.l.s4 1966171168
        %v1014 = vunpack.c.0.s8 %v1013
        %v1015 = vlaneseq
        %v1016 = vshrl.u32 %v1015, 7
        %v1017 = vsub.s32 %v1014, %v1016
        %v1018 = vrot.slane %v993, %v1017
        %v1019 = vcombine.high %v1018, %v1018
        %v1021 = vunpack.c.l.s4 1966171168
        %v1022 = vunpack.c.0.s8 %v1021
        %v1023 = vlaneseq
        %v1024 = vshrl.u32 %v1023, 7
        %v1025 = vsub.s32 %v1022, %v1024
        %v1026 = vrot.slane %v1019, %v1025
        %v1027 = vcombine.high %v1026, %v1026
        %v1030 = vadd.f32 %v974, %v1011
        %v1031 = vadd.f32 %v975, %v1027
        %v1032 = vld [vmem:[#allocation3] sm:$0x1]
        %v1033 = vld [vmem:[#allocation3 + $0x1] sm:$0x1]
        %v1034 = vadd.f32 %v1032, %v1030
        %v1035 = vadd.f32 %v1033, %v1031
        %vm1036 = vcmp.ge.f32.partialorder %v1034, 1.0
        %vm1037 = vcmp.ge.f32.partialorder %v1035, 1.0
        %v1038 = vsel %vm1036, 1, 0
        %v1039 = vsel %vm1037, 1, 0
        %v1040 = vcvt.s32.f32 %v1038
        %v1041 = vcvt.s32.f32 %v1039
        %v1042 = vsub.f32 1.0, %v1040
        %v1043 = vsub.f32 1.0, %v1041
        %v1044 = vmul.f32 %v1034, %v1042
        %v1045 = vmul.f32 %v1035, %v1043
        %vm1046 = vcmask 57344
        %1047 = vst.msk [vmem:[#allocation3] sm:$0x1] %vm1046, %v1044
        %1048 = vst.msk [vmem:[#allocation3 + $0x1] sm:$0x1] %vm1046, %v1045
        %v1049 = vadd.f32 %v1040, %v1041
        %v1050 = vld [vmem:[#allocation4] sm:$0x1]
        %v1051 = vadd.f32 %v1050, %v1049
        %vm1052 = vcmp.ge.f32.partialorder %v1051, 1.0
        %v1053 = vsel %vm1052, 1, 0
        %v1054 = vcvt.s32.f32 %v1053
        %v1055 = vsub.f32 1.0, %v1054
        %v1056 = vmul.f32 %v1051, %v1055
        %1057 = vst.msk [vmem:[#allocation4] sm:$0x1] %vm1046, %v1056
        %v1059 = vlaneseq
        %v1060 = vshrl.u32 %v1059, 7
        %v1061 = vsub.s32 0, %v1060
        %v1062 = vrot.slane %v1054, %v1061
        %1063 = vset.pattern.permute.xlu0 0
        %1064 = vperm.xlu0 %1063, %v1062
        %v1065 = vpop.permute.xlu0 %1064
        %v1067 = vmul.f32 %v1065, %v352
        %v1068 = vmul.f32 %v1065, %v353
        %1069 = vset.pattern.permute.xlu0 1
        %1070 = vperm.xlu0 %1069, %v1062
        %v1071 = vpop.permute.xlu0 %1070
        %v1073 = vmul.f32 %v1071, %v354
        %v1074 = vmul.f32 %v1071, %v355
        %1075 = vset.pattern.permute.xlu0 2
        %1076 = vperm.xlu0 %1075, %v1062
        %v1077 = vpop.permute.xlu0 %1076
        %v1079 = vmul.f32 %v1077, %v356
        %v1080 = vmul.f32 %v1077, %v357
        %1081 = vset.pattern.permute.xlu0 3
        %1082 = vperm.xlu0 %1081, %v1062
        %v1083 = vpop.permute.xlu0 %1082
        %v1085 = vmul.f32 %v1083, %v358
        %v1086 = vmul.f32 %v1083, %v359
        %1087 = vset.pattern.permute.xlu0 4
        %1088 = vperm.xlu0 %1087, %v1062
        %v1089 = vpop.permute.xlu0 %1088
        %v1091 = vmul.f32 %v1089, %v360
        %v1092 = vmul.f32 %v1089, %v361
        %1093 = vset.pattern.permute.xlu0 5
        %1094 = vperm.xlu0 %1093, %v1062
        %v1095 = vpop.permute.xlu0 %1094
        %v1097 = vmul.f32 %v1095, %v362
        %v1098 = vmul.f32 %v1095, %v363
        %1099 = vset.pattern.permute.xlu0 6
        %1100 = vperm.xlu0 %1099, %v1062
        %v1101 = vpop.permute.xlu0 %1100
        %v1103 = vmul.f32 %v1101, %v364
        %v1104 = vmul.f32 %v1101, %v365
        %1105 = vset.pattern.permute.xlu0 7
        %1106 = vperm.xlu0 %1105, %v1062
        %v1107 = vpop.permute.xlu0 %1106
        %v1109 = vmul.f32 %v1107, %v366
        %v1110 = vmul.f32 %v1107, %v367
        %v1111 = vmax.f32 %v1067, %v1073
        %v1112 = vmax.f32 %v1068, %v1074
        %v1113 = vadd.f32 %v1067, %v1073
        %v1114 = vadd.f32 %v1068, %v1074
        %v1115 = vmax.f32 %v1111, %v1079
        %v1116 = vmax.f32 %v1112, %v1080
        %v1117 = vadd.f32 %v1113, %v1079
        %v1118 = vadd.f32 %v1114, %v1080
        %v1119 = vmax.f32 %v1115, %v1085
        %v1120 = vmax.f32 %v1116, %v1086
        %v1121 = vadd.f32 %v1117, %v1085
        %v1122 = vadd.f32 %v1118, %v1086
        %v1123 = vmax.f32 %v1119, %v1091
        %v1124 = vmax.f32 %v1120, %v1092
        %v1125 = vadd.f32 %v1121, %v1091
        %v1126 = vadd.f32 %v1122, %v1092
        %v1127 = vmax.f32 %v1123, %v1097
        %v1128 = vmax.f32 %v1124, %v1098
        %v1129 = vadd.f32 %v1125, %v1097
        %v1130 = vadd.f32 %v1126, %v1098
        %v1131 = vmax.f32 %v1127, %v1103
        %v1132 = vmax.f32 %v1128, %v1104
        %v1133 = vadd.f32 %v1129, %v1103
        %v1134 = vadd.f32 %v1130, %v1104
        %v1135 = vmax.f32 %v1131, %v1109
        %v1136 = vmax.f32 %v1132, %v1110
        %v1137 = vadd.f32 %v1133, %v1109
        %v1138 = vadd.f32 %v1134, %v1110
        %1141 = vrot.lane.b32.xlu0 %v1135, 3
        %v1142 = vpop.permute.xlu0 %1141
        %1143 = vrot.lane.b32.xlu0 %v1136, 3
        %v1144 = vpop.permute.xlu0 %1143
        %vm1147 = vcmask 154648
        %1148 = vst.msk [vmem:[#allocation6 + $0x3] sm:$0xff] %vm1147, %v1142
        %1149 = vst.msk [vmem:[#allocation6 + $0xb] sm:$0xff] %vm1147, %v1144
        %v1150 = vmul.f32 %v1137, 0.125
        %v1151 = vmul.f32 %v1138, 0.125
        %1154 = vrot.lane.b32.xlu0 %v1150, 3
        %v1155 = vpop.permute.xlu0 %1154
        %1156 = vrot.lane.b32.xlu0 %v1151, 3
        %v1157 = vpop.permute.xlu0 %1156
        %s1160 = scalar_lea.vmem [#allocation6], 24
        %1161 = vst.msk [vmem:[%s1160 + $0x3] sm:$0xff] %vm1147, %v1155
        %1162 = vst.msk [vmem:[%s1160 + $0xb] sm:$0xff] %vm1147, %v1157
        %s1163 = sld [smem:[#allocation7]]
        %v1164 = vstv %s1163
        %v1165 = vadd.f32 %v1164, 0.0
        %s1166 = sld [smem:[#allocation12]]
        %v1167 = vld [vmem:[#allocation6] sm:$0xff]
        %v1168 = vld [vmem:[#allocation6 + $0x8] sm:$0xff]
        %v1169 = vstv %s1166
        %v1170 = vmul.f32 %v1169, %v1167
        %v1171 = vmul.f32 %v1169, %v1168
        %v1172 = vadd.f32 %v1165, %v1170
        %v1173 = vadd.f32 %v1165, %v1171
        %s1174 = sld [smem:[#allocation12 + $0x1]]
        %v1175 = vstv %s1174
        %v1176 = vmul.f32 %v1175, %v1167
        %v1177 = vmul.f32 %v1175, %v1168
        %1180 = vrot.lane.b32.xlu0 %v1176, 127
        %v1181 = vpop.permute.xlu0 %1180
        %1182 = vrot.lane.b32.xlu0 %v1177, 127
        %v1183 = vpop.permute.xlu0 %1182
        %v1186 = vadd.f32 %v1172, %v1181
        %v1187 = vadd.f32 %v1173, %v1183
        %s1188 = sld [smem:[#allocation12 + $0x2]]
        %v1189 = vstv %s1188
        %v1190 = vmul.f32 %v1189, %v1167
        %v1191 = vmul.f32 %v1189, %v1168
        %1194 = vrot.lane.b32.xlu0 %v1190, 126
        %v1195 = vpop.permute.xlu0 %1194
        %1196 = vrot.lane.b32.xlu0 %v1191, 126
        %v1197 = vpop.permute.xlu0 %1196
        %v1200 = vadd.f32 %v1186, %v1195
        %v1201 = vadd.f32 %v1187, %v1197
        %s1202 = sld [smem:[#allocation12 + $0x3]]
        %v1203 = vstv %s1202
        %v1204 = vmul.f32 %v1203, %v1167
        %v1205 = vmul.f32 %v1203, %v1168
        %1208 = vrot.lane.b32.xlu0 %v1204, 125
        %v1209 = vpop.permute.xlu0 %1208
        %1210 = vrot.lane.b32.xlu0 %v1205, 125
        %v1211 = vpop.permute.xlu0 %1210
        %v1214 = vadd.f32 %v1200, %v1209
        %v1215 = vadd.f32 %v1201, %v1211
        %s1216 = sld [smem:[#allocation12 + $0x4]]
        %v1217 = vstv %s1216
        %v1218 = vmul.f32 %v1217, %v1167
        %v1219 = vmul.f32 %v1217, %v1168
        %1222 = vrot.lane.b32.xlu0 %v1218, 124
        %v1223 = vpop.permute.xlu0 %1222
        %1224 = vrot.lane.b32.xlu0 %v1219, 124
        %v1225 = vpop.permute.xlu0 %1224
        %v1228 = vadd.f32 %v1214, %v1223
        %v1229 = vadd.f32 %v1215, %v1225
        %s1230 = sld [smem:[#allocation12 + $0x5]]
        %v1231 = vstv %s1230
        %v1232 = vmul.f32 %v1231, %v1167
        %v1233 = vmul.f32 %v1231, %v1168
        %1236 = vrot.lane.b32.xlu0 %v1232, 123
        %v1237 = vpop.permute.xlu0 %1236
        %1238 = vrot.lane.b32.xlu0 %v1233, 123
        %v1239 = vpop.permute.xlu0 %1238
        %v1242 = vadd.f32 %v1228, %v1237
        %v1243 = vadd.f32 %v1229, %v1239
        %s1244 = sld [smem:[#allocation12 + $0x6]]
        %v1245 = vstv %s1244
        %v1246 = vmul.f32 %v1245, %v1167
        %v1247 = vmul.f32 %v1245, %v1168
        %1250 = vrot.lane.b32.xlu0 %v1246, 122
        %v1251 = vpop.permute.xlu0 %1250
        %1252 = vrot.lane.b32.xlu0 %v1247, 122
        %v1253 = vpop.permute.xlu0 %1252
        %v1256 = vadd.f32 %v1242, %v1251
        %v1257 = vadd.f32 %v1243, %v1253
        %s1258 = sld [smem:[#allocation12 + $0x7]]
        %v1259 = vld [vmem:[#allocation6 + $0x1] sm:$0xff]
        %v1260 = vld [vmem:[#allocation6 + $0x9] sm:$0xff]
        %v1261 = vstv %s1258
        %v1262 = vmul.f32 %v1261, %v1259
        %v1263 = vmul.f32 %v1261, %v1260
        %v1264 = vadd.f32 %v1256, %v1262
        %v1265 = vadd.f32 %v1257, %v1263
        %s1266 = sld [smem:[#allocation12 + $0x8]]
        %v1267 = vstv %s1266
        %v1268 = vmul.f32 %v1267, %v1259
        %v1269 = vmul.f32 %v1267, %v1260
        %1272 = vrot.lane.b32.xlu0 %v1268, 127
        %v1273 = vpop.permute.xlu0 %1272
        %1274 = vrot.lane.b32.xlu0 %v1269, 127
        %v1275 = vpop.permute.xlu0 %1274
        %v1278 = vadd.f32 %v1264, %v1273
        %v1279 = vadd.f32 %v1265, %v1275
        %s1280 = sld [smem:[#allocation12 + $0x9]]
        %v1281 = vstv %s1280
        %v1282 = vmul.f32 %v1281, %v1259
        %v1283 = vmul.f32 %v1281, %v1260
        %1286 = vrot.lane.b32.xlu0 %v1282, 126
        %v1287 = vpop.permute.xlu0 %1286
        %1288 = vrot.lane.b32.xlu0 %v1283, 126
        %v1289 = vpop.permute.xlu0 %1288
        %v1292 = vadd.f32 %v1278, %v1287
        %v1293 = vadd.f32 %v1279, %v1289
        %s1294 = sld [smem:[#allocation12 + $0xa]]
        %v1295 = vstv %s1294
        %v1296 = vmul.f32 %v1295, %v1259
        %v1297 = vmul.f32 %v1295, %v1260
        %1300 = vrot.lane.b32.xlu0 %v1296, 125
        %v1301 = vpop.permute.xlu0 %1300
        %1302 = vrot.lane.b32.xlu0 %v1297, 125
        %v1303 = vpop.permute.xlu0 %1302
        %v1306 = vadd.f32 %v1292, %v1301
        %v1307 = vadd.f32 %v1293, %v1303
        %s1308 = sld [smem:[#allocation12 + $0xb]]
        %v1309 = vstv %s1308
        %v1310 = vmul.f32 %v1309, %v1259
        %v1311 = vmul.f32 %v1309, %v1260
        %1314 = vrot.lane.b32.xlu0 %v1310, 124
        %v1315 = vpop.permute.xlu0 %1314
        %1316 = vrot.lane.b32.xlu0 %v1311, 124
        %v1317 = vpop.permute.xlu0 %1316
        %v1320 = vadd.f32 %v1306, %v1315
        %v1321 = vadd.f32 %v1307, %v1317
        %s1322 = sld [smem:[#allocation12 + $0xc]]
        %v1323 = vstv %s1322
        %v1324 = vmul.f32 %v1323, %v1259
        %v1325 = vmul.f32 %v1323, %v1260
        %1328 = vrot.lane.b32.xlu0 %v1324, 123
        %v1329 = vpop.permute.xlu0 %1328
        %1330 = vrot.lane.b32.xlu0 %v1325, 123
        %v1331 = vpop.permute.xlu0 %1330
        %v1334 = vadd.f32 %v1320, %v1329
        %v1335 = vadd.f32 %v1321, %v1331
        %s1336 = sld [smem:[#allocation12 + $0xd]]
        %v1337 = vstv %s1336
        %v1338 = vmul.f32 %v1337, %v1259
        %v1339 = vmul.f32 %v1337, %v1260
        %1342 = vrot.lane.b32.xlu0 %v1338, 122
        %v1343 = vpop.permute.xlu0 %1342
        %1344 = vrot.lane.b32.xlu0 %v1339, 122
        %v1345 = vpop.permute.xlu0 %1344
        %v1348 = vadd.f32 %v1334, %v1343
        %v1349 = vadd.f32 %v1335, %v1345
        %s1350 = sld [smem:[#allocation12 + $0xe]]
        %v1351 = vld [vmem:[#allocation6 + $0x2] sm:$0xff]
        %v1352 = vld [vmem:[#allocation6 + $0xa] sm:$0xff]
        %v1353 = vstv %s1350
        %v1354 = vmul.f32 %v1353, %v1351
        %v1355 = vmul.f32 %v1353, %v1352
        %v1356 = vadd.f32 %v1348, %v1354
        %v1357 = vadd.f32 %v1349, %v1355
        %s1358 = sld [smem:[#allocation12 + $0xf]]
        %v1359 = vstv %s1358
        %v1360 = vmul.f32 %v1359, %v1351
        %v1361 = vmul.f32 %v1359, %v1352
        %1364 = vrot.lane.b32.xlu0 %v1360, 127
        %v1365 = vpop.permute.xlu0 %1364
        %1366 = vrot.lane.b32.xlu0 %v1361, 127
        %v1367 = vpop.permute.xlu0 %1366
        %v1370 = vadd.f32 %v1356, %v1365
        %v1371 = vadd.f32 %v1357, %v1367
        %s1372 = sld [smem:[#allocation12 + $0x10]]
        %v1373 = vstv %s1372
        %v1374 = vmul.f32 %v1373, %v1351
        %v1375 = vmul.f32 %v1373, %v1352
        %1378 = vrot.lane.b32.xlu0 %v1374, 126
        %v1379 = vpop.permute.xlu0 %1378
        %1380 = vrot.lane.b32.xlu0 %v1375, 126
        %v1381 = vpop.permute.xlu0 %1380
        %v1384 = vadd.f32 %v1370, %v1379
        %v1385 = vadd.f32 %v1371, %v1381
        %s1386 = sld [smem:[#allocation12 + $0x11]]
        %v1387 = vstv %s1386
        %v1388 = vmul.f32 %v1387, %v1351
        %v1389 = vmul.f32 %v1387, %v1352
        %1392 = vrot.lane.b32.xlu0 %v1388, 125
        %v1393 = vpop.permute.xlu0 %1392
        %1394 = vrot.lane.b32.xlu0 %v1389, 125
        %v1395 = vpop.permute.xlu0 %1394
        %v1398 = vadd.f32 %v1384, %v1393
        %v1399 = vadd.f32 %v1385, %v1395
        %s1400 = sld [smem:[#allocation12 + $0x12]]
        %v1401 = vstv %s1400
        %v1402 = vmul.f32 %v1401, %v1351
        %v1403 = vmul.f32 %v1401, %v1352
        %1406 = vrot.lane.b32.xlu0 %v1402, 124
        %v1407 = vpop.permute.xlu0 %1406
        %1408 = vrot.lane.b32.xlu0 %v1403, 124
        %v1409 = vpop.permute.xlu0 %1408
        %v1412 = vadd.f32 %v1398, %v1407
        %v1413 = vadd.f32 %v1399, %v1409
        %s1414 = sld [smem:[#allocation12 + $0x13]]
        %v1415 = vstv %s1414
        %v1416 = vmul.f32 %v1415, %v1351
        %v1417 = vmul.f32 %v1415, %v1352
        %1420 = vrot.lane.b32.xlu0 %v1416, 123
        %v1421 = vpop.permute.xlu0 %1420
        %1422 = vrot.lane.b32.xlu0 %v1417, 123
        %v1423 = vpop.permute.xlu0 %1422
        %v1426 = vadd.f32 %v1412, %v1421
        %v1427 = vadd.f32 %v1413, %v1423
        %s1428 = sld [smem:[#allocation12 + $0x14]]
        %v1429 = vstv %s1428
        %v1430 = vmul.f32 %v1429, %v1351
        %v1431 = vmul.f32 %v1429, %v1352
        %1434 = vrot.lane.b32.xlu0 %v1430, 122
        %v1435 = vpop.permute.xlu0 %1434
        %1436 = vrot.lane.b32.xlu0 %v1431, 122
        %v1437 = vpop.permute.xlu0 %1436
        %v1440 = vadd.f32 %v1426, %v1435
        %v1441 = vadd.f32 %v1427, %v1437
        %s1442 = sld [smem:[#allocation12 + $0x15]]
        %v1443 = vld [vmem:[#allocation6 + $0x3] sm:$0xff]
        %v1444 = vld [vmem:[#allocation6 + $0xb] sm:$0xff]
        %v1445 = vstv %s1442
        %v1446 = vmul.f32 %v1445, %v1443
        %v1447 = vmul.f32 %v1445, %v1444
        %v1448 = vadd.f32 %v1440, %v1446
        %v1449 = vadd.f32 %v1441, %v1447
        %s1450 = sld [smem:[#allocation12 + $0x16]]
        %v1451 = vstv %s1450
        %v1452 = vmul.f32 %v1451, %v1443
        %v1453 = vmul.f32 %v1451, %v1444
        %1456 = vrot.lane.b32.xlu0 %v1452, 127
        %v1457 = vpop.permute.xlu0 %1456
        %1458 = vrot.lane.b32.xlu0 %v1453, 127
        %v1459 = vpop.permute.xlu0 %1458
        %v1462 = vadd.f32 %v1448, %v1457
        %v1463 = vadd.f32 %v1449, %v1459
        %s1464 = sld [smem:[#allocation12 + $0x17]]
        %v1465 = vstv %s1464
        %v1466 = vmul.f32 %v1465, %v1443
        %v1467 = vmul.f32 %v1465, %v1444
        %1470 = vrot.lane.b32.xlu0 %v1466, 126
        %v1471 = vpop.permute.xlu0 %1470
        %1472 = vrot.lane.b32.xlu0 %v1467, 126
        %v1473 = vpop.permute.xlu0 %1472
        %v1476 = vadd.f32 %v1462, %v1471
        %v1477 = vadd.f32 %v1463, %v1473
        %s1478 = sld [smem:[#allocation12 + $0x18]]
        %v1479 = vstv %s1478
        %v1480 = vmul.f32 %v1479, %v1443
        %v1481 = vmul.f32 %v1479, %v1444
        %1484 = vrot.lane.b32.xlu0 %v1480, 125
        %v1485 = vpop.permute.xlu0 %1484
        %1486 = vrot.lane.b32.xlu0 %v1481, 125
        %v1487 = vpop.permute.xlu0 %1486
        %v1490 = vadd.f32 %v1476, %v1485
        %v1491 = vadd.f32 %v1477, %v1487
        %s1492 = sld [smem:[#allocation12 + $0x19]]
        %v1493 = vstv %s1492
        %v1494 = vmul.f32 %v1493, %v1443
        %v1495 = vmul.f32 %v1493, %v1444
        %1498 = vrot.lane.b32.xlu0 %v1494, 124
        %v1499 = vpop.permute.xlu0 %1498
        %1500 = vrot.lane.b32.xlu0 %v1495, 124
        %v1501 = vpop.permute.xlu0 %1500
        %v1504 = vadd.f32 %v1490, %v1499
        %v1505 = vadd.f32 %v1491, %v1501
        %s1506 = sld [smem:[#allocation12 + $0x1a]]
        %v1507 = vstv %s1506
        %v1508 = vmul.f32 %v1507, %v1443
        %v1509 = vmul.f32 %v1507, %v1444
        %1512 = vrot.lane.b32.xlu0 %v1508, 123
        %v1513 = vpop.permute.xlu0 %1512
        %1514 = vrot.lane.b32.xlu0 %v1509, 123
        %v1515 = vpop.permute.xlu0 %1514
        %v1518 = vadd.f32 %v1504, %v1513
        %v1519 = vadd.f32 %v1505, %v1515
        %s1520 = sld [smem:[#allocation12 + $0x1b]]
        %v1521 = vstv %s1520
        %v1522 = vmul.f32 %v1521, %v1443
        %v1523 = vmul.f32 %v1521, %v1444
        %1526 = vrot.lane.b32.xlu0 %v1522, 122
        %v1527 = vpop.permute.xlu0 %1526
        %1528 = vrot.lane.b32.xlu0 %v1523, 122
        %v1529 = vpop.permute.xlu0 %1528
        %v1532 = vadd.f32 %v1518, %v1527
        %v1533 = vadd.f32 %v1519, %v1529
        %s1534 = sld [smem:[#allocation12 + $0x1c]]
        %v1535 = vld [vmem:[#allocation6 + $0x4] sm:$0xff]
        %v1536 = vld [vmem:[#allocation6 + $0xc] sm:$0xff]
        %v1537 = vstv %s1534
        %v1538 = vmul.f32 %v1537, %v1535
        %v1539 = vmul.f32 %v1537, %v1536
        %v1540 = vadd.f32 %v1532, %v1538
        %v1541 = vadd.f32 %v1533, %v1539
        %s1542 = sld [smem:[#allocation12 + $0x1d]]
        %v1543 = vstv %s1542
        %v1544 = vmul.f32 %v1543, %v1535
        %v1545 = vmul.f32 %v1543, %v1536
        %1548 = vrot.lane.b32.xlu0 %v1544, 127
        %v1549 = vpop.permute.xlu0 %1548
        %1550 = vrot.lane.b32.xlu0 %v1545, 127
        %v1551 = vpop.permute.xlu0 %1550
        %v1554 = vadd.f32 %v1540, %v1549
        %v1555 = vadd.f32 %v1541, %v1551
        %s1556 = sld [smem:[#allocation12 + $0x1e]]
        %v1557 = vstv %s1556
        %v1558 = vmul.f32 %v1557, %v1535
        %v1559 = vmul.f32 %v1557, %v1536
        %1562 = vrot.lane.b32.xlu0 %v1558, 126
        %v1563 = vpop.permute.xlu0 %1562
        %1564 = vrot.lane.b32.xlu0 %v1559, 126
        %v1565 = vpop.permute.xlu0 %1564
        %v1568 = vadd.f32 %v1554, %v1563
        %v1569 = vadd.f32 %v1555, %v1565
        %s1570 = sld [smem:[#allocation12 + $0x1f]]
        %v1571 = vstv %s1570
        %v1572 = vmul.f32 %v1571, %v1535
        %v1573 = vmul.f32 %v1571, %v1536
        %1576 = vrot.lane.b32.xlu0 %v1572, 125
        %v1577 = vpop.permute.xlu0 %1576
        %1578 = vrot.lane.b32.xlu0 %v1573, 125
        %v1579 = vpop.permute.xlu0 %1578
        %v1582 = vadd.f32 %v1568, %v1577
        %v1583 = vadd.f32 %v1569, %v1579
        %s1584 = sld [smem:[#allocation12 + $0x20]]
        %v1585 = vstv %s1584
        %v1586 = vmul.f32 %v1585, %v1535
        %v1587 = vmul.f32 %v1585, %v1536
        %1590 = vrot.lane.b32.xlu0 %v1586, 124
        %v1591 = vpop.permute.xlu0 %1590
        %1592 = vrot.lane.b32.xlu0 %v1587, 124
        %v1593 = vpop.permute.xlu0 %1592
        %v1596 = vadd.f32 %v1582, %v1591
        %v1597 = vadd.f32 %v1583, %v1593
        %s1598 = sld [smem:[#allocation12 + $0x21]]
        %v1599 = vstv %s1598
        %v1600 = vmul.f32 %v1599, %v1535
        %v1601 = vmul.f32 %v1599, %v1536
        %1604 = vrot.lane.b32.xlu0 %v1600, 123
        %v1605 = vpop.permute.xlu0 %1604
        %1606 = vrot.lane.b32.xlu0 %v1601, 123
        %v1607 = vpop.permute.xlu0 %1606
        %v1610 = vadd.f32 %v1596, %v1605
        %v1611 = vadd.f32 %v1597, %v1607
        %s1612 = sld [smem:[#allocation12 + $0x22]]
        %v1613 = vstv %s1612
        %v1614 = vmul.f32 %v1613, %v1535
        %v1615 = vmul.f32 %v1613, %v1536
        %1618 = vrot.lane.b32.xlu0 %v1614, 122
        %v1619 = vpop.permute.xlu0 %1618
        %1620 = vrot.lane.b32.xlu0 %v1615, 122
        %v1621 = vpop.permute.xlu0 %1620
        %v1624 = vadd.f32 %v1610, %v1619
        %v1625 = vadd.f32 %v1611, %v1621
        %s1626 = sld [smem:[#allocation12 + $0x23]]
        %v1627 = vld [vmem:[#allocation6 + $0x5] sm:$0xff]
        %v1628 = vld [vmem:[#allocation6 + $0xd] sm:$0xff]
        %v1629 = vstv %s1626
        %v1630 = vmul.f32 %v1629, %v1627
        %v1631 = vmul.f32 %v1629, %v1628
        %v1632 = vadd.f32 %v1624, %v1630
        %v1633 = vadd.f32 %v1625, %v1631
        %s1634 = sld [smem:[#allocation12 + $0x24]]
        %v1635 = vstv %s1634
        %v1636 = vmul.f32 %v1635, %v1627
        %v1637 = vmul.f32 %v1635, %v1628
        %1640 = vrot.lane.b32.xlu0 %v1636, 127
        %v1641 = vpop.permute.xlu0 %1640
        %1642 = vrot.lane.b32.xlu0 %v1637, 127
        %v1643 = vpop.permute.xlu0 %1642
        %v1646 = vadd.f32 %v1632, %v1641
        %v1647 = vadd.f32 %v1633, %v1643
        %s1648 = sld [smem:[#allocation12 + $0x25]]
        %v1649 = vstv %s1648
        %v1650 = vmul.f32 %v1649, %v1627
        %v1651 = vmul.f32 %v1649, %v1628
        %1654 = vrot.lane.b32.xlu0 %v1650, 126
        %v1655 = vpop.permute.xlu0 %1654
        %1656 = vrot.lane.b32.xlu0 %v1651, 126
        %v1657 = vpop.permute.xlu0 %1656
        %v1660 = vadd.f32 %v1646, %v1655
        %v1661 = vadd.f32 %v1647, %v1657
        %s1662 = sld [smem:[#allocation12 + $0x26]]
        %v1663 = vstv %s1662
        %v1664 = vmul.f32 %v1663, %v1627
        %v1665 = vmul.f32 %v1663, %v1628
        %1668 = vrot.lane.b32.xlu0 %v1664, 125
        %v1669 = vpop.permute.xlu0 %1668
        %1670 = vrot.lane.b32.xlu0 %v1665, 125
        %v1671 = vpop.permute.xlu0 %1670
        %v1674 = vadd.f32 %v1660, %v1669
        %v1675 = vadd.f32 %v1661, %v1671
        %s1676 = sld [smem:[#allocation12 + $0x27]]
        %v1677 = vstv %s1676
        %v1678 = vmul.f32 %v1677, %v1627
        %v1679 = vmul.f32 %v1677, %v1628
        %1682 = vrot.lane.b32.xlu0 %v1678, 124
        %v1683 = vpop.permute.xlu0 %1682
        %1684 = vrot.lane.b32.xlu0 %v1679, 124
        %v1685 = vpop.permute.xlu0 %1684
        %v1688 = vadd.f32 %v1674, %v1683
        %v1689 = vadd.f32 %v1675, %v1685
        %s1690 = sld [smem:[#allocation12 + $0x28]]
        %v1691 = vstv %s1690
        %v1692 = vmul.f32 %v1691, %v1627
        %v1693 = vmul.f32 %v1691, %v1628
        %1696 = vrot.lane.b32.xlu0 %v1692, 123
        %v1697 = vpop.permute.xlu0 %1696
        %1698 = vrot.lane.b32.xlu0 %v1693, 123
        %v1699 = vpop.permute.xlu0 %1698
        %v1702 = vadd.f32 %v1688, %v1697
        %v1703 = vadd.f32 %v1689, %v1699
        %s1704 = sld [smem:[#allocation12 + $0x29]]
        %v1705 = vstv %s1704
        %v1706 = vmul.f32 %v1705, %v1627
        %v1707 = vmul.f32 %v1705, %v1628
        %1710 = vrot.lane.b32.xlu0 %v1706, 122
        %v1711 = vpop.permute.xlu0 %1710
        %1712 = vrot.lane.b32.xlu0 %v1707, 122
        %v1713 = vpop.permute.xlu0 %1712
        %v1716 = vadd.f32 %v1702, %v1711
        %v1717 = vadd.f32 %v1703, %v1713
        %s1718 = sld [smem:[#allocation12 + $0x2a]]
        %v1719 = vld [vmem:[#allocation6 + $0x6] sm:$0xff]
        %v1720 = vld [vmem:[#allocation6 + $0xe] sm:$0xff]
        %v1721 = vstv %s1718
        %v1722 = vmul.f32 %v1721, %v1719
        %v1723 = vmul.f32 %v1721, %v1720
        %v1724 = vadd.f32 %v1716, %v1722
        %v1725 = vadd.f32 %v1717, %v1723
        %s1726 = sld [smem:[#allocation12 + $0x2b]]
        %v1727 = vstv %s1726
        %v1728 = vmul.f32 %v1727, %v1719
        %v1729 = vmul.f32 %v1727, %v1720
        %1732 = vrot.lane.b32.xlu0 %v1728, 127
        %v1733 = vpop.permute.xlu0 %1732
        %1734 = vrot.lane.b32.xlu0 %v1729, 127
        %v1735 = vpop.permute.xlu0 %1734
        %v1738 = vadd.f32 %v1724, %v1733
        %v1739 = vadd.f32 %v1725, %v1735
        %s1740 = sld [smem:[#allocation12 + $0x2c]]
        %v1741 = vstv %s1740
        %v1742 = vmul.f32 %v1741, %v1719
        %v1743 = vmul.f32 %v1741, %v1720
        %1746 = vrot.lane.b32.xlu0 %v1742, 126
        %v1747 = vpop.permute.xlu0 %1746
        %1748 = vrot.lane.b32.xlu0 %v1743, 126
        %v1749 = vpop.permute.xlu0 %1748
        %v1752 = vadd.f32 %v1738, %v1747
        %v1753 = vadd.f32 %v1739, %v1749
        %s1754 = sld [smem:[#allocation12 + $0x2d]]
        %v1755 = vstv %s1754
        %v1756 = vmul.f32 %v1755, %v1719
        %v1757 = vmul.f32 %v1755, %v1720
        %1760 = vrot.lane.b32.xlu0 %v1756, 125
        %v1761 = vpop.permute.xlu0 %1760
        %1762 = vrot.lane.b32.xlu0 %v1757, 125
        %v1763 = vpop.permute.xlu0 %1762
        %v1766 = vadd.f32 %v1752, %v1761
        %v1767 = vadd.f32 %v1753, %v1763
        %s1768 = sld [smem:[#allocation12 + $0x2e]]
        %v1769 = vstv %s1768
        %v1770 = vmul.f32 %v1769, %v1719
        %v1771 = vmul.f32 %v1769, %v1720
        %1774 = vrot.lane.b32.xlu0 %v1770, 124
        %v1775 = vpop.permute.xlu0 %1774
        %1776 = vrot.lane.b32.xlu0 %v1771, 124
        %v1777 = vpop.permute.xlu0 %1776
        %v1780 = vadd.f32 %v1766, %v1775
        %v1781 = vadd.f32 %v1767, %v1777
        %s1782 = sld [smem:[#allocation12 + $0x2f]]
        %v1783 = vstv %s1782
        %v1784 = vmul.f32 %v1783, %v1719
        %v1785 = vmul.f32 %v1783, %v1720
        %1788 = vrot.lane.b32.xlu0 %v1784, 123
        %v1789 = vpop.permute.xlu0 %1788
        %1790 = vrot.lane.b32.xlu0 %v1785, 123
        %v1791 = vpop.permute.xlu0 %1790
        %v1794 = vadd.f32 %v1780, %v1789
        %v1795 = vadd.f32 %v1781, %v1791
        %s1796 = sld [smem:[#allocation12 + $0x30]]
        %v1797 = vstv %s1796
        %v1798 = vmul.f32 %v1797, %v1719
        %v1799 = vmul.f32 %v1797, %v1720
        %1802 = vrot.lane.b32.xlu0 %v1798, 122
        %v1803 = vpop.permute.xlu0 %1802
        %1804 = vrot.lane.b32.xlu0 %v1799, 122
        %v1805 = vpop.permute.xlu0 %1804
        %v1808 = vadd.f32 %v1794, %v1803
        %v1809 = vadd.f32 %v1795, %v1805
        %s1810 = sld [smem:[#allocation12 + $0x31]]
        %v1811 = vld [vmem:[%s1160] sm:$0xff]
        %v1812 = vld [vmem:[%s1160 + $0x8] sm:$0xff]
        %v1813 = vstv %s1810
        %v1814 = vmul.f32 %v1813, %v1811
        %v1815 = vmul.f32 %v1813, %v1812
        %v1816 = vadd.f32 %v1808, %v1814
        %v1817 = vadd.f32 %v1809, %v1815
        %s1818 = sld [smem:[#allocation12 + $0x32]]
        %v1819 = vstv %s1818
        %v1820 = vmul.f32 %v1819, %v1811
        %v1821 = vmul.f32 %v1819, %v1812
        %1824 = vrot.lane.b32.xlu0 %v1820, 127
        %v1825 = vpop.permute.xlu0 %1824
        %1826 = vrot.lane.b32.xlu0 %v1821, 127
        %v1827 = vpop.permute.xlu0 %1826
        %v1830 = vadd.f32 %v1816, %v1825
        %v1831 = vadd.f32 %v1817, %v1827
        %s1832 = sld [smem:[#allocation12 + $0x33]]
        %v1833 = vstv %s1832
        %v1834 = vmul.f32 %v1833, %v1811
        %v1835 = vmul.f32 %v1833, %v1812
        %1838 = vrot.lane.b32.xlu0 %v1834, 126
        %v1839 = vpop.permute.xlu0 %1838
        %1840 = vrot.lane.b32.xlu0 %v1835, 126
        %v1841 = vpop.permute.xlu0 %1840
        %v1844 = vadd.f32 %v1830, %v1839
        %v1845 = vadd.f32 %v1831, %v1841
        %s1846 = sld [smem:[#allocation12 + $0x34]]
        %v1847 = vstv %s1846
        %v1848 = vmul.f32 %v1847, %v1811
        %v1849 = vmul.f32 %v1847, %v1812
        %1852 = vrot.lane.b32.xlu0 %v1848, 125
        %v1853 = vpop.permute.xlu0 %1852
        %1854 = vrot.lane.b32.xlu0 %v1849, 125
        %v1855 = vpop.permute.xlu0 %1854
        %v1858 = vadd.f32 %v1844, %v1853
        %v1859 = vadd.f32 %v1845, %v1855
        %s1860 = sld [smem:[#allocation12 + $0x35]]
        %v1861 = vstv %s1860
        %v1862 = vmul.f32 %v1861, %v1811
        %v1863 = vmul.f32 %v1861, %v1812
        %1866 = vrot.lane.b32.xlu0 %v1862, 124
        %v1867 = vpop.permute.xlu0 %1866
        %1868 = vrot.lane.b32.xlu0 %v1863, 124
        %v1869 = vpop.permute.xlu0 %1868
        %v1872 = vadd.f32 %v1858, %v1867
        %v1873 = vadd.f32 %v1859, %v1869
        %s1874 = sld [smem:[#allocation12 + $0x36]]
        %v1875 = vstv %s1874
        %v1876 = vmul.f32 %v1875, %v1811
        %v1877 = vmul.f32 %v1875, %v1812
        %1880 = vrot.lane.b32.xlu0 %v1876, 123
        %v1881 = vpop.permute.xlu0 %1880
        %1882 = vrot.lane.b32.xlu0 %v1877, 123
        %v1883 = vpop.permute.xlu0 %1882
        %v1886 = vadd.f32 %v1872, %v1881
        %v1887 = vadd.f32 %v1873, %v1883
        %s1888 = sld [smem:[#allocation12 + $0x37]]
        %v1889 = vstv %s1888
        %v1890 = vmul.f32 %v1889, %v1811
        %v1891 = vmul.f32 %v1889, %v1812
        %1894 = vrot.lane.b32.xlu0 %v1890, 122
        %v1895 = vpop.permute.xlu0 %1894
        %1896 = vrot.lane.b32.xlu0 %v1891, 122
        %v1897 = vpop.permute.xlu0 %1896
        %v1900 = vadd.f32 %v1886, %v1895
        %v1901 = vadd.f32 %v1887, %v1897
        %s1902 = sld [smem:[#allocation12 + $0x38]]
        %v1903 = vld [vmem:[%s1160 + $0x1] sm:$0xff]
        %v1904 = vld [vmem:[%s1160 + $0x9] sm:$0xff]
        %v1905 = vstv %s1902
        %v1906 = vmul.f32 %v1905, %v1903
        %v1907 = vmul.f32 %v1905, %v1904
        %v1908 = vadd.f32 %v1900, %v1906
        %v1909 = vadd.f32 %v1901, %v1907
        %s1910 = sld [smem:[#allocation12 + $0x39]]
        %v1911 = vstv %s1910
        %v1912 = vmul.f32 %v1911, %v1903
        %v1913 = vmul.f32 %v1911, %v1904
        %1916 = vrot.lane.b32.xlu0 %v1912, 127
        %v1917 = vpop.permute.xlu0 %1916
        %1918 = vrot.lane.b32.xlu0 %v1913, 127
        %v1919 = vpop.permute.xlu0 %1918
        %v1922 = vadd.f32 %v1908, %v1917
        %v1923 = vadd.f32 %v1909, %v1919
        %s1924 = sld [smem:[#allocation12 + $0x3a]]
        %v1925 = vstv %s1924
        %v1926 = vmul.f32 %v1925, %v1903
        %v1927 = vmul.f32 %v1925, %v1904
        %1930 = vrot.lane.b32.xlu0 %v1926, 126
        %v1931 = vpop.permute.xlu0 %1930
        %1932 = vrot.lane.b32.xlu0 %v1927, 126
        %v1933 = vpop.permute.xlu0 %1932
        %v1936 = vadd.f32 %v1922, %v1931
        %v1937 = vadd.f32 %v1923, %v1933
        %s1938 = sld [smem:[#allocation12 + $0x3b]]
        %v1939 = vstv %s1938
        %v1940 = vmul.f32 %v1939, %v1903
        %v1941 = vmul.f32 %v1939, %v1904
        %1944 = vrot.lane.b32.xlu0 %v1940, 125
        %v1945 = vpop.permute.xlu0 %1944
        %1946 = vrot.lane.b32.xlu0 %v1941, 125
        %v1947 = vpop.permute.xlu0 %1946
        %v1950 = vadd.f32 %v1936, %v1945
        %v1951 = vadd.f32 %v1937, %v1947
        %s1952 = sld [smem:[#allocation12 + $0x3c]]
        %v1953 = vstv %s1952
        %v1954 = vmul.f32 %v1953, %v1903
        %v1955 = vmul.f32 %v1953, %v1904
        %1958 = vrot.lane.b32.xlu0 %v1954, 124
        %v1959 = vpop.permute.xlu0 %1958
        %1960 = vrot.lane.b32.xlu0 %v1955, 124
        %v1961 = vpop.permute.xlu0 %1960
        %v1964 = vadd.f32 %v1950, %v1959
        %v1965 = vadd.f32 %v1951, %v1961
        %s1966 = sld [smem:[#allocation12 + $0x3d]]
        %v1967 = vstv %s1966
        %v1968 = vmul.f32 %v1967, %v1903
        %v1969 = vmul.f32 %v1967, %v1904
        %1972 = vrot.lane.b32.xlu0 %v1968, 123
        %v1973 = vpop.permute.xlu0 %1972
        %1974 = vrot.lane.b32.xlu0 %v1969, 123
        %v1975 = vpop.permute.xlu0 %1974
        %v1978 = vadd.f32 %v1964, %v1973
        %v1979 = vadd.f32 %v1965, %v1975
        %s1980 = sld [smem:[#allocation12 + $0x3e]]
        %v1981 = vstv %s1980
        %v1982 = vmul.f32 %v1981, %v1903
        %v1983 = vmul.f32 %v1981, %v1904
        %1986 = vrot.lane.b32.xlu0 %v1982, 122
        %v1987 = vpop.permute.xlu0 %1986
        %1988 = vrot.lane.b32.xlu0 %v1983, 122
        %v1989 = vpop.permute.xlu0 %1988
        %v1992 = vadd.f32 %v1978, %v1987
        %v1993 = vadd.f32 %v1979, %v1989
        %s1994 = sld [smem:[#allocation12 + $0x3f]]
        %v1995 = vld [vmem:[%s1160 + $0x2] sm:$0xff]
        %v1996 = vld [vmem:[%s1160 + $0xa] sm:$0xff]
        %v1997 = vstv %s1994
        %v1998 = vmul.f32 %v1997, %v1995
        %v1999 = vmul.f32 %v1997, %v1996
        %v2000 = vadd.f32 %v1992, %v1998
        %v2001 = vadd.f32 %v1993, %v1999
        %s2002 = sld [smem:[#allocation12 + $0x40]]
        %v2003 = vstv %s2002
        %v2004 = vmul.f32 %v2003, %v1995
        %v2005 = vmul.f32 %v2003, %v1996
        %2008 = vrot.lane.b32.xlu0 %v2004, 127
        %v2009 = vpop.permute.xlu0 %2008
        %2010 = vrot.lane.b32.xlu0 %v2005, 127
        %v2011 = vpop.permute.xlu0 %2010
        %v2014 = vadd.f32 %v2000, %v2009
        %v2015 = vadd.f32 %v2001, %v2011
        %s2016 = sld [smem:[#allocation12 + $0x41]]
        %v2017 = vstv %s2016
        %v2018 = vmul.f32 %v2017, %v1995
        %v2019 = vmul.f32 %v2017, %v1996
        %2022 = vrot.lane.b32.xlu0 %v2018, 126
        %v2023 = vpop.permute.xlu0 %2022
        %2024 = vrot.lane.b32.xlu0 %v2019, 126
        %v2025 = vpop.permute.xlu0 %2024
        %v2028 = vadd.f32 %v2014, %v2023
        %v2029 = vadd.f32 %v2015, %v2025
        %s2030 = sld [smem:[#allocation12 + $0x42]]
        %v2031 = vstv %s2030
        %v2032 = vmul.f32 %v2031, %v1995
        %v2033 = vmul.f32 %v2031, %v1996
        %2036 = vrot.lane.b32.xlu0 %v2032, 125
        %v2037 = vpop.permute.xlu0 %2036
        %2038 = vrot.lane.b32.xlu0 %v2033, 125
        %v2039 = vpop.permute.xlu0 %2038
        %v2042 = vadd.f32 %v2028, %v2037
        %v2043 = vadd.f32 %v2029, %v2039
        %s2044 = sld [smem:[#allocation12 + $0x43]]
        %v2045 = vstv %s2044
        %v2046 = vmul.f32 %v2045, %v1995
        %v2047 = vmul.f32 %v2045, %v1996
        %2050 = vrot.lane.b32.xlu0 %v2046, 124
        %v2051 = vpop.permute.xlu0 %2050
        %2052 = vrot.lane.b32.xlu0 %v2047, 124
        %v2053 = vpop.permute.xlu0 %2052
        %v2056 = vadd.f32 %v2042, %v2051
        %v2057 = vadd.f32 %v2043, %v2053
        %s2058 = sld [smem:[#allocation12 + $0x44]]
        %v2059 = vstv %s2058
        %v2060 = vmul.f32 %v2059, %v1995
        %v2061 = vmul.f32 %v2059, %v1996
        %2064 = vrot.lane.b32.xlu0 %v2060, 123
        %v2065 = vpop.permute.xlu0 %2064
        %2066 = vrot.lane.b32.xlu0 %v2061, 123
        %v2067 = vpop.permute.xlu0 %2066
        %v2070 = vadd.f32 %v2056, %v2065
        %v2071 = vadd.f32 %v2057, %v2067
        %s2072 = sld [smem:[#allocation12 + $0x45]]
        %v2073 = vstv %s2072
        %v2074 = vmul.f32 %v2073, %v1995
        %v2075 = vmul.f32 %v2073, %v1996
        %2078 = vrot.lane.b32.xlu0 %v2074, 122
        %v2079 = vpop.permute.xlu0 %2078
        %2080 = vrot.lane.b32.xlu0 %v2075, 122
        %v2081 = vpop.permute.xlu0 %2080
        %v2084 = vadd.f32 %v2070, %v2079
        %v2085 = vadd.f32 %v2071, %v2081
        %s2086 = sld [smem:[#allocation12 + $0x46]]
        %v2087 = vld [vmem:[%s1160 + $0x3] sm:$0xff]
        %v2088 = vld [vmem:[%s1160 + $0xb] sm:$0xff]
        %v2089 = vstv %s2086
        %v2090 = vmul.f32 %v2089, %v2087
        %v2091 = vmul.f32 %v2089, %v2088
        %v2092 = vadd.f32 %v2084, %v2090
        %v2093 = vadd.f32 %v2085, %v2091
        %s2094 = sld [smem:[#allocation12 + $0x47]]
        %v2095 = vstv %s2094
        %v2096 = vmul.f32 %v2095, %v2087
        %v2097 = vmul.f32 %v2095, %v2088
        %2100 = vrot.lane.b32.xlu0 %v2096, 127
        %v2101 = vpop.permute.xlu0 %2100
        %2102 = vrot.lane.b32.xlu0 %v2097, 127
        %v2103 = vpop.permute.xlu0 %2102
        %v2106 = vadd.f32 %v2092, %v2101
        %v2107 = vadd.f32 %v2093, %v2103
        %s2108 = sld [smem:[#allocation12 + $0x48]]
        %v2109 = vstv %s2108
        %v2110 = vmul.f32 %v2109, %v2087
        %v2111 = vmul.f32 %v2109, %v2088
        %2114 = vrot.lane.b32.xlu0 %v2110, 126
        %v2115 = vpop.permute.xlu0 %2114
        %2116 = vrot.lane.b32.xlu0 %v2111, 126
        %v2117 = vpop.permute.xlu0 %2116
        %v2120 = vadd.f32 %v2106, %v2115
        %v2121 = vadd.f32 %v2107, %v2117
        %s2122 = sld [smem:[#allocation12 + $0x49]]
        %v2123 = vstv %s2122
        %v2124 = vmul.f32 %v2123, %v2087
        %v2125 = vmul.f32 %v2123, %v2088
        %2128 = vrot.lane.b32.xlu0 %v2124, 125
        %v2129 = vpop.permute.xlu0 %2128
        %2130 = vrot.lane.b32.xlu0 %v2125, 125
        %v2131 = vpop.permute.xlu0 %2130
        %v2134 = vadd.f32 %v2120, %v2129
        %v2135 = vadd.f32 %v2121, %v2131
        %s2136 = sld [smem:[#allocation12 + $0x4a]]
        %v2137 = vstv %s2136
        %v2138 = vmul.f32 %v2137, %v2087
        %v2139 = vmul.f32 %v2137, %v2088
        %2142 = vrot.lane.b32.xlu0 %v2138, 124
        %v2143 = vpop.permute.xlu0 %2142
        %2144 = vrot.lane.b32.xlu0 %v2139, 124
        %v2145 = vpop.permute.xlu0 %2144
        %v2148 = vadd.f32 %v2134, %v2143
        %v2149 = vadd.f32 %v2135, %v2145
        %s2150 = sld [smem:[#allocation12 + $0x4b]]
        %v2151 = vstv %s2150
        %v2152 = vmul.f32 %v2151, %v2087
        %v2153 = vmul.f32 %v2151, %v2088
        %2156 = vrot.lane.b32.xlu0 %v2152, 123
        %v2157 = vpop.permute.xlu0 %2156
        %2158 = vrot.lane.b32.xlu0 %v2153, 123
        %v2159 = vpop.permute.xlu0 %2158
        %v2162 = vadd.f32 %v2148, %v2157
        %v2163 = vadd.f32 %v2149, %v2159
        %s2164 = sld [smem:[#allocation12 + $0x4c]]
        %v2165 = vstv %s2164
        %v2166 = vmul.f32 %v2165, %v2087
        %v2167 = vmul.f32 %v2165, %v2088
        %2170 = vrot.lane.b32.xlu0 %v2166, 122
        %v2171 = vpop.permute.xlu0 %2170
        %2172 = vrot.lane.b32.xlu0 %v2167, 122
        %v2173 = vpop.permute.xlu0 %2172
        %v2176 = vadd.f32 %v2162, %v2171
        %v2177 = vadd.f32 %v2163, %v2173
        %s2178 = sld [smem:[#allocation12 + $0x4d]]
        %v2179 = vld [vmem:[%s1160 + $0x4] sm:$0xff]
        %v2180 = vld [vmem:[%s1160 + $0xc] sm:$0xff]
        %v2181 = vstv %s2178
        %v2182 = vmul.f32 %v2181, %v2179
        %v2183 = vmul.f32 %v2181, %v2180
        %v2184 = vadd.f32 %v2176, %v2182
        %v2185 = vadd.f32 %v2177, %v2183
        %s2186 = sld [smem:[#allocation12 + $0x4e]]
        %v2187 = vstv %s2186
        %v2188 = vmul.f32 %v2187, %v2179
        %v2189 = vmul.f32 %v2187, %v2180
        %2192 = vrot.lane.b32.xlu0 %v2188, 127
        %v2193 = vpop.permute.xlu0 %2192
        %2194 = vrot.lane.b32.xlu0 %v2189, 127
        %v2195 = vpop.permute.xlu0 %2194
        %v2198 = vadd.f32 %v2184, %v2193
        %v2199 = vadd.f32 %v2185, %v2195
        %s2200 = sld [smem:[#allocation12 + $0x4f]]
        %v2201 = vstv %s2200
        %v2202 = vmul.f32 %v2201, %v2179
        %v2203 = vmul.f32 %v2201, %v2180
        %2206 = vrot.lane.b32.xlu0 %v2202, 126
        %v2207 = vpop.permute.xlu0 %2206
        %2208 = vrot.lane.b32.xlu0 %v2203, 126
        %v2209 = vpop.permute.xlu0 %2208
        %v2212 = vadd.f32 %v2198, %v2207
        %v2213 = vadd.f32 %v2199, %v2209
        %s2214 = sld [smem:[#allocation12 + $0x50]]
        %v2215 = vstv %s2214
        %v2216 = vmul.f32 %v2215, %v2179
        %v2217 = vmul.f32 %v2215, %v2180
        %2220 = vrot.lane.b32.xlu0 %v2216, 125
        %v2221 = vpop.permute.xlu0 %2220
        %2222 = vrot.lane.b32.xlu0 %v2217, 125
        %v2223 = vpop.permute.xlu0 %2222
        %v2226 = vadd.f32 %v2212, %v2221
        %v2227 = vadd.f32 %v2213, %v2223
        %s2228 = sld [smem:[#allocation12 + $0x51]]
        %v2229 = vstv %s2228
        %v2230 = vmul.f32 %v2229, %v2179
        %v2231 = vmul.f32 %v2229, %v2180
        %2234 = vrot.lane.b32.xlu0 %v2230, 124
        %v2235 = vpop.permute.xlu0 %2234
        %2236 = vrot.lane.b32.xlu0 %v2231, 124
        %v2237 = vpop.permute.xlu0 %2236
        %v2240 = vadd.f32 %v2226, %v2235
        %v2241 = vadd.f32 %v2227, %v2237
        %s2242 = sld [smem:[#allocation12 + $0x52]]
        %v2243 = vstv %s2242
        %v2244 = vmul.f32 %v2243, %v2179
        %v2245 = vmul.f32 %v2243, %v2180
        %2248 = vrot.lane.b32.xlu0 %v2244, 123
        %v2249 = vpop.permute.xlu0 %2248
        %2250 = vrot.lane.b32.xlu0 %v2245, 123
        %v2251 = vpop.permute.xlu0 %2250
        %v2254 = vadd.f32 %v2240, %v2249
        %v2255 = vadd.f32 %v2241, %v2251
        %s2256 = sld [smem:[#allocation12 + $0x53]]
        %v2257 = vstv %s2256
        %v2258 = vmul.f32 %v2257, %v2179
        %v2259 = vmul.f32 %v2257, %v2180
        %2262 = vrot.lane.b32.xlu0 %v2258, 122
        %v2263 = vpop.permute.xlu0 %2262
        %2264 = vrot.lane.b32.xlu0 %v2259, 122
        %v2265 = vpop.permute.xlu0 %2264
        %v2268 = vadd.f32 %v2254, %v2263
        %v2269 = vadd.f32 %v2255, %v2265
        %s2270 = sld [smem:[#allocation12 + $0x54]]
        %v2271 = vld [vmem:[%s1160 + $0x5] sm:$0xff]
        %v2272 = vld [vmem:[%s1160 + $0xd] sm:$0xff]
        %v2273 = vstv %s2270
        %v2274 = vmul.f32 %v2273, %v2271
        %v2275 = vmul.f32 %v2273, %v2272
        %v2276 = vadd.f32 %v2268, %v2274
        %v2277 = vadd.f32 %v2269, %v2275
        %s2278 = sld [smem:[#allocation12 + $0x55]]
        %v2279 = vstv %s2278
        %v2280 = vmul.f32 %v2279, %v2271
        %v2281 = vmul.f32 %v2279, %v2272
        %2284 = vrot.lane.b32.xlu0 %v2280, 127
        %v2285 = vpop.permute.xlu0 %2284
        %2286 = vrot.lane.b32.xlu0 %v2281, 127
        %v2287 = vpop.permute.xlu0 %2286
        %v2290 = vadd.f32 %v2276, %v2285
        %v2291 = vadd.f32 %v2277, %v2287
        %s2292 = sld [smem:[#allocation12 + $0x56]]
        %v2293 = vstv %s2292
        %v2294 = vmul.f32 %v2293, %v2271
        %v2295 = vmul.f32 %v2293, %v2272
        %2298 = vrot.lane.b32.xlu0 %v2294, 126
        %v2299 = vpop.permute.xlu0 %2298
        %2300 = vrot.lane.b32.xlu0 %v2295, 126
        %v2301 = vpop.permute.xlu0 %2300
        %v2304 = vadd.f32 %v2290, %v2299
        %v2305 = vadd.f32 %v2291, %v2301
        %s2306 = sld [smem:[#allocation12 + $0x57]]
        %v2307 = vstv %s2306
        %v2308 = vmul.f32 %v2307, %v2271
        %v2309 = vmul.f32 %v2307, %v2272
        %2312 = vrot.lane.b32.xlu0 %v2308, 125
        %v2313 = vpop.permute.xlu0 %2312
        %2314 = vrot.lane.b32.xlu0 %v2309, 125
        %v2315 = vpop.permute.xlu0 %2314
        %v2318 = vadd.f32 %v2304, %v2313
        %v2319 = vadd.f32 %v2305, %v2315
        %s2320 = sld [smem:[#allocation12 + $0x58]]
        %v2321 = vstv %s2320
        %v2322 = vmul.f32 %v2321, %v2271
        %v2323 = vmul.f32 %v2321, %v2272
        %2326 = vrot.lane.b32.xlu0 %v2322, 124
        %v2327 = vpop.permute.xlu0 %2326
        %2328 = vrot.lane.b32.xlu0 %v2323, 124
        %v2329 = vpop.permute.xlu0 %2328
        %v2332 = vadd.f32 %v2318, %v2327
        %v2333 = vadd.f32 %v2319, %v2329
        %s2334 = sld [smem:[#allocation12 + $0x59]]
        %v2335 = vstv %s2334
        %v2336 = vmul.f32 %v2335, %v2271
        %v2337 = vmul.f32 %v2335, %v2272
        %2340 = vrot.lane.b32.xlu0 %v2336, 123
        %v2341 = vpop.permute.xlu0 %2340
        %2342 = vrot.lane.b32.xlu0 %v2337, 123
        %v2343 = vpop.permute.xlu0 %2342
        %v2346 = vadd.f32 %v2332, %v2341
        %v2347 = vadd.f32 %v2333, %v2343
        %s2348 = sld [smem:[#allocation12 + $0x5a]]
        %v2349 = vstv %s2348
        %v2350 = vmul.f32 %v2349, %v2271
        %v2351 = vmul.f32 %v2349, %v2272
        %2354 = vrot.lane.b32.xlu0 %v2350, 122
        %v2355 = vpop.permute.xlu0 %2354
        %2356 = vrot.lane.b32.xlu0 %v2351, 122
        %v2357 = vpop.permute.xlu0 %2356
        %v2360 = vadd.f32 %v2346, %v2355
        %v2361 = vadd.f32 %v2347, %v2357
        %s2362 = sld [smem:[#allocation12 + $0x5b]]
        %v2363 = vld [vmem:[%s1160 + $0x6] sm:$0xff]
        %v2364 = vld [vmem:[%s1160 + $0xe] sm:$0xff]
        %v2365 = vstv %s2362
        %v2366 = vmul.f32 %v2365, %v2363
        %v2367 = vmul.f32 %v2365, %v2364
        %v2368 = vadd.f32 %v2360, %v2366
        %v2369 = vadd.f32 %v2361, %v2367
        %s2370 = sld [smem:[#allocation12 + $0x5c]]
        %v2371 = vstv %s2370
        %v2372 = vmul.f32 %v2371, %v2363
        %v2373 = vmul.f32 %v2371, %v2364
        %2376 = vrot.lane.b32.xlu0 %v2372, 127
        %v2377 = vpop.permute.xlu0 %2376
        %2378 = vrot.lane.b32.xlu0 %v2373, 127
        %v2379 = vpop.permute.xlu0 %2378
        %v2382 = vadd.f32 %v2368, %v2377
        %v2383 = vadd.f32 %v2369, %v2379
        %s2384 = sld [smem:[#allocation12 + $0x5d]]
        %v2385 = vstv %s2384
        %v2386 = vmul.f32 %v2385, %v2363
        %v2387 = vmul.f32 %v2385, %v2364
        %2390 = vrot.lane.b32.xlu0 %v2386, 126
        %v2391 = vpop.permute.xlu0 %2390
        %2392 = vrot.lane.b32.xlu0 %v2387, 126
        %v2393 = vpop.permute.xlu0 %2392
        %v2396 = vadd.f32 %v2382, %v2391
        %v2397 = vadd.f32 %v2383, %v2393
        %s2398 = sld [smem:[#allocation12 + $0x5e]]
        %v2399 = vstv %s2398
        %v2400 = vmul.f32 %v2399, %v2363
        %v2401 = vmul.f32 %v2399, %v2364
        %2404 = vrot.lane.b32.xlu0 %v2400, 125
        %v2405 = vpop.permute.xlu0 %2404
        %2406 = vrot.lane.b32.xlu0 %v2401, 125
        %v2407 = vpop.permute.xlu0 %2406
        %v2410 = vadd.f32 %v2396, %v2405
        %v2411 = vadd.f32 %v2397, %v2407
        %s2412 = sld [smem:[#allocation12 + $0x5f]]
        %v2413 = vstv %s2412
        %v2414 = vmul.f32 %v2413, %v2363
        %v2415 = vmul.f32 %v2413, %v2364
        %2418 = vrot.lane.b32.xlu0 %v2414, 124
        %v2419 = vpop.permute.xlu0 %2418
        %2420 = vrot.lane.b32.xlu0 %v2415, 124
        %v2421 = vpop.permute.xlu0 %2420
        %v2424 = vadd.f32 %v2410, %v2419
        %v2425 = vadd.f32 %v2411, %v2421
        %s2426 = sld [smem:[#allocation12 + $0x60]]
        %v2427 = vstv %s2426
        %v2428 = vmul.f32 %v2427, %v2363
        %v2429 = vmul.f32 %v2427, %v2364
        %2432 = vrot.lane.b32.xlu0 %v2428, 123
        %v2433 = vpop.permute.xlu0 %2432
        %2434 = vrot.lane.b32.xlu0 %v2429, 123
        %v2435 = vpop.permute.xlu0 %2434
        %v2438 = vadd.f32 %v2424, %v2433
        %v2439 = vadd.f32 %v2425, %v2435
        %s2440 = sld [smem:[#allocation12 + $0x61]]
        %v2441 = vstv %s2440
        %v2442 = vmul.f32 %v2441, %v2363
        %v2443 = vmul.f32 %v2441, %v2364
        %2446 = vrot.lane.b32.xlu0 %v2442, 122
        %v2447 = vpop.permute.xlu0 %2446
        %2448 = vrot.lane.b32.xlu0 %v2443, 122
        %v2449 = vpop.permute.xlu0 %2448
        %v2452 = vadd.f32 %v2438, %v2447
        %v2453 = vadd.f32 %v2439, %v2449
        %v2454 = vld [vmem:[#allocation5] sm:$0xff]
        %v2455 = vld [vmem:[#allocation5 + $0x8] sm:$0xff]
        %v2456 = vadd.f32 %v2454, %v2452
        %v2457 = vadd.f32 %v2455, %v2453
        %vm2458 = vcmp.ge.f32.partialorder %v2456, 1.0
        %vm2459 = vcmp.ge.f32.partialorder %v2457, 1.0
        %v2460 = vsel %vm2458, 1, 0
        %v2461 = vsel %vm2459, 1, 0
        %v2462 = vcvt.s32.f32 %v2460
        %v2463 = vcvt.s32.f32 %v2461
        %v2464 = vsub.f32 1.0, %v2462
        %v2465 = vsub.f32 1.0, %v2463
        %v2466 = vmul.f32 %v2456, %v2464
        %v2467 = vmul.f32 %v2457, %v2465
        %2468 = vst.msk [vmem:[#allocation5] sm:$0xff] %vm368, %v2466
        %2469 = vst.msk [vmem:[#allocation5 + $0x8] sm:$0xff] %vm368, %v2467
        %v2470 = vmul.f32 %v2462, %v1067
        %v2471 = vmul.f32 %v2463, %v1068
        %v2472 = vmul.f32 %v2462, %v1073
        %v2473 = vmul.f32 %v2463, %v1074
        %v2474 = vmul.f32 %v2462, %v1079
        %v2475 = vmul.f32 %v2463, %v1080
        %v2476 = vmul.f32 %v2462, %v1085
        %v2477 = vmul.f32 %v2463, %v1086
        %v2478 = vmul.f32 %v2462, %v1091
        %v2479 = vmul.f32 %v2463, %v1092
        %v2480 = vmul.f32 %v2462, %v1097
        %v2481 = vmul.f32 %v2463, %v1098
        %v2482 = vmul.f32 %v2462, %v1103
        %v2483 = vmul.f32 %v2463, %v1104
        %v2484 = vmul.f32 %v2462, %v1109
        %v2485 = vmul.f32 %v2463, %v1110
        %2486 = vst.msk [vmem:[%s329] sm:$0xff] %vm368, %v2470
        %2487 = vst.msk [vmem:[%s329 + $0x8] sm:$0xff] %vm368, %v2471
        %2488 = vst.msk [vmem:[%s329 + $0x10] sm:$0xff] %vm368, %v2472
        %2489 = vst.msk [vmem:[%s329 + $0x18] sm:$0xff] %vm368, %v2473
        %2490 = vst.msk [vmem:[%s329 + $0x20] sm:$0xff] %vm368, %v2474
        %2491 = vst.msk [vmem:[%s329 + $0x28] sm:$0xff] %vm368, %v2475
        %2492 = vst.msk [vmem:[%s329 + $0x30] sm:$0xff] %vm368, %v2476
        %2493 = vst.msk [vmem:[%s329 + $0x38] sm:$0xff] %vm368, %v2477
        %2494 = vst.msk [vmem:[%s329 + $0x40] sm:$0xff] %vm368, %v2478
        %2495 = vst.msk [vmem:[%s329 + $0x48] sm:$0xff] %vm368, %v2479
        %2496 = vst.msk [vmem:[%s329 + $0x50] sm:$0xff] %vm368, %v2480
        %2497 = vst.msk [vmem:[%s329 + $0x58] sm:$0xff] %vm368, %v2481
        %2498 = vst.msk [vmem:[%s329 + $0x60] sm:$0xff] %vm368, %v2482
        %2499 = vst.msk [vmem:[%s329 + $0x68] sm:$0xff] %vm368, %v2483
        %2500 = vst.msk [vmem:[%s329 + $0x70] sm:$0xff] %vm368, %v2484
        %2501 = vst.msk [vmem:[%s329 + $0x78] sm:$0xff] %vm368, %v2485
        %s2502 = sand.u32 %s202, 1
        %s2503 = scalar_lea.sflag [#allocation10], %s2502
        %s2504 = sand.u32 %s202, 1
        %s2505 = smul.addr %s2504, 128
        %s2506 = scalar_lea.vmem [#allocation13], %s2505
        // Predicated region
        $region61: #{tpu_custom_call.1} parent=47 // pred_check
          %p2507 = pneg %p212
        $region62: #{tpu_custom_call.1} parent=47 // pred_check_branch
          %2509 = sbr.rel (%p2507) target = $region64
        $region63: #{tpu_custom_call.1} parent=47 // pred_region
          %s2511 = ssub.s32 2048, 2048
          %2512 = vsyncadd %s2503, %s2511
          %s2513 = smul.addr %s30, 16
          %s2514 = smul.addr %s31, 32
          %s2515 = sadd.s32 %s2513, %s2514
          %s2516 = smul.addr %s2515, 128
          %s2517 = scalar_lea.hbm %s7, %s2516
          %s2518 = sshll.u32 %s2506, 4
          %s2519 = int_to_ptr.vmem [resolvable:$true] %s2518
          %2524 = dma.vmem_to_hbm [thread:$0]  %s2519, 2048, %s2517, %s2503, 128, 128, 8
        $region64: #{tpu_custom_call.1} parent=47 // pred_fallthru
          _
      $region48: #{tpu_custom_call.1} parent=5 // pred_fallthru
        _
      %p2525 = scmp.le.s32.totalorder 2, %s21
      // Predicated region
      $region65: #{tpu_custom_call.1} parent=5 // pred_check
        %p2526 = pneg %p2525
      $region66: #{tpu_custom_call.1} parent=5 // pred_check_branch
        %2528 = sbr.rel (%p2526) target = $region68
      $region67: #{tpu_custom_call.1} parent=5 // pred_region
        %s2529 = ssub.s32 %s21, 2
        // Predicated region
        $region69: #{tpu_custom_call.1} parent=67 // pred_check
          %p2530 = pneg %p218
        $region70: #{tpu_custom_call.1} parent=67 // pred_check_branch
          %2532 = sbr.rel (%p2530) target = $region72
        $region71: #{tpu_custom_call.1} parent=67 // pred_region
          %s2533 = sand.u32 %s203, 1
          %s2534 = scalar_lea.sflag [#allocation10], %s2533
          %s2535 = sand.u32 %s203, 1
          %s2536 = smul.addr %s2535, 128
          %s2537 = scalar_lea.vmem [#allocation13], %s2536
          %2538 = dma.done %s2534, 2048
        $region72: #{tpu_custom_call.1} parent=67 // pred_fallthru
          _
      $region68: #{tpu_custom_call.1} parent=5 // pred_fallthru
        _
    $region6: #{tpu_custom_call.1} parent=1 // loop_footer
      %s25 = sadd.s32 1, %s21
    $region7: #{tpu_custom_call.1} parent=1 // loop_footer_branch
      %20 = sbr.rel target = $region3
    $region8: #{tpu_custom_call.1} parent=1 // loop_exit
      _
    %2539 = vsyncpa [#allocation9], 1
    %s2540 = scalar_lea.sflag [#allocation9], 1
    %2541 = vsyncpa %s2540, 1
    %2542 = vsyncpa [#allocation10], 1
    %s2543 = scalar_lea.sflag [#allocation10], 1
    %2544 = vsyncpa %s2543, 1
    %2545 = vsyncpa [#allocation11], 1
    %s2546 = scalar_lea.sflag [#allocation11], 1
    %2547 = vsyncpa %s2546, 1

</llo_original>
